<compile_context>
chip_gen: v7x
topology: tpu7x:2x2x1
jax: 0.10.0
libtpu: 0.0.40
codegen_flags: <defaults>
</compile_context>

<pallas_src>
import functools

import jax
import jax.numpy as jnp
import numpy as np
from jax import lax
from jax.experimental import pallas as pl
from jax.experimental.pallas import tpu as pltpu

LANE = 128


def _silu(x):
    return x * jax.nn.sigmoid(x)


def _round_up(v, m):
    return (v + m - 1) // m * m


def _choose_tile_h(H, W, Cp, x_itemsize):
    """Rows per grid step: VMEM-budgeted, targeting M = TH*W in ~[512, 2048]."""
    # Rough per-output-row footprint: double-buffered in/out row tiles plus
    # ~12 tile-sized in-kernel temporaries (f32/bf16 mix).
    bytes_per_row = W * Cp * (4 * x_itemsize + 48)
    th = max(1, (16 << 20) // max(bytes_per_row, 1))      # ~16 MiB tile budget
    th = min(th, max(1, 2048 // max(W, 1)))               # cap M = TH*W
    th = min(th, H)
    if th >= 8:
        th -= th % 8                                      # sublane-friendly
    return max(th, 1)


# ----------------------------------------------------------------------------
# Fused kernel.  One grid step (n, ht) produces TH output rows of image n.
#   x_ref  : (1, TH, W, C)  input rows of the tile (also the residual)
#   xt_ref : (1, 1,  W, C)  row just above the tile (clamped at the border)
#   xb_ref : (1, 1,  W, C)  row just below the tile (clamped at the border)
#   w1_ref : (C, C)         bf16 1x1 conv weights (Cin, Cout)
#   w2_ref : (3, 3*C, C)    bf16 3x3 conv weights; per-ky K axis = [kx0|kx1|kx2]
#   s*_ref / b*_ref : (1, C) folded BN scale / bias (f32)
#   o_ref  : (1, TH, W, C)
# ----------------------------------------------------------------------------
def fused_residual_kernel(x_ref, xt_ref, xb_ref, w1_ref, w2_ref,
                          s1_ref, b1_ref, s2_ref, b2_ref, o_ref,
                          *, TH, W, C, H):
    ht = pl.program_id(1)

    x_tile = x_ref[0]                                             # (TH, W, C)
    x_all = jnp.concatenate([xt_ref[0], x_tile, xb_ref[0]], axis=0)  # (TH+2,W,C)

    # --- conv1 (1x1) on the MXU in bf16, f32 accumulate, tile + halo rows.
    lhs1 = x_all.reshape((TH + 2) * W, C).astype(jnp.bfloat16)
    h1 = jnp.dot(lhs1, w1_ref[...], preferred_element_type=jnp.float32)
    h1 = _silu(h1 * s1_ref[...] + b1_ref[...])                    # f32
    h1 = h1.reshape(TH + 2, W, C)

    # --- zero every h1 row whose global image row is outside [0, H).
    # Reproduces conv2's zero padding at the top/bottom borders and also kills
    # the garbage rows of a partial last tile (grid uses cdiv(H, TH)).
    row = ht * TH - 1 + lax.broadcasted_iota(jnp.int32, (TH + 2, 1, C), 0)
    valid = jnp.logical_and(row >= 0, row < H)                    # (TH+2,1,C)
    h1 = jnp.where(valid, h1, 0.0)
    h1 = h1.astype(jnp.bfloat16)

    # --- kx-shifted copies of h1 (zero column at left/right image borders).
    # TODO(synk): replace with pltpu.roll(h1, ..., axis=1) + iota edge mask.
    zc = jnp.zeros((TH + 2, 1, C), jnp.bfloat16)
    h1_l = jnp.concatenate([zc, h1[:, :W - 1, :]], axis=1)        # col x -> x-1
    h1_r = jnp.concatenate([h1[:, 1:, :], zc], axis=1)            # col x -> x+1
    # Lane-aligned concat; K blocks ordered [kx=0 | kx=1 | kx=2].
    h1_cat = jnp.concatenate([h1_l, h1, h1_r], axis=-1)           # (TH+2,W,3C)

    # --- conv2 (3x3): 3 accumulating MXU matmuls, one per ky, K = 3*C.
    acc = jnp.zeros((TH * W, C), jnp.float32)
    for ky in range(3):                                           # unrolled
        a = h1_cat[ky:ky + TH].reshape(TH * W, 3 * C)             # leading-dim slice
        acc = acc + jnp.dot(a, w2_ref[ky], preferred_element_type=jnp.float32)
    y = _silu(acc * s2_ref[...] + b2_ref[...])                    # (TH*W, C) f32

    # --- residual add + lane-dense store.
    out = x_tile.astype(jnp.float32) + y.reshape(TH, W, C)
    o_ref[0] = out.astype(o_ref.dtype)


# ----------------------------------------------------------------------------
# NHWC wrapper (preferred entry point: no layout transposes).
# ----------------------------------------------------------------------------
def residual_block_forward_nhwc(x, params, *, tile_h=None):
    w1, s1, b1 = params["w1"], params["s1"], params["b1"]
    w2, s2, b2 = params["w2"], params["s2"], params["b2"]
    N, H, W, C = x.shape

    # Pad channels to a lane-dense multiple of 128 (zero padding is exact and
    # sliced back off at the end).  No-op when C is already a multiple of 128.
    # NOTE: for tiny C (e.g. 4) most of the lane is padding -- fine for a smoke
    # test; production backbones should have C >= 128 here.
    Cp = _round_up(C, LANE)
    pc = Cp - C
    if pc:
        x = jnp.pad(x, ((0, 0), (0, 0), (0, 0), (0, pc)))
        w1 = jnp.pad(w1, ((0, pc), (0, pc)))
        w2 = jnp.pad(w2, ((0, 0), (0, 0), (0, pc), (0, pc)))
        s1 = jnp.pad(s1, ((0, 0), (0, pc)))
        b1 = jnp.pad(b1, ((0, 0), (0, pc)))
        s2 = jnp.pad(s2, ((0, 0), (0, pc)))
        b2 = jnp.pad(b2, ((0, 0), (0, pc)))

    # bf16 weights for the MXU (accumulation is f32 in-kernel).
    # HWIO (3,3,Cp,Cp) -> (ky, 3*Cp, Cp): per-ky K axis is [kx=0|kx=1|kx=2]
    # blocks of ci, matching the in-kernel lane-concat order.
    w1b = w1.astype(jnp.bfloat16)
    w2b = w2.reshape(3, 3 * Cp, Cp).astype(jnp.bfloat16)

    # TODO(synk): add a W-tile grid axis (W padded to a multiple of 8) for very
    # large W*C so the row tile always fits the VMEM budget on v7x (64 MiB).
    TH = tile_h if tile_h is not None else _choose_tile_h(H, W, Cp,
                                                          x.dtype.itemsize)
    TH = max(1, min(TH, H))
    HT = pl.cdiv(H, TH)

    kernel = functools.partial(fused_residual_kernel, TH=TH, W=W, C=Cp, H=H)
    out = pl.pallas_call(
        kernel,
        out_shape=jax.ShapeDtypeStruct((N, H, W, Cp), x.dtype),
        grid=(N, HT),
        in_specs=[
            # current row tile (residual + conv1 interior); partial last block
            # is handled by the in-kernel row mask + masked output write.
            pl.BlockSpec((1, TH, W, Cp), lambda n, h: (n, h, 0, 0)),
            # halo row above / below the tile (H-block size 1, clamped).
            pl.BlockSpec((1, 1, W, Cp),
                         lambda n, h: (n, jnp.maximum(h * TH - 1, 0), 0, 0)),
            pl.BlockSpec((1, 1, W, Cp),
                         lambda n, h: (n, jnp.minimum(h * TH + TH, H - 1), 0, 0)),
            # weights / folded-BN params: resident (constant index maps), bf16.
            pl.BlockSpec((Cp, Cp), lambda n, h: (0, 0)),
            pl.BlockSpec((3, 3 * Cp, Cp), lambda n, h: (0, 0, 0)),
            pl.BlockSpec((1, Cp), lambda n, h: (0, 0)),
            pl.BlockSpec((1, Cp), lambda n, h: (0, 0)),
            pl.BlockSpec((1, Cp), lambda n, h: (0, 0)),
            pl.BlockSpec((1, Cp), lambda n, h: (0, 0)),
        ],
        out_specs=pl.BlockSpec((1, TH, W, Cp), lambda n, h: (n, h, 0, 0)),
        compiler_params=pltpu.CompilerParams(
            dimension_semantics=("parallel", "parallel"),
            vmem_limit_bytes=48 * 1024 * 1024),
    )(x, x, x, w1b, w2b, s1, b1, s2, b2)

    if pc:
        out = out[..., :C]
    return out


def residual_block_forward(x_nchw, params, *, tile_h=None):
    """NCHW in / NCHW out, matching the PyTorch module.  Prefer the NHWC entry
    point inside a real backbone to avoid the two layout transposes."""
    x = jnp.transpose(x_nchw, (0, 2, 3, 1))
    out = residual_block_forward_nhwc(x, params, tile_h=tile_h)
    return jnp.transpose(out, (0, 3, 1, 2))


# ----------------------------------------------------------------------------
# Pure-JAX reference (same bf16-weight / f32-accumulate quantization as the
# kernel so tolerances stay tight).
# ----------------------------------------------------------------------------
def ref_forward(x_nchw, params):
    w1, s1, b1 = params["w1"], params["s1"], params["b1"]
    w2, s2, b2 = params["w2"], params["s2"], params["b2"]
    x = jnp.transpose(x_nchw, (0, 2, 3, 1))
    h1 = jnp.einsum("nhwc,cd->nhwd",
                    x.astype(jnp.bfloat16), w1.astype(jnp.bfloat16),
                    preferred_element_type=jnp.float32)
    h1 = _silu(h1 * s1 + b1)
    h2 = lax.conv_general_dilated(
        h1.astype(jnp.bfloat16), w2.astype(jnp.bfloat16),
        window_strides=(1, 1), padding="SAME",
        dimension_numbers=("NHWC", "HWIO", "NHWC"),
        preferred_element_type=jnp.float32)
    h2 = _silu(h2 * s2 + b2)
    return jnp.transpose(x + h2, (0, 3, 1, 2))


def make_params(key, C):
    ks = jax.random.split(key, 10)
    eps = 1e-5

    w1 = jax.random.normal(ks[0], (C, C), jnp.float32) * 0.5        # (Cin, Cout)
    w2 = jax.random.normal(ks[1], (3, 3, C, C), jnp.float32) * 0.2  # HWIO

    def fold_bn(kg, kb, km, kv):
        gamma = 1.0 + 0.1 * jax.random.normal(kg, (C,), jnp.float32)
        beta = 0.1 * jax.random.normal(kb, (C,), jnp.float32)
        mean = 0.1 * jax.random.normal(km, (C,), jnp.float32)
        var = jax.random.uniform(kv, (C,), jnp.float32, 0.5, 1.5)
        scale = gamma / jnp.sqrt(var + eps)
        bias = beta - mean * scale
        return scale.reshape(1, C), bias.reshape(1, C)

    s1, b1 = fold_bn(ks[2], ks[3], ks[4], ks[5])
    s2, b2 = fold_bn(ks[6], ks[7], ks[8], ks[9])
    return {"w1": w1, "s1": s1, "b1": b1, "w2": w2, "s2": s2, "b2": b2}


if __name__ == "__main__":
    key = jax.random.PRNGKey(0)
    k_x, k_p, k_x2 = jax.random.split(key, 3)

    # Shape from the module spec: batch=2, channels=4, spatial=16.
    N, C, H, W = 2, 4, 16, 16
    x = jax.random.normal(k_x, (N, C, H, W), jnp.float32)
    params = make_params(k_p, C)

    out = jax.block_until_ready(residual_block_forward(x, params))
    ref = jax.block_until_ready(ref_forward(x, params))
    assert out.shape == (N, C, H, W)
    np.testing.assert_allclose(np.asarray(out), np.asarray(ref),
                               rtol=5e-3, atol=5e-3)

    # Second shape: H=20 with a forced tile_h=8 exercises interior halos
    # (real top AND bottom neighbours) plus the cdiv partial-tile / tail-row
    # masking path (last tile has only 4 valid rows).
    x2 = jax.random.normal(k_x2, (1, C, 20, 16), jnp.float32)
    out2 = jax.block_until_ready(residual_block_forward(x2, params, tile_h=8))
    ref2 = jax.block_until_ready(ref_forward(x2, params))
    np.testing.assert_allclose(np.asarray(out2), np.asarray(ref2),
                               rtol=5e-3, atol=5e-3)

    print("KERNEL_OK")
</pallas_src>

<mosaic_0001>
module attributes {stable_mosaic.version = 11 : i64} {
  func.func @fused_residual_kernel(%arg0: i32, %arg1: i32, %arg2: memref<1x16x16x128xf32, #tpu.memory_space<vmem>>, %arg3: memref<1x1x16x128xf32, #tpu.memory_space<vmem>>, %arg4: memref<1x1x16x128xf32, #tpu.memory_space<vmem>>, %arg5: memref<128x128xbf16, #tpu.memory_space<vmem>>, %arg6: memref<3x384x128xbf16, #tpu.memory_space<vmem>>, %arg7: memref<1x128xf32, #tpu.memory_space<vmem>>, %arg8: memref<1x128xf32, #tpu.memory_space<vmem>>, %arg9: memref<1x128xf32, #tpu.memory_space<vmem>>, %arg10: memref<1x128xf32, #tpu.memory_space<vmem>>, %arg11: memref<1x16x16x128xf32, #tpu.memory_space<vmem>>) attributes {dimension_semantics = [#tpu.dimension_semantics<parallel>, #tpu.dimension_semantics<parallel>], iteration_bounds = array<i64: 2, 1>, scalar_prefetch = 0 : i64, scratch_operands = 0 : i64, tpu.core_type = #tpu.core_type<tc>, window_params = [{transform_indices = @transform_0, window_bounds = array<i64: 1, 16, 16, 128>}, {transform_indices = @transform_1, window_bounds = array<i64: 1, 1, 16, 128>}, {transform_indices = @transform_2, window_bounds = array<i64: 1, 1, 16, 128>}, {pipeline_mode = #tpu.pipeline_mode<synchronous>, transform_indices = @transform_3, window_bounds = array<i64: 128, 128>}, {pipeline_mode = #tpu.pipeline_mode<synchronous>, transform_indices = @transform_4, window_bounds = array<i64: 3, 384, 128>}, {pipeline_mode = #tpu.pipeline_mode<synchronous>, transform_indices = @transform_5, window_bounds = array<i64: 1, 128>}, {pipeline_mode = #tpu.pipeline_mode<synchronous>, transform_indices = @transform_6, window_bounds = array<i64: 1, 128>}, {pipeline_mode = #tpu.pipeline_mode<synchronous>, transform_indices = @transform_7, window_bounds = array<i64: 1, 128>}, {pipeline_mode = #tpu.pipeline_mode<synchronous>, transform_indices = @transform_8, window_bounds = array<i64: 1, 128>}, {transform_indices = @transform_9, window_bounds = array<i64: 1, 16, 16, 128>}]} {
    %c0 = arith.constant 0 : index
    %c0_0 = arith.constant 0 : index
    %c0_1 = arith.constant 0 : index
    %c0_2 = arith.constant 0 : index
    %0 = vector.load %arg2[%c0, %c0_0, %c0_1, %c0_2] : memref<1x16x16x128xf32, #tpu.memory_space<vmem>>, vector<1x16x16x128xf32>
    %1 = vector.shape_cast %0 : vector<1x16x16x128xf32> to vector<16x16x128xf32>
    %c0_3 = arith.constant 0 : index
    %c0_4 = arith.constant 0 : index
    %c0_5 = arith.constant 0 : index
    %c0_6 = arith.constant 0 : index
    %2 = vector.load %arg3[%c0_3, %c0_4, %c0_5, %c0_6] : memref<1x1x16x128xf32, #tpu.memory_space<vmem>>, vector<1x1x16x128xf32>
    %3 = vector.shape_cast %2 : vector<1x1x16x128xf32> to vector<1x16x128xf32>
    %c0_7 = arith.constant 0 : index
    %c0_8 = arith.constant 0 : index
    %c0_9 = arith.constant 0 : index
    %c0_10 = arith.constant 0 : index
    %4 = vector.load %arg4[%c0_7, %c0_8, %c0_9, %c0_10] : memref<1x1x16x128xf32, #tpu.memory_space<vmem>>, vector<1x1x16x128xf32>
    %5 = vector.shape_cast %4 : vector<1x1x16x128xf32> to vector<1x16x128xf32>
    %6 = tpu.concatenate %3, %1, %5 in 0 : vector<1x16x128xf32>, vector<16x16x128xf32>, vector<1x16x128xf32> -> vector<18x16x128xf32>
    %7 = vector.shape_cast %6 : vector<18x16x128xf32> to vector<288x128xf32>
    %8 = arith.truncf %7 : vector<288x128xf32> to vector<288x128xbf16>
    %c0_11 = arith.constant 0 : index
    %c0_12 = arith.constant 0 : index
    %9 = vector.load %arg5[%c0_11, %c0_12] : memref<128x128xbf16, #tpu.memory_space<vmem>>, vector<128x128xbf16>
    %cst = arith.constant dense<0.000000e+00> : vector<288x128xf32>
    %10 = tpu.matmul %8, %9, %cst {dimension_numbers = #tpu.dot_dimension_numbers<[1], [0], [0], [1], [0, 0, 1, 1], [], []>} : vector<288x128xbf16>, vector<128x128xbf16>, vector<288x128xf32> -> vector<288x128xf32>
    %c0_13 = arith.constant 0 : index
    %c0_14 = arith.constant 0 : index
    %11 = vector.load %arg7[%c0_13, %c0_14] : memref<1x128xf32, #tpu.memory_space<vmem>>, vector<1x128xf32>
    %12 = vector.broadcast %11 : vector<1x128xf32> to vector<288x128xf32>
    %13 = arith.mulf %10, %12 : vector<288x128xf32>
    %c0_15 = arith.constant 0 : index
    %c0_16 = arith.constant 0 : index
    %14 = vector.load %arg8[%c0_15, %c0_16] : memref<1x128xf32, #tpu.memory_space<vmem>>, vector<1x128xf32>
    %15 = vector.broadcast %14 : vector<1x128xf32> to vector<288x128xf32>
    %16 = arith.addf %13, %15 : vector<288x128xf32>
    %17 = arith.negf %16 : vector<288x128xf32>
    %18 = math.exp %17 : vector<288x128xf32>
    %cst_17 = arith.constant 1.000000e+00 : f32
    %19 = vector.broadcast %cst_17 : f32 to vector<288x128xf32>
    %20 = arith.addf %19, %18 : vector<288x128xf32>
    %21 = arith.divf %19, %20 : vector<288x128xf32>
    %22 = arith.mulf %16, %21 : vector<288x128xf32>
    %23 = vector.shape_cast %22 : vector<288x128xf32> to vector<18x16x128xf32>
    %c16_i32 = arith.constant 16 : i32
    %24 = arith.muli %arg1, %c16_i32 : i32
    %c1_i32 = arith.constant 1 : i32
    %25 = arith.subi %24, %c1_i32 : i32
    %26 = tpu.iota {dimensions = array<i32: 0>} : vector<18x1x128xi32>
    %27 = vector.broadcast %25 : i32 to vector<18x1x128xi32>
    %28 = arith.addi %27, %26 : vector<18x1x128xi32>
    %c0_i32 = arith.constant 0 : i32
    %29 = vector.broadcast %c0_i32 : i32 to vector<18x1x128xi32>
    %30 = arith.cmpi sge, %28, %29 : vector<18x1x128xi32>
    %c16_i32_18 = arith.constant 16 : i32
    %31 = vector.broadcast %c16_i32_18 : i32 to vector<18x1x128xi32>
    %32 = arith.cmpi slt, %28, %31 : vector<18x1x128xi32>
    %33 = arith.andi %30, %32 : vector<18x1x128xi1>
    %cst_19 = arith.constant 0.000000e+00 : f32
    %34 = vector.shape_cast %33 : vector<18x1x128xi1> to vector<18x1x128xi1>
    %35 = vector.broadcast %34 : vector<18x1x128xi1> to vector<18x16x128xi1>
    %36 = vector.broadcast %cst_19 : f32 to vector<18x16x128xf32>
    %37 = arith.select %35, %23, %36 : vector<18x16x128xi1>, vector<18x16x128xf32>
    %38 = arith.truncf %37 : vector<18x16x128xf32> to vector<18x16x128xbf16>
    %cst_20 = arith.constant 0.000000e+00 : bf16
    %39 = vector.broadcast %cst_20 : bf16 to vector<18x1x128xbf16>
    %40 = vector.extract_strided_slice %38 {offsets = [0, 0, 0], sizes = [18, 15, 128], strides = [1, 1, 1]} : vector<18x16x128xbf16> to vector<18x15x128xbf16>
    %41 = tpu.concatenate %39, %40 in 1 : vector<18x1x128xbf16>, vector<18x15x128xbf16> -> vector<18x16x128xbf16>
    %42 = vector.extract_strided_slice %38 {offsets = [0, 1, 0], sizes = [18, 15, 128], strides = [1, 1, 1]} : vector<18x16x128xbf16> to vector<18x15x128xbf16>
    %43 = tpu.concatenate %42, %39 in 1 : vector<18x15x128xbf16>, vector<18x1x128xbf16> -> vector<18x16x128xbf16>
    %44 = tpu.concatenate %41, %38, %43 in 2 : vector<18x16x128xbf16>, vector<18x16x128xbf16>, vector<18x16x128xbf16> -> vector<18x16x384xbf16>
    %cst_21 = arith.constant 0.000000e+00 : f32
    %45 = vector.broadcast %cst_21 : f32 to vector<256x128xf32>
    %46 = vector.extract_strided_slice %44 {offsets = [0, 0, 0], sizes = [16, 16, 384], strides = [1, 1, 1]} : vector<18x16x384xbf16> to vector<16x16x384xbf16>
    %47 = vector.shape_cast %46 : vector<16x16x384xbf16> to vector<256x384xbf16>
    %c0_22 = arith.constant 0 : index
    %c0_23 = arith.constant 0 : index
    %c0_24 = arith.constant 0 : index
    %48 = vector.load %arg6[%c0_22, %c0_23, %c0_24] : memref<3x384x128xbf16, #tpu.memory_space<vmem>>, vector<1x384x128xbf16>
    %49 = vector.shape_cast %48 : vector<1x384x128xbf16> to vector<384x128xbf16>
    %cst_25 = arith.constant dense<0.000000e+00> : vector<256x128xf32>
    %50 = tpu.matmul %47, %49, %cst_25 {dimension_numbers = #tpu.dot_dimension_numbers<[1], [0], [0], [1], [0, 0, 1, 1], [], []>} : vector<256x384xbf16>, vector<384x128xbf16>, vector<256x128xf32> -> vector<256x128xf32>
    %51 = arith.addf %45, %50 : vector<256x128xf32>
    %52 = vector.extract_strided_slice %44 {offsets = [1, 0, 0], sizes = [16, 16, 384], strides = [1, 1, 1]} : vector<18x16x384xbf16> to vector<16x16x384xbf16>
    %53 = vector.shape_cast %52 : vector<16x16x384xbf16> to vector<256x384xbf16>
    %c1 = arith.constant 1 : index
    %c0_26 = arith.constant 0 : index
    %c0_27 = arith.constant 0 : index
    %54 = vector.load %arg6[%c1, %c0_26, %c0_27] : memref<3x384x128xbf16, #tpu.memory_space<vmem>>, vector<1x384x128xbf16>
    %55 = vector.shape_cast %54 : vector<1x384x128xbf16> to vector<384x128xbf16>
    %cst_28 = arith.constant dense<0.000000e+00> : vector<256x128xf32>
    %56 = tpu.matmul %53, %55, %cst_28 {dimension_numbers = #tpu.dot_dimension_numbers<[1], [0], [0], [1], [0, 0, 1, 1], [], []>} : vector<256x384xbf16>, vector<384x128xbf16>, vector<256x128xf32> -> vector<256x128xf32>
    %57 = arith.addf %51, %56 : vector<256x128xf32>
    %58 = vector.extract_strided_slice %44 {offsets = [2, 0, 0], sizes = [16, 16, 384], strides = [1, 1, 1]} : vector<18x16x384xbf16> to vector<16x16x384xbf16>
    %59 = vector.shape_cast %58 : vector<16x16x384xbf16> to vector<256x384xbf16>
    %c2 = arith.constant 2 : index
    %c0_29 = arith.constant 0 : index
    %c0_30 = arith.constant 0 : index
    %60 = vector.load %arg6[%c2, %c0_29, %c0_30] : memref<3x384x128xbf16, #tpu.memory_space<vmem>>, vector<1x384x128xbf16>
    %61 = vector.shape_cast %60 : vector<1x384x128xbf16> to vector<384x128xbf16>
    %cst_31 = arith.constant dense<0.000000e+00> : vector<256x128xf32>
    %62 = tpu.matmul %59, %61, %cst_31 {dimension_numbers = #tpu.dot_dimension_numbers<[1], [0], [0], [1], [0, 0, 1, 1], [], []>} : vector<256x384xbf16>, vector<384x128xbf16>, vector<256x128xf32> -> vector<256x128xf32>
    %63 = arith.addf %57, %62 : vector<256x128xf32>
    %c0_32 = arith.constant 0 : index
    %c0_33 = arith.constant 0 : index
    %64 = vector.load %arg9[%c0_32, %c0_33] : memref<1x128xf32, #tpu.memory_space<vmem>>, vector<1x128xf32>
    %65 = vector.broadcast %64 : vector<1x128xf32> to vector<256x128xf32>
    %66 = arith.mulf %63, %65 : vector<256x128xf32>
    %c0_34 = arith.constant 0 : index
    %c0_35 = arith.constant 0 : index
    %67 = vector.load %arg10[%c0_34, %c0_35] : memref<1x128xf32, #tpu.memory_space<vmem>>, vector<1x128xf32>
    %68 = vector.broadcast %67 : vector<1x128xf32> to vector<256x128xf32>
    %69 = arith.addf %66, %68 : vector<256x128xf32>
    %70 = arith.negf %69 : vector<256x128xf32>
    %71 = math.exp %70 : vector<256x128xf32>
    %cst_36 = arith.constant 1.000000e+00 : f32
    %72 = vector.broadcast %cst_36 : f32 to vector<256x128xf32>
    %73 = arith.addf %72, %71 : vector<256x128xf32>
    %74 = arith.divf %72, %73 : vector<256x128xf32>
    %75 = arith.mulf %69, %74 : vector<256x128xf32>
    %76 = vector.shape_cast %75 : vector<256x128xf32> to vector<16x16x128xf32>
    %77 = arith.addf %1, %76 : vector<16x16x128xf32>
    %c0_37 = arith.constant 0 : index
    %c0_38 = arith.constant 0 : index
    %c0_39 = arith.constant 0 : index
    %c0_40 = arith.constant 0 : index
    %78 = vector.load %arg11[%c0_37, %c0_38, %c0_39, %c0_40] : memref<1x16x16x128xf32, #tpu.memory_space<vmem>>, vector<1x16x16x128xf32>
    %79 = vector.shape_cast %78 : vector<1x16x16x128xf32> to vector<16x16x128xf32>
    %80 = vector.shape_cast %77 : vector<16x16x128xf32> to vector<1x16x16x128xf32>
    tpu.vector_store %arg11[%c0_37, %c0_38, %c0_39, %c0_40], %80 {strides = array<i32>} : memref<1x16x16x128xf32, #tpu.memory_space<vmem>>, vector<1x16x16x128xf32>,
    return
  }
  func.func @transform_0(%arg0: i32, %arg1: i32) -> (i32, i32, i32, i32) {
    %c0_i32 = arith.constant 0 : i32
    %c0_i32_0 = arith.constant 0 : i32
    %c0_i32_1 = arith.constant 0 : i32
    return %arg0, %arg1, %c0_i32, %c0_i32_0 : i32, i32, i32, i32
  }
  func.func @transform_1(%arg0: i32, %arg1: i32) -> (i32, i32, i32, i32) {
    %c16_i32 = arith.constant 16 : i32
    %0 = arith.muli %arg1, %c16_i32 : i32
    %c1_i32 = arith.constant 1 : i32
    %1 = arith.subi %0, %c1_i32 : i32
    %c0_i32 = arith.constant 0 : i32
    %2 = arith.maxsi %1, %c0_i32 : i32
    %c0_i32_0 = arith.constant 0 : i32
    %c0_i32_1 = arith.constant 0 : i32
    %c0_i32_2 = arith.constant 0 : i32
    return %arg0, %2, %c0_i32_0, %c0_i32_1 : i32, i32, i32, i32
  }
  func.func @transform_2(%arg0: i32, %arg1: i32) -> (i32, i32, i32, i32) {
    %c16_i32 = arith.constant 16 : i32
    %0 = arith.muli %arg1, %c16_i32 : i32
    %c16_i32_0 = arith.constant 16 : i32
    %1 = arith.addi %0, %c16_i32_0 : i32
    %c15_i32 = arith.constant 15 : i32
    %2 = arith.minsi %1, %c15_i32 : i32
    %c0_i32 = arith.constant 0 : i32
    %c0_i32_1 = arith.constant 0 : i32
    %c0_i32_2 = arith.constant 0 : i32
    return %arg0, %2, %c0_i32, %c0_i32_1 : i32, i32, i32, i32
  }
  func.func @transform_3(%arg0: i32, %arg1: i32) -> (i32, i32) {
    %c0_i32 = arith.constant 0 : i32
    %c0_i32_0 = arith.constant 0 : i32
    %c0_i32_1 = arith.constant 0 : i32
    return %c0_i32, %c0_i32_0 : i32, i32
  }
  func.func @transform_4(%arg0: i32, %arg1: i32) -> (i32, i32, i32) {
    %c0_i32 = arith.constant 0 : i32
    %c0_i32_0 = arith.constant 0 : i32
    %c0_i32_1 = arith.constant 0 : i32
    %c0_i32_2 = arith.constant 0 : i32
    return %c0_i32, %c0_i32_0, %c0_i32_1 : i32, i32, i32
  }
  func.func @transform_5(%arg0: i32, %arg1: i32) -> (i32, i32) {
    %c0_i32 = arith.constant 0 : i32
    %c0_i32_0 = arith.constant 0 : i32
    %c0_i32_1 = arith.constant 0 : i32
    return %c0_i32, %c0_i32_0 : i32, i32
  }
  func.func @transform_6(%arg0: i32, %arg1: i32) -> (i32, i32) {
    %c0_i32 = arith.constant 0 : i32
    %c0_i32_0 = arith.constant 0 : i32
    %c0_i32_1 = arith.constant 0 : i32
    return %c0_i32, %c0_i32_0 : i32, i32
  }
  func.func @transform_7(%arg0: i32, %arg1: i32) -> (i32, i32) {
    %c0_i32 = arith.constant 0 : i32
    %c0_i32_0 = arith.constant 0 : i32
    %c0_i32_1 = arith.constant 0 : i32
    return %c0_i32, %c0_i32_0 : i32, i32
  }
  func.func @transform_8(%arg0: i32, %arg1: i32) -> (i32, i32) {
    %c0_i32 = arith.constant 0 : i32
    %c0_i32_0 = arith.constant 0 : i32
    %c0_i32_1 = arith.constant 0 : i32
    return %c0_i32, %c0_i32_0 : i32, i32
  }
  func.func @transform_9(%arg0: i32, %arg1: i32) -> (i32, i32, i32, i32) {
    %c0_i32 = arith.constant 0 : i32
    %c0_i32_0 = arith.constant 0 : i32
    %c0_i32_1 = arith.constant 0 : i32
    return %arg0, %arg1, %c0_i32, %c0_i32_0 : i32, i32, i32, i32
  }
}

</mosaic_0001>

<llo_original>
// kernel: tpu_custom_call.1
$region0: #{tpu_custom_call.1}
  #allocation0 [shape = 'u32[]', space=smem, size = 0x4, offset = 0x4, fixed_abs, tag = 'smem constant byte address 0x4 - core index']
  #allocation1 [shape = 'u32[144,128]{1,0:T(1,128)}', space=vmem, size = 0x12000, scoped, tag = 'internal scratch']
  %s0 = inlined_call_operand.hbm [shape: f32[2,16,16,128], index: 0, kind: input, shape index: {}]
  %s1 = inlined_call_operand.hbm [shape: f32[2,16,16,128], index: 1, kind: input, shape index: {}]
  %s2 = inlined_call_operand.hbm [shape: f32[2,16,16,128], index: 2, kind: input, shape index: {}]
  %s3 = inlined_call_operand.hbm [shape: bf16[128,128], index: 3, kind: input, shape index: {}]
  %s4 = inlined_call_operand.hbm [shape: bf16[3,384,128], index: 4, kind: input, shape index: {}]
  %s5 = inlined_call_operand.vmem [shape: f32[1,128], index: 5, kind: input, shape index: {}]
  %s6 = inlined_call_operand.vmem [shape: f32[1,128], index: 6, kind: input, shape index: {}]
  %s7 = inlined_call_operand.vmem [shape: f32[1,128], index: 7, kind: input, shape index: {}]
  %s8 = inlined_call_operand.vmem [shape: f32[1,128], index: 8, kind: input, shape index: {}]
  %s9 = inlined_call_operand.hbm [shape: f32[2,16,16,128], index: 9, kind: output, shape index: {}]
  %s10 = sld [smem:[#allocation0]]
  $region89: #{tpu_custom_call.1} parent=0
    _
  %s12 = ssub.s32 1, %s10
  %s13 = scalar_select 0, %s12, %s10
  $region1: #{tpu_custom_call.1} parent=0
    #allocation2 [shape = 'u8[262144]{0}', space=vmem, size = 0x40000, scoped, tag = 'input window, operand 0']
    #allocation3 [shape = 's32[2]{0}', space=sflag, size = 0x8, scoped, tag = 'scoped memory for tpu_custom_call.1']
    #allocation4 [shape = 's32[2]{0}', space=sflag, size = 0x8, scoped, tag = 'scoped memory for tpu_custom_call.1']
    #allocation5 [shape = 'u8[16384]{0}', space=vmem, size = 0x4000, scoped, tag = 'input window, operand 1']
    #allocation6 [shape = 's32[2]{0}', space=sflag, size = 0x8, scoped, tag = 'scoped memory for tpu_custom_call.1']
    #allocation7 [shape = 'u8[16384]{0}', space=vmem, size = 0x4000, scoped, tag = 'input window, operand 2']
    #allocation8 [shape = 'u8[32768]{0}', space=vmem, size = 0x8000, scoped, tag = 'input window, operand 3, single buffered']
    #allocation9 [shape = 's32[1]{0}', space=sflag, size = 0x4, scoped, tag = 'scoped memory for tpu_custom_call.1']
    #allocation10 [shape = 'u8[294912]{0}', space=vmem, size = 0x48000, scoped, tag = 'input window, operand 4, single buffered']
    #allocation11 [shape = 'u8[262144]{0}', space=vmem, size = 0x40000, scoped, tag = 'output window, operand 0']
    %14 = vsyncpa [#allocation3], 0
    %s15 = scalar_lea.sflag [#allocation3], 1
    %16 = vsyncpa %s15, 0
    %17 = vsyncpa [#allocation6], 0
    %s18 = scalar_lea.sflag [#allocation6], 1
    %19 = vsyncpa %s18, 0
    %20 = vsyncpa [#allocation9], 0
    %21 = vsyncpa [#allocation4], 0
    %s22 = scalar_lea.sflag [#allocation4], 1
    %23 = vsyncpa %s22, 0
    loop: start=0, step=1, limit=4
    $region2: #{tpu_custom_call.1} parent=1 // loop_pre_header
      _
    $region3: #{tpu_custom_call.1} parent=1 // loop_header
      %s25 = sphi 0, %s29
      %p26 = scmp.ge.s32.totalorder %s25, 4
      %s32 = sphi 0, %s44
      %s33 = sphi 0, %s40
      %s34 = sphi 0, %s32
      %s35 = sphi 0, %s33
      %s36 = sphi 0, %s34
      %s37 = sphi 0, %s35
      %s49 = sphi 0, %s51
      %s52 = sphi 0, %s49
      %s53 = sphi 0, %s52
      %s69 = sphi 0, %s53
      %s85 = sphi 0, %s87
      %s88 = sphi 0, %s85
      %s89 = sphi 0, %s88
      %s105 = sphi 0, %s89
      %s121 = sphi 0, %s123
      %s124 = sphi 0, %s121
      %s125 = sphi 0, %s124
      %s141 = sphi 0, %s125
      %s145 = sphi 0, %s145
      %s147 = sphi 0, %s145
      %s148 = sphi 0, %s147
      %s162 = sphi 0, %s148
      %s166 = sphi 0, %s166
      %s168 = sphi 0, %s166
      %s169 = sphi 0, %s168
      %s183 = sphi 0, %s169
      %s187 = sphi 0, %s187
      %s189 = sphi 0, %s187
      %s190 = sphi 0, %s189
      %s204 = sphi 0, %s190
      %s208 = sphi 0, %s208
      %s210 = sphi 0, %s208
      %s211 = sphi 0, %s210
      %s225 = sphi 0, %s211
      %s229 = sphi 0, %s229
      %s231 = sphi 0, %s229
      %s232 = sphi 0, %s231
      %s246 = sphi 0, %s232
      %s250 = sphi 0, %s250
      %s252 = sphi 0, %s250
      %s253 = sphi 0, %s252
      %s267 = sphi 0, %s253
      %s275 = sphi 0, %s277
      %s278 = sphi 0, %s275
      %s279 = sphi 0, %s278
      %s295 = sphi 0, %s279
    $region4: #{tpu_custom_call.1} parent=1 // loop_header_branch
      %28 = sbr.rel (%p26) target = $region8
    $region5: #{tpu_custom_call.1} parent=1 // loop_body
      %s30 = ssub.s32 %s25, 1
      %s31 = ssub.s32 %s25, 2
      %s38 = sadd.s32 1, %s33
      %p39 = scmp.ge.s32.totalorder %s38, 1
      %s40 = scalar_select %p39, 0, %s38
      %s41 = sadd.s32 1, %s32
      %s42 = scalar_select %p39, %s41, %s32
      %p43 = scmp.ge.s32.totalorder %s42, 2
      %s44 = scalar_select %p43, 0, %s42
      %s45 = ssub.s32 %s32, %s44
      %s46 = ssub.s32 %s33, %s40
      %s47 = sor.u32 %s45, %s46
      %p48 = scmp.eq.s32.totalorder %s47, 0
      %s50 = sadd.s32 %s49, 1
      %s51 = scalar_select %p48, %s49, %s50
      %p54 = pneg %p48
      %p55 = scmp.eq.s32.totalorder %s25, 1
      %p56 = por %p54, %p55
      %p57 = scmp.ne.s32.totalorder %s49, %s52
      %p58 = scmp.eq.s32.totalorder %s25, 0
      %p59 = por %p57, %p58
      %p60 = scmp.ne.s32.totalorder %s49, %s52
      %p61 = scmp.eq.s32.totalorder %s30, 1
      %p62 = por %p60, %p61
      %p63 = scmp.ne.s32.totalorder %s52, %s53
      %p64 = scmp.eq.s32.totalorder %s30, 0
      %p65 = por %p63, %p64
      %p66 = scmp.ne.s32.totalorder %s52, %s53
      %p67 = scmp.eq.s32.totalorder %s31, 1
      %p68 = por %p66, %p67
      %p70 = scmp.ne.s32.totalorder %s53, %s69
      %p71 = scmp.eq.s32.totalorder %s31, 0
      %p72 = por %p70, %p71
      %s73 = smul.u32 %s33, 16
      %s74 = ssub.s32 %s73, 1
      %p75 = scmp.gt.s32.totalorder %s74, 0
      %s76 = scalar_select %p75, %s74, 0
      %s77 = smul.u32 %s40, 16
      %s78 = ssub.s32 %s77, 1
      %p79 = scmp.gt.s32.totalorder %s78, 0
      %s80 = scalar_select %p79, %s78, 0
      %s81 = ssub.s32 %s32, %s44
      %s82 = ssub.s32 %s76, %s80
      %s83 = sor.u32 %s81, %s82
      %p84 = scmp.eq.s32.totalorder %s83, 0
      %s86 = sadd.s32 %s85, 1
      %s87 = scalar_select %p84, %s85, %s86
      %p90 = pneg %p84
      %p91 = scmp.eq.s32.totalorder %s25, 1
      %p92 = por %p90, %p91
      %p93 = scmp.ne.s32.totalorder %s85, %s88
      %p94 = scmp.eq.s32.totalorder %s25, 0
      %p95 = por %p93, %p94
      %p96 = scmp.ne.s32.totalorder %s85, %s88
      %p97 = scmp.eq.s32.totalorder %s30, 1
      %p98 = por %p96, %p97
      %p99 = scmp.ne.s32.totalorder %s88, %s89
      %p100 = scmp.eq.s32.totalorder %s30, 0
      %p101 = por %p99, %p100
      %p102 = scmp.ne.s32.totalorder %s88, %s89
      %p103 = scmp.eq.s32.totalorder %s31, 1
      %p104 = por %p102, %p103
      %p106 = scmp.ne.s32.totalorder %s89, %s105
      %p107 = scmp.eq.s32.totalorder %s31, 0
      %p108 = por %p106, %p107
      %s109 = smul.u32 %s33, 16
      %s110 = sadd.s32 %s109, 16
      %p111 = scmp.lt.s32.totalorder %s110, 15
      %s112 = scalar_select %p111, %s110, 15
      %s113 = smul.u32 %s40, 16
      %s114 = sadd.s32 %s113, 16
      %p115 = scmp.lt.s32.totalorder %s114, 15
      %s116 = scalar_select %p115, %s114, 15
      %s117 = ssub.s32 %s32, %s44
      %s118 = ssub.s32 %s112, %s116
      %s119 = sor.u32 %s117, %s118
      %p120 = scmp.eq.s32.totalorder %s119, 0
      %s122 = sadd.s32 %s121, 1
      %s123 = scalar_select %p120, %s121, %s122
      %p126 = pneg %p120
      %p127 = scmp.eq.s32.totalorder %s25, 1
      %p128 = por %p126, %p127
      %p129 = scmp.ne.s32.totalorder %s121, %s124
      %p130 = scmp.eq.s32.totalorder %s25, 0
      %p131 = por %p129, %p130
      %p132 = scmp.ne.s32.totalorder %s121, %s124
      %p133 = scmp.eq.s32.totalorder %s30, 1
      %p134 = por %p132, %p133
      %p135 = scmp.ne.s32.totalorder %s124, %s125
      %p136 = scmp.eq.s32.totalorder %s30, 0
      %p137 = por %p135, %p136
      %p138 = scmp.ne.s32.totalorder %s124, %s125
      %p139 = scmp.eq.s32.totalorder %s31, 1
      %p140 = por %p138, %p139
      %p142 = scmp.ne.s32.totalorder %s125, %s141
      %p143 = scmp.eq.s32.totalorder %s31, 0
      %p144 = por %p142, %p143
      %s146 = sadd.s32 %s145, 1
      %p149 = scmp.eq.s32.totalorder %s25, 1
      %p150 = scmp.ne.s32.totalorder %s145, %s147
      %p151 = scmp.eq.s32.totalorder %s25, 0
      %p152 = por %p150, %p151
      %p153 = scmp.ne.s32.totalorder %s145, %s147
      %p154 = scmp.eq.s32.totalorder %s30, 1
      %p155 = por %p153, %p154
      %p156 = scmp.ne.s32.totalorder %s147, %s148
      %p157 = scmp.eq.s32.totalorder %s30, 0
      %p158 = por %p156, %p157
      %p159 = scmp.ne.s32.totalorder %s147, %s148
      %p160 = scmp.eq.s32.totalorder %s31, 1
      %p161 = por %p159, %p160
      %p163 = scmp.ne.s32.totalorder %s148, %s162
      %p164 = scmp.eq.s32.totalorder %s31, 0
      %p165 = por %p163, %p164
      %s167 = sadd.s32 %s166, 1
      %p170 = scmp.eq.s32.totalorder %s25, 1
      %p171 = scmp.ne.s32.totalorder %s166, %s168
      %p172 = scmp.eq.s32.totalorder %s25, 0
      %p173 = por %p171, %p172
      %p174 = scmp.ne.s32.totalorder %s166, %s168
      %p175 = scmp.eq.s32.totalorder %s30, 1
      %p176 = por %p174, %p175
      %p177 = scmp.ne.s32.totalorder %s168, %s169
      %p178 = scmp.eq.s32.totalorder %s30, 0
      %p179 = por %p177, %p178
      %p180 = scmp.ne.s32.totalorder %s168, %s169
      %p181 = scmp.eq.s32.totalorder %s31, 1
      %p182 = por %p180, %p181
      %p184 = scmp.ne.s32.totalorder %s169, %s183
      %p185 = scmp.eq.s32.totalorder %s31, 0
      %p186 = por %p184, %p185
      %s188 = sadd.s32 %s187, 1
      %p191 = scmp.eq.s32.totalorder %s25, 1
      %p192 = scmp.ne.s32.totalorder %s187, %s189
      %p193 = scmp.eq.s32.totalorder %s25, 0
      %p194 = por %p192, %p193
      %p195 = scmp.ne.s32.totalorder %s187, %s189
      %p196 = scmp.eq.s32.totalorder %s30, 1
      %p197 = por %p195, %p196
      %p198 = scmp.ne.s32.totalorder %s189, %s190
      %p199 = scmp.eq.s32.totalorder %s30, 0
      %p200 = por %p198, %p199
      %p201 = scmp.ne.s32.totalorder %s189, %s190
      %p202 = scmp.eq.s32.totalorder %s31, 1
      %p203 = por %p201, %p202
      %p205 = scmp.ne.s32.totalorder %s190, %s204
      %p206 = scmp.eq.s32.totalorder %s31, 0
      %p207 = por %p205, %p206
      %s209 = sadd.s32 %s208, 1
      %p212 = scmp.eq.s32.totalorder %s25, 1
      %p213 = scmp.ne.s32.totalorder %s208, %s210
      %p214 = scmp.eq.s32.totalorder %s25, 0
      %p215 = por %p213, %p214
      %p216 = scmp.ne.s32.totalorder %s208, %s210
      %p217 = scmp.eq.s32.totalorder %s30, 1
      %p218 = por %p216, %p217
      %p219 = scmp.ne.s32.totalorder %s210, %s211
      %p220 = scmp.eq.s32.totalorder %s30, 0
      %p221 = por %p219, %p220
      %p222 = scmp.ne.s32.totalorder %s210, %s211
      %p223 = scmp.eq.s32.totalorder %s31, 1
      %p224 = por %p222, %p223
      %p226 = scmp.ne.s32.totalorder %s211, %s225
      %p227 = scmp.eq.s32.totalorder %s31, 0
      %p228 = por %p226, %p227
      %s230 = sadd.s32 %s229, 1
      %p233 = scmp.eq.s32.totalorder %s25, 1
      %p234 = scmp.ne.s32.totalorder %s229, %s231
      %p235 = scmp.eq.s32.totalorder %s25, 0
      %p236 = por %p234, %p235
      %p237 = scmp.ne.s32.totalorder %s229, %s231
      %p238 = scmp.eq.s32.totalorder %s30, 1
      %p239 = por %p237, %p238
      %p240 = scmp.ne.s32.totalorder %s231, %s232
      %p241 = scmp.eq.s32.totalorder %s30, 0
      %p242 = por %p240, %p241
      %p243 = scmp.ne.s32.totalorder %s231, %s232
      %p244 = scmp.eq.s32.totalorder %s31, 1
      %p245 = por %p243, %p244
      %p247 = scmp.ne.s32.totalorder %s232, %s246
      %p248 = scmp.eq.s32.totalorder %s31, 0
      %p249 = por %p247, %p248
      %s251 = sadd.s32 %s250, 1
      %p254 = scmp.eq.s32.totalorder %s25, 1
      %p255 = scmp.ne.s32.totalorder %s250, %s252
      %p256 = scmp.eq.s32.totalorder %s25, 0
      %p257 = por %p255, %p256
      %p258 = scmp.ne.s32.totalorder %s250, %s252
      %p259 = scmp.eq.s32.totalorder %s30, 1
      %p260 = por %p258, %p259
      %p261 = scmp.ne.s32.totalorder %s252, %s253
      %p262 = scmp.eq.s32.totalorder %s30, 0
      %p263 = por %p261, %p262
      %p264 = scmp.ne.s32.totalorder %s252, %s253
      %p265 = scmp.eq.s32.totalorder %s31, 1
      %p266 = por %p264, %p265
      %p268 = scmp.ne.s32.totalorder %s253, %s267
      %p269 = scmp.eq.s32.totalorder %s31, 0
      %p270 = por %p268, %p269
      %s271 = ssub.s32 %s32, %s44
      %s272 = ssub.s32 %s33, %s40
      %s273 = sor.u32 %s271, %s272
      %p274 = scmp.eq.s32.totalorder %s273, 0
      %s276 = sadd.s32 %s275, 1
      %s277 = scalar_select %p274, %s275, %s276
      %p280 = pneg %p274
      %p281 = scmp.eq.s32.totalorder %s25, 1
      %p282 = por %p280, %p281
      %p283 = scmp.ne.s32.totalorder %s275, %s278
      %p284 = scmp.eq.s32.totalorder %s25, 0
      %p285 = por %p283, %p284
      %p286 = scmp.ne.s32.totalorder %s275, %s278
      %p287 = scmp.eq.s32.totalorder %s30, 1
      %p288 = por %p286, %p287
      %p289 = scmp.ne.s32.totalorder %s278, %s279
      %p290 = scmp.eq.s32.totalorder %s30, 0
      %p291 = por %p289, %p290
      %p292 = scmp.ne.s32.totalorder %s278, %s279
      %p293 = scmp.eq.s32.totalorder %s31, 1
      %p294 = por %p292, %p293
      %p296 = scmp.ne.s32.totalorder %s279, %s295
      %p297 = scmp.eq.s32.totalorder %s31, 0
      %p298 = por %p296, %p297
      %p299 = scmp.le.s32.totalorder 1, %s25
      %p300 = scmp.lt.s32.totalorder %s25, 3
      %p301 = pnand %p299, %p300
      %p302 = pneg %p301
      // Predicated region
      $region9: #{tpu_custom_call.1} parent=5 // pred_check
        _
      $region10: #{tpu_custom_call.1} parent=5 // pred_check_branch
        %304 = sbr.rel (%p301) target = $region12
      $region11: #{tpu_custom_call.1} parent=5 // pred_region
        %s305 = ssub.s32 %s25, 1
        // Predicated region
        $region13: #{tpu_custom_call.1} parent=11 // pred_check
          %p306 = pneg %p158
        $region14: #{tpu_custom_call.1} parent=11 // pred_check_branch
          %308 = sbr.rel (%p306) target = $region16
        $region15: #{tpu_custom_call.1} parent=11 // pred_region
          %s310 = ssub.s32 1024, 1024
          %311 = vsyncadd [#allocation9], %s310
          %s312 = sshll.u32 [#allocation8], 4
          %s313 = int_to_ptr.vmem [resolvable:$true] %s312
          %318 = dma.hbm_to_vmem [thread:$0]  %s3, 1024, %s313, [#allocation9], 64, 64, 4
        $region16: #{tpu_custom_call.1} parent=11 // pred_fallthru
          _
        // Predicated region
        $region17: #{tpu_custom_call.1} parent=11 // pred_check
          %p319 = pneg %p179
        $region18: #{tpu_custom_call.1} parent=11 // pred_check_branch
          %321 = sbr.rel (%p319) target = $region20
        $region19: #{tpu_custom_call.1} parent=11 // pred_region
          %s323 = ssub.s32 9216, 9216
          %324 = vsyncadd [#allocation9], %s323
          %s325 = sshll.u32 [#allocation10], 4
          %s326 = int_to_ptr.vmem [resolvable:$true] %s325
          %331 = dma.hbm_to_vmem [thread:$0]  %s4, 9216, %s326, [#allocation9], 64, 64, 4
        $region20: #{tpu_custom_call.1} parent=11 // pred_fallthru
          _
        // Predicated region
        $region21: #{tpu_custom_call.1} parent=11 // pred_check
          %p332 = pneg %p200
        $region22: #{tpu_custom_call.1} parent=11 // pred_check_branch
          %334 = sbr.rel (%p332) target = $region24
        $region23: #{tpu_custom_call.1} parent=11 // pred_region
          _
        $region24: #{tpu_custom_call.1} parent=11 // pred_fallthru
          _
        // Predicated region
        $region25: #{tpu_custom_call.1} parent=11 // pred_check
          %p335 = pneg %p221
        $region26: #{tpu_custom_call.1} parent=11 // pred_check_branch
          %337 = sbr.rel (%p335) target = $region28
        $region27: #{tpu_custom_call.1} parent=11 // pred_region
          _
        $region28: #{tpu_custom_call.1} parent=11 // pred_fallthru
          _
        // Predicated region
        $region29: #{tpu_custom_call.1} parent=11 // pred_check
          %p338 = pneg %p242
        $region30: #{tpu_custom_call.1} parent=11 // pred_check_branch
          %340 = sbr.rel (%p338) target = $region32
        $region31: #{tpu_custom_call.1} parent=11 // pred_region
          _
        $region32: #{tpu_custom_call.1} parent=11 // pred_fallthru
          _
        // Predicated region
        $region33: #{tpu_custom_call.1} parent=11 // pred_check
          %p341 = pneg %p263
        $region34: #{tpu_custom_call.1} parent=11 // pred_check_branch
          %343 = sbr.rel (%p341) target = $region36
        $region35: #{tpu_custom_call.1} parent=11 // pred_region
          _
        $region36: #{tpu_custom_call.1} parent=11 // pred_fallthru
          _
      $region12: #{tpu_custom_call.1} parent=5 // pred_fallthru
        _
      %p344 = scmp.lt.s32.totalorder %s25, 2
      // Predicated region
      $region37: #{tpu_custom_call.1} parent=5 // pred_check
        %p345 = pneg %p344
      $region38: #{tpu_custom_call.1} parent=5 // pred_check_branch
        %347 = sbr.rel (%p345) target = $region40
      $region39: #{tpu_custom_call.1} parent=5 // pred_region
        // Predicated region
        $region41: #{tpu_custom_call.1} parent=39 // pred_check
          %p348 = pneg %p59
        $region42: #{tpu_custom_call.1} parent=39 // pred_check_branch
          %350 = sbr.rel (%p348) target = $region44
        $region43: #{tpu_custom_call.1} parent=39 // pred_region
          %s351 = sand.u32 %s49, 1
          %s352 = scalar_lea.sflag [#allocation3], %s351
          %s353 = sand.u32 %s49, 1
          %s354 = smul.addr %s353, 256
          %s355 = scalar_lea.vmem [#allocation2], %s354
          %s356 = smul.u32 16, %s33
          %s358 = ssub.s32 4096, 4096
          %359 = vsyncadd %s352, %s358
          %s360 = smul.addr %s356, 2
          %s361 = smul.addr %s32, 32
          %s362 = sadd.s32 %s360, %s361
          %s363 = smul.addr %s362, 128
          %s364 = scalar_lea.hbm %s0, %s363
          %s365 = sshll.u32 %s355, 4
          %s366 = int_to_ptr.vmem [resolvable:$true] %s365
          %371 = dma.hbm_to_vmem [thread:$0]  %s364, 4096, %s366, %s352, 128, 128, 8
        $region44: #{tpu_custom_call.1} parent=39 // pred_fallthru
          _
        // Predicated region
        $region45: #{tpu_custom_call.1} parent=39 // pred_check
          %p372 = pneg %p95
        $region46: #{tpu_custom_call.1} parent=39 // pred_check_branch
          %374 = sbr.rel (%p372) target = $region48
        $region47: #{tpu_custom_call.1} parent=39 // pred_region
          %s375 = sand.u32 %s25, 1
          %s376 = scalar_lea.sflag [#allocation6], %s375
          %s377 = sand.u32 %s85, 1
          %s378 = smul.addr %s377, 16
          %s379 = scalar_lea.vmem [#allocation5], %s378
          %s380 = smul.u32 %s33, 16
          %s381 = ssub.s32 %s380, 1
          %p382 = scmp.gt.s32.totalorder %s381, 0
          %s383 = scalar_select %p382, %s381, 0
          %s385 = ssub.s32 256, 256
          %386 = vsyncadd %s376, %s385
          %s387 = smul.addr %s383, 2
          %s388 = smul.addr %s32, 32
          %s389 = sadd.s32 %s387, %s388
          %s390 = smul.addr %s389, 128
          %s391 = scalar_lea.hbm %s1, %s390
          %s392 = sshll.u32 %s379, 4
          %s393 = int_to_ptr.vmem [resolvable:$true] %s392
          %398 = dma.hbm_to_vmem [thread:$0]  %s391, 256, %s393, %s376, 128, 128, 8
        $region48: #{tpu_custom_call.1} parent=39 // pred_fallthru
          _
        // Predicated region
        $region49: #{tpu_custom_call.1} parent=39 // pred_check
          %p399 = pneg %p131
        $region50: #{tpu_custom_call.1} parent=39 // pred_check_branch
          %401 = sbr.rel (%p399) target = $region52
        $region51: #{tpu_custom_call.1} parent=39 // pred_region
          %s402 = sand.u32 %s25, 1
          %s403 = scalar_lea.sflag [#allocation6], %s402
          %s404 = sand.u32 %s121, 1
          %s405 = smul.addr %s404, 16
          %s406 = scalar_lea.vmem [#allocation7], %s405
          %s407 = smul.u32 %s33, 16
          %s408 = sadd.s32 %s407, 16
          %p409 = scmp.lt.s32.totalorder %s408, 15
          %s410 = scalar_select %p409, %s408, 15
          %s412 = ssub.s32 256, 256
          %413 = vsyncadd %s403, %s412
          %s414 = smul.addr %s410, 2
          %s415 = smul.addr %s32, 32
          %s416 = sadd.s32 %s414, %s415
          %s417 = smul.addr %s416, 128
          %s418 = scalar_lea.hbm %s2, %s417
          %s419 = sshll.u32 %s406, 4
          %s420 = int_to_ptr.vmem [resolvable:$true] %s419
          %425 = dma.hbm_to_vmem [thread:$0]  %s418, 256, %s420, %s403, 128, 128, 8
        $region52: #{tpu_custom_call.1} parent=39 // pred_fallthru
          _
      $region40: #{tpu_custom_call.1} parent=5 // pred_fallthru
        _
      %p426 = scmp.le.s32.totalorder 1, %s25
      %p427 = scmp.lt.s32.totalorder %s25, 3
      %p428 = pnand %p426, %p427
      %p429 = pneg %p428
      // Predicated region
      $region53: #{tpu_custom_call.1} parent=5 // pred_check
        _
      $region54: #{tpu_custom_call.1} parent=5 // pred_check_branch
        %431 = sbr.rel (%p428) target = $region56
      $region55: #{tpu_custom_call.1} parent=5 // pred_region
        %s432 = ssub.s32 %s25, 1
        %s433 = sand.u32 %s52, 1
        %s434 = scalar_lea.sflag [#allocation3], %s433
        %s435 = sand.u32 %s52, 1
        %s436 = smul.addr %s435, 256
        %s437 = scalar_lea.vmem [#allocation2], %s436
        // Predicated region
        $region57: #{tpu_custom_call.1} parent=55 // pred_check
          %p438 = pneg %p65
        $region58: #{tpu_custom_call.1} parent=55 // pred_check_branch
          %440 = sbr.rel (%p438) target = $region60
        $region59: #{tpu_custom_call.1} parent=55 // pred_region
          %441 = dma.done %s434, 4096
        $region60: #{tpu_custom_call.1} parent=55 // pred_fallthru
          _
        %s442 = sand.u32 %s30, 1
        %s443 = scalar_lea.sflag [#allocation6], %s442
        %s444 = sand.u32 %s88, 1
        %s445 = smul.addr %s444, 16
        %s446 = scalar_lea.vmem [#allocation5], %s445
        // Predicated region
        $region61: #{tpu_custom_call.1} parent=55 // pred_check
          %p447 = pneg %p101
        $region62: #{tpu_custom_call.1} parent=55 // pred_check_branch
          %449 = sbr.rel (%p447) target = $region64
        $region63: #{tpu_custom_call.1} parent=55 // pred_region
          %450 = dma.done %s443, 256
        $region64: #{tpu_custom_call.1} parent=55 // pred_fallthru
          _
        %s451 = sand.u32 %s30, 1
        %s452 = scalar_lea.sflag [#allocation6], %s451
        %s453 = sand.u32 %s124, 1
        %s454 = smul.addr %s453, 16
        %s455 = scalar_lea.vmem [#allocation7], %s454
        // Predicated region
        $region65: #{tpu_custom_call.1} parent=55 // pred_check
          %p456 = pneg %p137
        $region66: #{tpu_custom_call.1} parent=55 // pred_check_branch
          %458 = sbr.rel (%p456) target = $region68
        $region67: #{tpu_custom_call.1} parent=55 // pred_region
          %459 = dma.done %s452, 256
        $region68: #{tpu_custom_call.1} parent=55 // pred_fallthru
          _
        // Predicated region
        $region69: #{tpu_custom_call.1} parent=55 // pred_check
          %p460 = pneg %p158
        $region70: #{tpu_custom_call.1} parent=55 // pred_check_branch
          %462 = sbr.rel (%p460) target = $region72
        $region71: #{tpu_custom_call.1} parent=55 // pred_region
          %463 = dma.done [#allocation9], 1024
        $region72: #{tpu_custom_call.1} parent=55 // pred_fallthru
          _
        // Predicated region
        $region73: #{tpu_custom_call.1} parent=55 // pred_check
          %p464 = pneg %p179
        $region74: #{tpu_custom_call.1} parent=55 // pred_check_branch
          %466 = sbr.rel (%p464) target = $region76
        $region75: #{tpu_custom_call.1} parent=55 // pred_region
          %467 = dma.done [#allocation9], 9216
        $region76: #{tpu_custom_call.1} parent=55 // pred_fallthru
          _
        %s468 = sand.u32 %s52, 1
        %s469 = scalar_lea.sflag [#allocation3], %s468
        %s470 = sand.u32 %s52, 1
        %s471 = smul.addr %s470, 256
        %s472 = scalar_lea.vmem [#allocation2], %s471
        %p473 = pneg %p65
        %p474 = pneg %p62
        %s475 = sand.u32 %s30, 1
        %s476 = scalar_lea.sflag [#allocation6], %s475
        %s477 = sand.u32 %s88, 1
        %s478 = smul.addr %s477, 16
        %s479 = scalar_lea.vmem [#allocation5], %s478
        %p480 = pneg %p101
        %p481 = pneg %p98
        %s482 = sand.u32 %s30, 1
        %s483 = scalar_lea.sflag [#allocation6], %s482
        %s484 = sand.u32 %s124, 1
        %s485 = smul.addr %s484, 16
        %s486 = scalar_lea.vmem [#allocation7], %s485
        %p487 = pneg %p137
        %p488 = pneg %p134
        %p489 = pneg %p158
        %p490 = pneg %p155
        %p491 = pneg %p179
        %p492 = pneg %p176
        %p493 = pneg %p200
        %p494 = pneg %p197
        %p495 = pneg %p221
        %p496 = pneg %p218
        %p497 = pneg %p242
        %p498 = pneg %p239
        %p499 = pneg %p263
        %p500 = pneg %p260
        %p501 = pneg %p291
        %p502 = pneg %p288
        %s503 = sand.u32 %s278, 1
        %s504 = scalar_lea.sflag [#allocation4], %s503
        %s505 = sand.u32 %s278, 1
        %s506 = smul.addr %s505, 256
        %s507 = scalar_lea.vmem [#allocation11], %s506
        %s508 = smul.u32 16, %s35
        %s509 = smul.u32 %s35, 16
        %s510 = ssub.s32 %s509, 1
        %p511 = scmp.gt.s32.totalorder %s510, 0
        %s512 = scalar_select %p511, %s510, 0
        %s513 = smul.u32 %s35, 16
        %s514 = sadd.s32 %s513, 16
        %p515 = scmp.lt.s32.totalorder %s514, 15
        %s516 = scalar_select %p515, %s514, 15
        %s517 = smul.u32 16, %s35
        %v519 = vld [vmem:[%s437] sm:$0xff]
        %v520 = vld [vmem:[%s437 + $0x8] sm:$0xff]
        %v521 = vld [vmem:[%s437 + $0x10] sm:$0xff]
        %v522 = vld [vmem:[%s437 + $0x18] sm:$0xff]
        %v523 = vld [vmem:[%s437 + $0x20] sm:$0xff]
        %v524 = vld [vmem:[%s437 + $0x28] sm:$0xff]
        %v525 = vld [vmem:[%s437 + $0x30] sm:$0xff]
        %v526 = vld [vmem:[%s437 + $0x38] sm:$0xff]
        %v527 = vld [vmem:[%s437 + $0x40] sm:$0xff]
        %v528 = vld [vmem:[%s437 + $0x48] sm:$0xff]
        %v529 = vld [vmem:[%s437 + $0x50] sm:$0xff]
        %v530 = vld [vmem:[%s437 + $0x58] sm:$0xff]
        %v531 = vld [vmem:[%s437 + $0x60] sm:$0xff]
        %v532 = vld [vmem:[%s437 + $0x68] sm:$0xff]
        %v533 = vld [vmem:[%s437 + $0x70] sm:$0xff]
        %v534 = vld [vmem:[%s437 + $0x78] sm:$0xff]
        %v535 = vld [vmem:[%s437 + $0x80] sm:$0xff]
        %v536 = vld [vmem:[%s437 + $0x88] sm:$0xff]
        %v537 = vld [vmem:[%s437 + $0x90] sm:$0xff]
        %v538 = vld [vmem:[%s437 + $0x98] sm:$0xff]
        %v539 = vld [vmem:[%s437 + $0xa0] sm:$0xff]
        %v540 = vld [vmem:[%s437 + $0xa8] sm:$0xff]
        %v541 = vld [vmem:[%s437 + $0xb0] sm:$0xff]
        %v542 = vld [vmem:[%s437 + $0xb8] sm:$0xff]
        %v543 = vld [vmem:[%s437 + $0xc0] sm:$0xff]
        %v544 = vld [vmem:[%s437 + $0xc8] sm:$0xff]
        %v545 = vld [vmem:[%s437 + $0xd0] sm:$0xff]
        %v546 = vld [vmem:[%s437 + $0xd8] sm:$0xff]
        %v547 = vld [vmem:[%s437 + $0xe0] sm:$0xff]
        %v548 = vld [vmem:[%s437 + $0xe8] sm:$0xff]
        %v549 = vld [vmem:[%s437 + $0xf0] sm:$0xff]
        %v550 = vld [vmem:[%s437 + $0xf8] sm:$0xff]
        %v551 = vld [vmem:[%s446] sm:$0xff]
        %v552 = vld [vmem:[%s446 + $0x8] sm:$0xff]
        %v553 = vld [vmem:[%s455] sm:$0xff]
        %v554 = vld [vmem:[%s455 + $0x8] sm:$0xff]
        %v555 = vpack.c.bf16 %v552, %v551
        %v556 = vpack.c.bf16 %v520, %v519
        %v557 = vpack.c.bf16 %v522, %v521
        %v558 = vpack.c.bf16 %v524, %v523
        %v559 = vpack.c.bf16 %v526, %v525
        %v560 = vpack.c.bf16 %v528, %v527
        %v561 = vpack.c.bf16 %v530, %v529
        %v562 = vpack.c.bf16 %v532, %v531
        %v563 = vpack.c.bf16 %v534, %v533
        %v564 = vpack.c.bf16 %v536, %v535
        %v565 = vpack.c.bf16 %v538, %v537
        %v566 = vpack.c.bf16 %v540, %v539
        %v567 = vpack.c.bf16 %v542, %v541
        %v568 = vpack.c.bf16 %v544, %v543
        %v569 = vpack.c.bf16 %v546, %v545
        %v570 = vpack.c.bf16 %v548, %v547
        %v571 = vpack.c.bf16 %v550, %v549
        %v572 = vpack.c.bf16 %v554, %v553
        %v573 = vld [vmem:[#allocation8] sm:$0xf]
        %v574 = vld [vmem:[#allocation8 + $0x4] sm:$0xf]
        %v575 = vld [vmem:[#allocation8 + $0x8] sm:$0xf]
        %v576 = vld [vmem:[#allocation8 + $0xc] sm:$0xf]
        %v577 = vld [vmem:[#allocation8 + $0x10] sm:$0xf]
        %v578 = vld [vmem:[#allocation8 + $0x14] sm:$0xf]
        %v579 = vld [vmem:[#allocation8 + $0x18] sm:$0xf]
        %v580 = vld [vmem:[#allocation8 + $0x1c] sm:$0xf]
        %v581 = vld [vmem:[#allocation8 + $0x20] sm:$0xf]
        %v582 = vld [vmem:[#allocation8 + $0x24] sm:$0xf]
        %v583 = vld [vmem:[#allocation8 + $0x28] sm:$0xf]
        %v584 = vld [vmem:[#allocation8 + $0x2c] sm:$0xf]
        %v585 = vld [vmem:[#allocation8 + $0x30] sm:$0xf]
        %v586 = vld [vmem:[#allocation8 + $0x34] sm:$0xf]
        %v587 = vld [vmem:[#allocation8 + $0x38] sm:$0xf]
        %v588 = vld [vmem:[#allocation8 + $0x3c] sm:$0xf]
        %v605 = vunpack.c.l.b16 %v573
        %v606 = vunpack.c.l.b16 %v574
        %v607 = vunpack.c.l.b16 %v575
        %v608 = vunpack.c.l.b16 %v576
        %v609 = vunpack.c.l.b16 %v577
        %v610 = vunpack.c.l.b16 %v578
        %v611 = vunpack.c.l.b16 %v579
        %v612 = vunpack.c.l.b16 %v580
        %v613 = vunpack.c.l.b16 %v581
        %v614 = vunpack.c.l.b16 %v582
        %v615 = vunpack.c.l.b16 %v583
        %v616 = vunpack.c.l.b16 %v584
        %v617 = vunpack.c.l.b16 %v585
        %v618 = vunpack.c.l.b16 %v586
        %v619 = vunpack.c.l.b16 %v587
        %v620 = vunpack.c.l.b16 %v588
        %v621 = vpack.c.b16 %v606, %v605
        %v622 = vpack.c.b16 %v608, %v607
        %v623 = vpack.c.b16 %v610, %v609
        %v624 = vpack.c.b16 %v612, %v611
        %v625 = vpack.c.b16 %v614, %v613
        %v626 = vpack.c.b16 %v616, %v615
        %v627 = vpack.c.b16 %v618, %v617
        %v628 = vpack.c.b16 %v620, %v619
        %637 = vmatprep.subr.bf16.mxu0 0
        %638 = vmatpush1.bf16.msra.mxu0 %v621
        %639 = vmatprep.subr.bf16.mxu0 0
        %640 = vmatpush1.bf16.msra.mxu0 %v622
        %641 = vmatprep.subr.bf16.mxu0 0
        %642 = vmatpush1.bf16.msra.mxu0 %v623
        %643 = vmatprep.subr.bf16.mxu0 0
        %644 = vmatpush1.bf16.msra.mxu0 %v624
        %645 = vmatprep.subr.bf16.mxu0 0
        %646 = vmatpush1.bf16.msra.mxu0 %v625
        %647 = vmatprep.subr.bf16.mxu0 0
        %648 = vmatpush1.bf16.msra.mxu0 %v626
        %649 = vmatprep.subr.bf16.mxu0 0
        %650 = vmatpush1.bf16.msra.mxu0 %v627
        %651 = vmatprep.subr.bf16.mxu0 0
        %652 = vmatpush1.bf16.msra.mxu0 %v628
        %653 = vmatprep.subr.bf16.mxu0 0
        %654 = vmatpush1.bf16.msra.mxu0 0
        %655 = vmatprep.subr.bf16.mxu0 0
        %656 = vmatpush1.bf16.msra.mxu0 0
        %657 = vmatprep.subr.bf16.mxu0 0
        %658 = vmatpush1.bf16.msra.mxu0 0
        %659 = vmatprep.subr.bf16.mxu0 0
        %660 = vmatpush1.bf16.msra.mxu0 0
        %661 = vmatprep.subr.bf16.mxu0 0
        %662 = vmatpush1.bf16.msra.mxu0 0
        %663 = vmatprep.subr.bf16.mxu0 0
        %664 = vmatpush1.bf16.msra.mxu0 0
        %665 = vmatprep.subr.bf16.mxu0 0
        %666 = vmatpush1.bf16.msra.mxu0 0
        %667 = vmatprep.subr.bf16.mxu0 0
        %668 = vmatpush1.bf16.msra.mxu0 0
        %669 = vmatprep.mubr.bf16.mxu0 0
        %670 = vmatmul.mubr.bf16.gmra.mrb[0].mxu0 %v555
        %v671 = vpop.f32.mrb[0].mxu0
        %v672 = vadd.f32 0.0, %v671
        %v673 = vpop.f32.mrb[0].mxu0
        %v674 = vpop.f32.mrb[0].mxu0
        %v675 = vadd.f32 0.0, %v674
        %v676 = vpop.f32.mrb[0].mxu0
        %677 = vmatprep.mubr.bf16.mxu0 0
        %678 = vmatmul.mubr.bf16.gmra.mrb[0].mxu0 %v556
        %v679 = vpop.f32.mrb[0].mxu0
        %v680 = vadd.f32 0.0, %v679
        %v681 = vpop.f32.mrb[0].mxu0
        %v682 = vpop.f32.mrb[0].mxu0
        %v683 = vadd.f32 0.0, %v682
        %v684 = vpop.f32.mrb[0].mxu0
        %685 = vmatprep.mubr.bf16.mxu0 0
        %686 = vmatmul.mubr.bf16.gmra.mrb[0].mxu0 %v557
        %v687 = vpop.f32.mrb[0].mxu0
        %v688 = vadd.f32 0.0, %v687
        %v689 = vpop.f32.mrb[0].mxu0
        %v690 = vpop.f32.mrb[0].mxu0
        %v691 = vadd.f32 0.0, %v690
        %v692 = vpop.f32.mrb[0].mxu0
        %693 = vmatprep.mubr.bf16.mxu0 0
        %694 = vmatmul.mubr.bf16.gmra.mrb[0].mxu0 %v558
        %v695 = vpop.f32.mrb[0].mxu0
        %v696 = vadd.f32 0.0, %v695
        %v697 = vpop.f32.mrb[0].mxu0
        %v698 = vpop.f32.mrb[0].mxu0
        %v699 = vadd.f32 0.0, %v698
        %v700 = vpop.f32.mrb[0].mxu0
        %701 = vmatprep.mubr.bf16.mxu0 0
        %702 = vmatmul.mubr.bf16.gmra.mrb[0].mxu0 %v559
        %v703 = vpop.f32.mrb[0].mxu0
        %v704 = vadd.f32 0.0, %v703
        %v705 = vpop.f32.mrb[0].mxu0
        %v706 = vpop.f32.mrb[0].mxu0
        %v707 = vadd.f32 0.0, %v706
        %v708 = vpop.f32.mrb[0].mxu0
        %709 = vmatprep.mubr.bf16.mxu0 0
        %710 = vmatmul.mubr.bf16.gmra.mrb[0].mxu0 %v560
        %v711 = vpop.f32.mrb[0].mxu0
        %v712 = vadd.f32 0.0, %v711
        %v713 = vpop.f32.mrb[0].mxu0
        %v714 = vpop.f32.mrb[0].mxu0
        %v715 = vadd.f32 0.0, %v714
        %v716 = vpop.f32.mrb[0].mxu0
        %717 = vmatprep.mubr.bf16.mxu0 0
        %718 = vmatmul.mubr.bf16.gmra.mrb[0].mxu0 %v561
        %v719 = vpop.f32.mrb[0].mxu0
        %v720 = vadd.f32 0.0, %v719
        %v721 = vpop.f32.mrb[0].mxu0
        %v722 = vpop.f32.mrb[0].mxu0
        %v723 = vadd.f32 0.0, %v722
        %v724 = vpop.f32.mrb[0].mxu0
        %725 = vmatprep.mubr.bf16.mxu0 0
        %726 = vmatmul.mubr.bf16.gmra.mrb[0].mxu0 %v562
        %v727 = vpop.f32.mrb[0].mxu0
        %v728 = vadd.f32 0.0, %v727
        %v729 = vpop.f32.mrb[0].mxu0
        %v730 = vpop.f32.mrb[0].mxu0
        %v731 = vadd.f32 0.0, %v730
        %v732 = vpop.f32.mrb[0].mxu0
        %733 = vmatprep.mubr.bf16.mxu0 0
        %734 = vmatmul.mubr.bf16.gmra.mrb[0].mxu0 %v563
        %v735 = vpop.f32.mrb[0].mxu0
        %v736 = vadd.f32 0.0, %v735
        %v737 = vpop.f32.mrb[0].mxu0
        %v738 = vpop.f32.mrb[0].mxu0
        %v739 = vadd.f32 0.0, %v738
        %v740 = vpop.f32.mrb[0].mxu0
        %741 = vmatprep.mubr.bf16.mxu0 0
        %742 = vmatmul.mubr.bf16.gmra.mrb[0].mxu0 %v564
        %v743 = vpop.f32.mrb[0].mxu0
        %v744 = vadd.f32 0.0, %v743
        %v745 = vpop.f32.mrb[0].mxu0
        %v746 = vpop.f32.mrb[0].mxu0
        %v747 = vadd.f32 0.0, %v746
        %v748 = vpop.f32.mrb[0].mxu0
        %749 = vmatprep.mubr.bf16.mxu0 0
        %750 = vmatmul.mubr.bf16.gmra.mrb[0].mxu0 %v565
        %v751 = vpop.f32.mrb[0].mxu0
        %v752 = vadd.f32 0.0, %v751
        %v753 = vpop.f32.mrb[0].mxu0
        %v754 = vpop.f32.mrb[0].mxu0
        %v755 = vadd.f32 0.0, %v754
        %v756 = vpop.f32.mrb[0].mxu0
        %757 = vmatprep.mubr.bf16.mxu0 0
        %758 = vmatmul.mubr.bf16.gmra.mrb[0].mxu0 %v566
        %v759 = vpop.f32.mrb[0].mxu0
        %v760 = vadd.f32 0.0, %v759
        %v761 = vpop.f32.mrb[0].mxu0
        %v762 = vpop.f32.mrb[0].mxu0
        %v763 = vadd.f32 0.0, %v762
        %v764 = vpop.f32.mrb[0].mxu0
        %765 = vmatprep.mubr.bf16.mxu0 0
        %766 = vmatmul.mubr.bf16.gmra.mrb[0].mxu0 %v567
        %v767 = vpop.f32.mrb[0].mxu0
        %v768 = vadd.f32 0.0, %v767
        %v769 = vpop.f32.mrb[0].mxu0
        %v770 = vpop.f32.mrb[0].mxu0
        %v771 = vadd.f32 0.0, %v770
        %v772 = vpop.f32.mrb[0].mxu0
        %773 = vmatprep.mubr.bf16.mxu0 0
        %774 = vmatmul.mubr.bf16.gmra.mrb[0].mxu0 %v568
        %v775 = vpop.f32.mrb[0].mxu0
        %v776 = vadd.f32 0.0, %v775
        %v777 = vpop.f32.mrb[0].mxu0
        %v778 = vpop.f32.mrb[0].mxu0
        %v779 = vadd.f32 0.0, %v778
        %v780 = vpop.f32.mrb[0].mxu0
        %781 = vmatprep.mubr.bf16.mxu0 0
        %782 = vmatmul.mubr.bf16.gmra.mrb[0].mxu0 %v569
        %v783 = vpop.f32.mrb[0].mxu0
        %v784 = vadd.f32 0.0, %v783
        %v785 = vpop.f32.mrb[0].mxu0
        %v786 = vpop.f32.mrb[0].mxu0
        %v787 = vadd.f32 0.0, %v786
        %v788 = vpop.f32.mrb[0].mxu0
        %789 = vmatprep.mubr.bf16.mxu0 0
        %790 = vmatmul.mubr.bf16.gmra.mrb[0].mxu0 %v570
        %v791 = vpop.f32.mrb[0].mxu0
        %v792 = vadd.f32 0.0, %v791
        %v793 = vpop.f32.mrb[0].mxu0
        %v794 = vpop.f32.mrb[0].mxu0
        %v795 = vadd.f32 0.0, %v794
        %v796 = vpop.f32.mrb[0].mxu0
        %797 = vmatprep.mubr.bf16.mxu0 0
        %798 = vmatmul.mubr.bf16.gmra.mrb[0].mxu0 %v571
        %v799 = vpop.f32.mrb[0].mxu0
        %v800 = vadd.f32 0.0, %v799
        %v801 = vpop.f32.mrb[0].mxu0
        %v802 = vpop.f32.mrb[0].mxu0
        %v803 = vadd.f32 0.0, %v802
        %v804 = vpop.f32.mrb[0].mxu0
        %805 = vmatprep.mubr.bf16.mxu0 0
        %806 = vmatmul.mubr.bf16.gmra.mrb[0].mxu0 %v572
        %v807 = vpop.f32.mrb[0].mxu0
        %v808 = vadd.f32 0.0, %v807
        %v809 = vpop.f32.mrb[0].mxu0
        %v810 = vpop.f32.mrb[0].mxu0
        %v811 = vadd.f32 0.0, %v810
        %v812 = vpop.f32.mrb[0].mxu0
        %813 = vdwg.mxu0
        %v814 = vld [vmem:[%s5] sm:$0x1]
        %v816 = vlaneseq
        %v817 = vshrl.u32 %v816, 7
        %v818 = vsub.s32 0, %v817
        %v819 = vrot.slane %v814, %v818
        %v821 = vmul.f32 %v672, %v819
        %v822 = vmul.f32 %v675, %v819
        %v823 = vmul.f32 %v680, %v819
        %v824 = vmul.f32 %v683, %v819
        %v825 = vmul.f32 %v688, %v819
        %v826 = vmul.f32 %v691, %v819
        %v827 = vmul.f32 %v696, %v819
        %v828 = vmul.f32 %v699, %v819
        %v829 = vmul.f32 %v704, %v819
        %v830 = vmul.f32 %v707, %v819
        %v831 = vmul.f32 %v712, %v819
        %v832 = vmul.f32 %v715, %v819
        %v833 = vmul.f32 %v720, %v819
        %v834 = vmul.f32 %v723, %v819
        %v835 = vmul.f32 %v728, %v819
        %v836 = vmul.f32 %v731, %v819
        %v837 = vmul.f32 %v736, %v819
        %v838 = vmul.f32 %v739, %v819
        %v839 = vmul.f32 %v744, %v819
        %v840 = vmul.f32 %v747, %v819
        %v841 = vmul.f32 %v752, %v819
        %v842 = vmul.f32 %v755, %v819
        %v843 = vmul.f32 %v760, %v819
        %v844 = vmul.f32 %v763, %v819
        %v845 = vmul.f32 %v768, %v819
        %v846 = vmul.f32 %v771, %v819
        %v847 = vmul.f32 %v776, %v819
        %v848 = vmul.f32 %v779, %v819
        %v849 = vmul.f32 %v784, %v819
        %v850 = vmul.f32 %v787, %v819
        %v851 = vmul.f32 %v792, %v819
        %v852 = vmul.f32 %v795, %v819
        %v853 = vmul.f32 %v800, %v819
        %v854 = vmul.f32 %v803, %v819
        %v855 = vmul.f32 %v808, %v819
        %v856 = vmul.f32 %v811, %v819
        %v857 = vld [vmem:[%s6] sm:$0x1]
        %v859 = vlaneseq
        %v860 = vshrl.u32 %v859, 7
        %v861 = vsub.s32 0, %v860
        %v862 = vrot.slane %v857, %v861
        %v864 = vadd.f32 %v821, %v862
        %v865 = vadd.f32 %v822, %v862
        %v866 = vadd.f32 %v823, %v862
        %v867 = vadd.f32 %v824, %v862
        %v868 = vadd.f32 %v825, %v862
        %v869 = vadd.f32 %v826, %v862
        %v870 = vadd.f32 %v827, %v862
        %v871 = vadd.f32 %v828, %v862
        %v872 = vadd.f32 %v829, %v862
        %v873 = vadd.f32 %v830, %v862
        %v874 = vadd.f32 %v831, %v862
        %v875 = vadd.f32 %v832, %v862
        %v876 = vadd.f32 %v833, %v862
        %v877 = vadd.f32 %v834, %v862
        %v878 = vadd.f32 %v835, %v862
        %v879 = vadd.f32 %v836, %v862
        %v880 = vadd.f32 %v837, %v862
        %v881 = vadd.f32 %v838, %v862
        %v882 = vadd.f32 %v839, %v862
        %v883 = vadd.f32 %v840, %v862
        %v884 = vadd.f32 %v841, %v862
        %v885 = vadd.f32 %v842, %v862
        %v886 = vadd.f32 %v843, %v862
        %v887 = vadd.f32 %v844, %v862
        %v888 = vadd.f32 %v845, %v862
        %v889 = vadd.f32 %v846, %v862
        %v890 = vadd.f32 %v847, %v862
        %v891 = vadd.f32 %v848, %v862
        %v892 = vadd.f32 %v849, %v862
        %v893 = vadd.f32 %v850, %v862
        %v894 = vadd.f32 %v851, %v862
        %v895 = vadd.f32 %v852, %v862
        %v896 = vadd.f32 %v853, %v862
        %v897 = vadd.f32 %v854, %v862
        %v898 = vadd.f32 %v855, %v862
        %v899 = vadd.f32 %v856, %v862
        %v900 = vxor.u32 %v864, 2147483648
        %v901 = vxor.u32 %v865, 2147483648
        %v902 = vxor.u32 %v866, 2147483648
        %v903 = vxor.u32 %v867, 2147483648
        %v904 = vxor.u32 %v868, 2147483648
        %v905 = vxor.u32 %v869, 2147483648
        %v906 = vxor.u32 %v870, 2147483648
        %v907 = vxor.u32 %v871, 2147483648
        %v908 = vxor.u32 %v872, 2147483648
        %v909 = vxor.u32 %v873, 2147483648
        %v910 = vxor.u32 %v874, 2147483648
        %v911 = vxor.u32 %v875, 2147483648
        %v912 = vxor.u32 %v876, 2147483648
        %v913 = vxor.u32 %v877, 2147483648
        %v914 = vxor.u32 %v878, 2147483648
        %v915 = vxor.u32 %v879, 2147483648
        %v916 = vxor.u32 %v880, 2147483648
        %v917 = vxor.u32 %v881, 2147483648
        %v918 = vxor.u32 %v882, 2147483648
        %v919 = vxor.u32 %v883, 2147483648
        %v920 = vxor.u32 %v884, 2147483648
        %v921 = vxor.u32 %v885, 2147483648
        %v922 = vxor.u32 %v886, 2147483648
        %v923 = vxor.u32 %v887, 2147483648
        %v924 = vxor.u32 %v888, 2147483648
        %v925 = vxor.u32 %v889, 2147483648
        %v926 = vxor.u32 %v890, 2147483648
        %v927 = vxor.u32 %v891, 2147483648
        %v928 = vxor.u32 %v892, 2147483648
        %v929 = vxor.u32 %v893, 2147483648
        %v930 = vxor.u32 %v894, 2147483648
        %v931 = vxor.u32 %v895, 2147483648
        %v932 = vxor.u32 %v896, 2147483648
        %v933 = vxor.u32 %v897, 2147483648
        %v934 = vxor.u32 %v898, 2147483648
        %v935 = vxor.u32 %v899, 2147483648
        %v936 = vmul.f32 %v900, 1.442695
        %v937 = vpow.pop %v936
        %v938 = vmul.f32 %v901, 1.442695
        %v939 = vpow.pop %v938
        %v940 = vmul.f32 %v902, 1.442695
        %v941 = vpow.pop %v940
        %v942 = vmul.f32 %v903, 1.442695
        %v943 = vpow.pop %v942
        %v944 = vmul.f32 %v904, 1.442695
        %v945 = vpow.pop %v944
        %v946 = vmul.f32 %v905, 1.442695
        %v947 = vpow.pop %v946
        %v948 = vmul.f32 %v906, 1.442695
        %v949 = vpow.pop %v948
        %v950 = vmul.f32 %v907, 1.442695
        %v951 = vpow.pop %v950
        %v952 = vmul.f32 %v908, 1.442695
        %v953 = vpow.pop %v952
        %v954 = vmul.f32 %v909, 1.442695
        %v955 = vpow.pop %v954
        %v956 = vmul.f32 %v910, 1.442695
        %v957 = vpow.pop %v956
        %v958 = vmul.f32 %v911, 1.442695
        %v959 = vpow.pop %v958
        %v960 = vmul.f32 %v912, 1.442695
        %v961 = vpow.pop %v960
        %v962 = vmul.f32 %v913, 1.442695
        %v963 = vpow.pop %v962
        %v964 = vmul.f32 %v914, 1.442695
        %v965 = vpow.pop %v964
        %v966 = vmul.f32 %v915, 1.442695
        %v967 = vpow.pop %v966
        %v968 = vmul.f32 %v916, 1.442695
        %v969 = vpow.pop %v968
        %v970 = vmul.f32 %v917, 1.442695
        %v971 = vpow.pop %v970
        %v972 = vmul.f32 %v918, 1.442695
        %v973 = vpow.pop %v972
        %v974 = vmul.f32 %v919, 1.442695
        %v975 = vpow.pop %v974
        %v976 = vmul.f32 %v920, 1.442695
        %v977 = vpow.pop %v976
        %v978 = vmul.f32 %v921, 1.442695
        %v979 = vpow.pop %v978
        %v980 = vmul.f32 %v922, 1.442695
        %v981 = vpow.pop %v980
        %v982 = vmul.f32 %v923, 1.442695
        %v983 = vpow.pop %v982
        %v984 = vmul.f32 %v924, 1.442695
        %v985 = vpow.pop %v984
        %v986 = vmul.f32 %v925, 1.442695
        %v987 = vpow.pop %v986
        %v988 = vmul.f32 %v926, 1.442695
        %v989 = vpow.pop %v988
        %v990 = vmul.f32 %v927, 1.442695
        %v991 = vpow.pop %v990
        %v992 = vmul.f32 %v928, 1.442695
        %v993 = vpow.pop %v992
        %v994 = vmul.f32 %v929, 1.442695
        %v995 = vpow.pop %v994
        %v996 = vmul.f32 %v930, 1.442695
        %v997 = vpow.pop %v996
        %v998 = vmul.f32 %v931, 1.442695
        %v999 = vpow.pop %v998
        %v1000 = vmul.f32 %v932, 1.442695
        %v1001 = vpow.pop %v1000
        %v1002 = vmul.f32 %v933, 1.442695
        %v1003 = vpow.pop %v1002
        %v1004 = vmul.f32 %v934, 1.442695
        %v1005 = vpow.pop %v1004
        %v1006 = vmul.f32 %v935, 1.442695
        %v1007 = vpow.pop %v1006
        %v1008 = vadd.f32 %v937, 1.0
        %v1009 = vadd.f32 %v939, 1.0
        %v1010 = vadd.f32 %v941, 1.0
        %v1011 = vadd.f32 %v943, 1.0
        %v1012 = vadd.f32 %v945, 1.0
        %v1013 = vadd.f32 %v947, 1.0
        %v1014 = vadd.f32 %v949, 1.0
        %v1015 = vadd.f32 %v951, 1.0
        %v1016 = vadd.f32 %v953, 1.0
        %v1017 = vadd.f32 %v955, 1.0
        %v1018 = vadd.f32 %v957, 1.0
        %v1019 = vadd.f32 %v959, 1.0
        %v1020 = vadd.f32 %v961, 1.0
        %v1021 = vadd.f32 %v963, 1.0
        %v1022 = vadd.f32 %v965, 1.0
        %v1023 = vadd.f32 %v967, 1.0
        %v1024 = vadd.f32 %v969, 1.0
        %v1025 = vadd.f32 %v971, 1.0
        %v1026 = vadd.f32 %v973, 1.0
        %v1027 = vadd.f32 %v975, 1.0
        %v1028 = vadd.f32 %v977, 1.0
        %v1029 = vadd.f32 %v979, 1.0
        %v1030 = vadd.f32 %v981, 1.0
        %v1031 = vadd.f32 %v983, 1.0
        %v1032 = vadd.f32 %v985, 1.0
        %v1033 = vadd.f32 %v987, 1.0
        %v1034 = vadd.f32 %v989, 1.0
        %v1035 = vadd.f32 %v991, 1.0
        %v1036 = vadd.f32 %v993, 1.0
        %v1037 = vadd.f32 %v995, 1.0
        %v1038 = vadd.f32 %v997, 1.0
        %v1039 = vadd.f32 %v999, 1.0
        %v1040 = vadd.f32 %v1001, 1.0
        %v1041 = vadd.f32 %v1003, 1.0
        %v1042 = vadd.f32 %v1005, 1.0
        %v1043 = vadd.f32 %v1007, 1.0
        %v1044 = vrcp.pop %v1008
        %v1045 = vmul.f32 1.0, %v1044
        %v1046 = vrcp.pop %v1009
        %v1047 = vmul.f32 1.0, %v1046
        %v1048 = vrcp.pop %v1010
        %v1049 = vmul.f32 1.0, %v1048
        %v1050 = vrcp.pop %v1011
        %v1051 = vmul.f32 1.0, %v1050
        %v1052 = vrcp.pop %v1012
        %v1053 = vmul.f32 1.0, %v1052
        %v1054 = vrcp.pop %v1013
        %v1055 = vmul.f32 1.0, %v1054
        %v1056 = vrcp.pop %v1014
        %v1057 = vmul.f32 1.0, %v1056
        %v1058 = vrcp.pop %v1015
        %v1059 = vmul.f32 1.0, %v1058
        %v1060 = vrcp.pop %v1016
        %v1061 = vmul.f32 1.0, %v1060
        %v1062 = vrcp.pop %v1017
        %v1063 = vmul.f32 1.0, %v1062
        %v1064 = vrcp.pop %v1018
        %v1065 = vmul.f32 1.0, %v1064
        %v1066 = vrcp.pop %v1019
        %v1067 = vmul.f32 1.0, %v1066
        %v1068 = vrcp.pop %v1020
        %v1069 = vmul.f32 1.0, %v1068
        %v1070 = vrcp.pop %v1021
        %v1071 = vmul.f32 1.0, %v1070
        %v1072 = vrcp.pop %v1022
        %v1073 = vmul.f32 1.0, %v1072
        %v1074 = vrcp.pop %v1023
        %v1075 = vmul.f32 1.0, %v1074
        %v1076 = vrcp.pop %v1024
        %v1077 = vmul.f32 1.0, %v1076
        %v1078 = vrcp.pop %v1025
        %v1079 = vmul.f32 1.0, %v1078
        %v1080 = vrcp.pop %v1026
        %v1081 = vmul.f32 1.0, %v1080
        %v1082 = vrcp.pop %v1027
        %v1083 = vmul.f32 1.0, %v1082
        %v1084 = vrcp.pop %v1028
        %v1085 = vmul.f32 1.0, %v1084
        %v1086 = vrcp.pop %v1029
        %v1087 = vmul.f32 1.0, %v1086
        %v1088 = vrcp.pop %v1030
        %v1089 = vmul.f32 1.0, %v1088
        %v1090 = vrcp.pop %v1031
        %v1091 = vmul.f32 1.0, %v1090
        %v1092 = vrcp.pop %v1032
        %v1093 = vmul.f32 1.0, %v1092
        %v1094 = vrcp.pop %v1033
        %v1095 = vmul.f32 1.0, %v1094
        %v1096 = vrcp.pop %v1034
        %v1097 = vmul.f32 1.0, %v1096
        %v1098 = vrcp.pop %v1035
        %v1099 = vmul.f32 1.0, %v1098
        %v1100 = vrcp.pop %v1036
        %v1101 = vmul.f32 1.0, %v1100
        %v1102 = vrcp.pop %v1037
        %v1103 = vmul.f32 1.0, %v1102
        %v1104 = vrcp.pop %v1038
        %v1105 = vmul.f32 1.0, %v1104
        %v1106 = vrcp.pop %v1039
        %v1107 = vmul.f32 1.0, %v1106
        %v1108 = vrcp.pop %v1040
        %v1109 = vmul.f32 1.0, %v1108
        %v1110 = vrcp.pop %v1041
        %v1111 = vmul.f32 1.0, %v1110
        %v1112 = vrcp.pop %v1042
        %v1113 = vmul.f32 1.0, %v1112
        %v1114 = vrcp.pop %v1043
        %v1115 = vmul.f32 1.0, %v1114
        %v1116 = vmul.f32 %v864, %v1045
        %v1117 = vmul.f32 %v865, %v1047
        %v1118 = vmul.f32 %v866, %v1049
        %v1119 = vmul.f32 %v867, %v1051
        %v1120 = vmul.f32 %v868, %v1053
        %v1121 = vmul.f32 %v869, %v1055
        %v1122 = vmul.f32 %v870, %v1057
        %v1123 = vmul.f32 %v871, %v1059
        %v1124 = vmul.f32 %v872, %v1061
        %v1125 = vmul.f32 %v873, %v1063
        %v1126 = vmul.f32 %v874, %v1065
        %v1127 = vmul.f32 %v875, %v1067
        %v1128 = vmul.f32 %v876, %v1069
        %v1129 = vmul.f32 %v877, %v1071
        %v1130 = vmul.f32 %v878, %v1073
        %v1131 = vmul.f32 %v879, %v1075
        %v1132 = vmul.f32 %v880, %v1077
        %v1133 = vmul.f32 %v881, %v1079
        %v1134 = vmul.f32 %v882, %v1081
        %v1135 = vmul.f32 %v883, %v1083
        %v1136 = vmul.f32 %v884, %v1085
        %v1137 = vmul.f32 %v885, %v1087
        %v1138 = vmul.f32 %v886, %v1089
        %v1139 = vmul.f32 %v887, %v1091
        %v1140 = vmul.f32 %v888, %v1093
        %v1141 = vmul.f32 %v889, %v1095
        %v1142 = vmul.f32 %v890, %v1097
        %v1143 = vmul.f32 %v891, %v1099
        %v1144 = vmul.f32 %v892, %v1101
        %v1145 = vmul.f32 %v893, %v1103
        %v1146 = vmul.f32 %v894, %v1105
        %v1147 = vmul.f32 %v895, %v1107
        %v1148 = vmul.f32 %v896, %v1109
        %v1149 = vmul.f32 %v897, %v1111
        %v1150 = vmul.f32 %v898, %v1113
        %v1151 = vmul.f32 %v899, %v1115
        %s1152 = smul.u32 %s35, 16
        %s1153 = ssub.s32 %s1152, 1
        %v1154 = vstv %s1153
        %v1155 = vadd.s32 %v1154, 1
        %v1156 = vadd.s32 %v1154, 2
        %v1157 = vadd.s32 %v1154, 3
        %v1158 = vadd.s32 %v1154, 4
        %v1159 = vadd.s32 %v1154, 5
        %v1160 = vadd.s32 %v1154, 6
        %v1161 = vadd.s32 %v1154, 7
        %v1162 = vadd.s32 %v1154, 8
        %v1163 = vadd.s32 %v1154, 9
        %v1164 = vadd.s32 %v1154, 10
        %v1165 = vadd.s32 %v1154, 11
        %v1166 = vadd.s32 %v1154, 12
        %v1167 = vadd.s32 %v1154, 13
        %v1168 = vadd.s32 %v1154, 14
        %v1169 = vadd.s32 %v1154, 15
        %v1170 = vadd.s32 %v1154, 16
        %v1171 = vadd.s32 %v1154, 17
        %vm1172 = vcmp.ge.s32.totalorder %v1154, 0
        %vm1173 = vcmp.ge.s32.totalorder %v1155, 0
        %vm1174 = vcmp.ge.s32.totalorder %v1156, 0
        %vm1175 = vcmp.ge.s32.totalorder %v1157, 0
        %vm1176 = vcmp.ge.s32.totalorder %v1158, 0
        %vm1177 = vcmp.ge.s32.totalorder %v1159, 0
        %vm1178 = vcmp.ge.s32.totalorder %v1160, 0
        %vm1179 = vcmp.ge.s32.totalorder %v1161, 0
        %vm1180 = vcmp.ge.s32.totalorder %v1162, 0
        %vm1181 = vcmp.ge.s32.totalorder %v1163, 0
        %vm1182 = vcmp.ge.s32.totalorder %v1164, 0
        %vm1183 = vcmp.ge.s32.totalorder %v1165, 0
        %vm1184 = vcmp.ge.s32.totalorder %v1166, 0
        %vm1185 = vcmp.ge.s32.totalorder %v1167, 0
        %vm1186 = vcmp.ge.s32.totalorder %v1168, 0
        %vm1187 = vcmp.ge.s32.totalorder %v1169, 0
        %vm1188 = vcmp.ge.s32.totalorder %v1170, 0
        %vm1189 = vcmp.ge.s32.totalorder %v1171, 0
        %vm1190 = vcmp.lt.s32.totalorder %v1154, 16
        %vm1191 = vcmp.lt.s32.totalorder %v1155, 16
        %vm1192 = vcmp.lt.s32.totalorder %v1156, 16
        %vm1193 = vcmp.lt.s32.totalorder %v1157, 16
        %vm1194 = vcmp.lt.s32.totalorder %v1158, 16
        %vm1195 = vcmp.lt.s32.totalorder %v1159, 16
        %vm1196 = vcmp.lt.s32.totalorder %v1160, 16
        %vm1197 = vcmp.lt.s32.totalorder %v1161, 16
        %vm1198 = vcmp.lt.s32.totalorder %v1162, 16
        %vm1199 = vcmp.lt.s32.totalorder %v1163, 16
        %vm1200 = vcmp.lt.s32.totalorder %v1164, 16
        %vm1201 = vcmp.lt.s32.totalorder %v1165, 16
        %vm1202 = vcmp.lt.s32.totalorder %v1166, 16
        %vm1203 = vcmp.lt.s32.totalorder %v1167, 16
        %vm1204 = vcmp.lt.s32.totalorder %v1168, 16
        %vm1205 = vcmp.lt.s32.totalorder %v1169, 16
        %vm1206 = vcmp.lt.s32.totalorder %v1170, 16
        %vm1207 = vcmp.lt.s32.totalorder %v1171, 16
        %vm1208 = vmand %vm1172, %vm1190
        %vm1209 = vmand %vm1173, %vm1191
        %vm1210 = vmand %vm1174, %vm1192
        %vm1211 = vmand %vm1175, %vm1193
        %vm1212 = vmand %vm1176, %vm1194
        %vm1213 = vmand %vm1177, %vm1195
        %vm1214 = vmand %vm1178, %vm1196
        %vm1215 = vmand %vm1179, %vm1197
        %vm1216 = vmand %vm1180, %vm1198
        %vm1217 = vmand %vm1181, %vm1199
        %vm1218 = vmand %vm1182, %vm1200
        %vm1219 = vmand %vm1183, %vm1201
        %vm1220 = vmand %vm1184, %vm1202
        %vm1221 = vmand %vm1185, %vm1203
        %vm1222 = vmand %vm1186, %vm1204
        %vm1223 = vmand %vm1187, %vm1205
        %vm1224 = vmand %vm1188, %vm1206
        %vm1225 = vmand %vm1189, %vm1207
        %v1226 = vsel %vm1208, 1, 0
        %v1227 = vsel %vm1209, 1, 0
        %v1228 = vsel %vm1210, 1, 0
        %v1229 = vsel %vm1211, 1, 0
        %v1230 = vsel %vm1212, 1, 0
        %v1231 = vsel %vm1213, 1, 0
        %v1232 = vsel %vm1214, 1, 0
        %v1233 = vsel %vm1215, 1, 0
        %v1234 = vsel %vm1216, 1, 0
        %v1235 = vsel %vm1217, 1, 0
        %v1236 = vsel %vm1218, 1, 0
        %v1237 = vsel %vm1219, 1, 0
        %v1238 = vsel %vm1220, 1, 0
        %v1239 = vsel %vm1221, 1, 0
        %v1240 = vsel %vm1222, 1, 0
        %v1241 = vsel %vm1223, 1, 0
        %v1242 = vsel %vm1224, 1, 0
        %v1243 = vsel %vm1225, 1, 0
        %vm1244 = vcmp.eq.s32.totalorder %v1226, 1
        %vm1245 = vcmp.eq.s32.totalorder %v1227, 1
        %vm1246 = vcmp.eq.s32.totalorder %v1228, 1
        %vm1247 = vcmp.eq.s32.totalorder %v1229, 1
        %vm1248 = vcmp.eq.s32.totalorder %v1230, 1
        %vm1249 = vcmp.eq.s32.totalorder %v1231, 1
        %vm1250 = vcmp.eq.s32.totalorder %v1232, 1
        %vm1251 = vcmp.eq.s32.totalorder %v1233, 1
        %vm1252 = vcmp.eq.s32.totalorder %v1234, 1
        %vm1253 = vcmp.eq.s32.totalorder %v1235, 1
        %vm1254 = vcmp.eq.s32.totalorder %v1236, 1
        %vm1255 = vcmp.eq.s32.totalorder %v1237, 1
        %vm1256 = vcmp.eq.s32.totalorder %v1238, 1
        %vm1257 = vcmp.eq.s32.totalorder %v1239, 1
        %vm1258 = vcmp.eq.s32.totalorder %v1240, 1
        %vm1259 = vcmp.eq.s32.totalorder %v1241, 1
        %vm1260 = vcmp.eq.s32.totalorder %v1242, 1
        %vm1261 = vcmp.eq.s32.totalorder %v1243, 1
        %v1262 = vsel %vm1244, %v1116, 0.0
        %v1263 = vsel %vm1244, %v1117, 0.0
        %v1264 = vsel %vm1245, %v1118, 0.0
        %v1265 = vsel %vm1245, %v1119, 0.0
        %v1266 = vsel %vm1246, %v1120, 0.0
        %v1267 = vsel %vm1246, %v1121, 0.0
        %v1268 = vsel %vm1247, %v1122, 0.0
        %v1269 = vsel %vm1247, %v1123, 0.0
        %v1270 = vsel %vm1248, %v1124, 0.0
        %v1271 = vsel %vm1248, %v1125, 0.0
        %v1272 = vsel %vm1249, %v1126, 0.0
        %v1273 = vsel %vm1249, %v1127, 0.0
        %v1274 = vsel %vm1250, %v1128, 0.0
        %v1275 = vsel %vm1250, %v1129, 0.0
        %v1276 = vsel %vm1251, %v1130, 0.0
        %v1277 = vsel %vm1251, %v1131, 0.0
        %v1278 = vsel %vm1252, %v1132, 0.0
        %v1279 = vsel %vm1252, %v1133, 0.0
        %v1280 = vsel %vm1253, %v1134, 0.0
        %v1281 = vsel %vm1253, %v1135, 0.0
        %v1282 = vsel %vm1254, %v1136, 0.0
        %v1283 = vsel %vm1254, %v1137, 0.0
        %v1284 = vsel %vm1255, %v1138, 0.0
        %v1285 = vsel %vm1255, %v1139, 0.0
        %v1286 = vsel %vm1256, %v1140, 0.0
        %v1287 = vsel %vm1256, %v1141, 0.0
        %v1288 = vsel %vm1257, %v1142, 0.0
        %v1289 = vsel %vm1257, %v1143, 0.0
        %v1290 = vsel %vm1258, %v1144, 0.0
        %v1291 = vsel %vm1258, %v1145, 0.0
        %v1292 = vsel %vm1259, %v1146, 0.0
        %v1293 = vsel %vm1259, %v1147, 0.0
        %v1294 = vsel %vm1260, %v1148, 0.0
        %v1295 = vsel %vm1260, %v1149, 0.0
        %v1296 = vsel %vm1261, %v1150, 0.0
        %v1297 = vsel %vm1261, %v1151, 0.0
        %v1298 = vpack.c.bf16 %v1263, %v1262
        %v1299 = vpack.c.bf16 %v1265, %v1264
        %v1300 = vpack.c.bf16 %v1267, %v1266
        %v1301 = vpack.c.bf16 %v1269, %v1268
        %v1302 = vpack.c.bf16 %v1271, %v1270
        %v1303 = vpack.c.bf16 %v1273, %v1272
        %v1304 = vpack.c.bf16 %v1275, %v1274
        %v1305 = vpack.c.bf16 %v1277, %v1276
        %v1306 = vpack.c.bf16 %v1279, %v1278
        %v1307 = vpack.c.bf16 %v1281, %v1280
        %v1308 = vpack.c.bf16 %v1283, %v1282
        %v1309 = vpack.c.bf16 %v1285, %v1284
        %v1310 = vpack.c.bf16 %v1287, %v1286
        %v1311 = vpack.c.bf16 %v1289, %v1288
        %v1312 = vpack.c.bf16 %v1291, %v1290
        %v1313 = vpack.c.bf16 %v1293, %v1292
        %v1314 = vpack.c.bf16 %v1295, %v1294
        %v1315 = vpack.c.bf16 %v1297, %v1296
        %v1317 = vshrl.u32 %v1298, 16
        %v1319 = vrot.slane %v1317, 7
        %v1320 = vshll.u32 %v1298, 16
        %v1322 = vor.u32 %v1319, %v1320
        %v1324 = vshrl.u32 %v1299, 16
        %v1326 = vrot.slane %v1324, 7
        %v1327 = vshll.u32 %v1299, 16
        %v1329 = vor.u32 %v1326, %v1327
        %v1331 = vshrl.u32 %v1300, 16
        %v1333 = vrot.slane %v1331, 7
        %v1334 = vshll.u32 %v1300, 16
        %v1336 = vor.u32 %v1333, %v1334
        %v1338 = vshrl.u32 %v1301, 16
        %v1340 = vrot.slane %v1338, 7
        %v1341 = vshll.u32 %v1301, 16
        %v1343 = vor.u32 %v1340, %v1341
        %v1345 = vshrl.u32 %v1302, 16
        %v1347 = vrot.slane %v1345, 7
        %v1348 = vshll.u32 %v1302, 16
        %v1350 = vor.u32 %v1347, %v1348
        %v1352 = vshrl.u32 %v1303, 16
        %v1354 = vrot.slane %v1352, 7
        %v1355 = vshll.u32 %v1303, 16
        %v1357 = vor.u32 %v1354, %v1355
        %v1359 = vshrl.u32 %v1304, 16
        %v1361 = vrot.slane %v1359, 7
        %v1362 = vshll.u32 %v1304, 16
        %v1364 = vor.u32 %v1361, %v1362
        %v1366 = vshrl.u32 %v1305, 16
        %v1368 = vrot.slane %v1366, 7
        %v1369 = vshll.u32 %v1305, 16
        %v1371 = vor.u32 %v1368, %v1369
        %v1373 = vshrl.u32 %v1306, 16
        %v1375 = vrot.slane %v1373, 7
        %v1376 = vshll.u32 %v1306, 16
        %v1378 = vor.u32 %v1375, %v1376
        %v1380 = vshrl.u32 %v1307, 16
        %v1382 = vrot.slane %v1380, 7
        %v1383 = vshll.u32 %v1307, 16
        %v1385 = vor.u32 %v1382, %v1383
        %v1387 = vshrl.u32 %v1308, 16
        %v1389 = vrot.slane %v1387, 7
        %v1390 = vshll.u32 %v1308, 16
        %v1392 = vor.u32 %v1389, %v1390
        %v1394 = vshrl.u32 %v1309, 16
        %v1396 = vrot.slane %v1394, 7
        %v1397 = vshll.u32 %v1309, 16
        %v1399 = vor.u32 %v1396, %v1397
        %v1401 = vshrl.u32 %v1310, 16
        %v1403 = vrot.slane %v1401, 7
        %v1404 = vshll.u32 %v1310, 16
        %v1406 = vor.u32 %v1403, %v1404
        %v1408 = vshrl.u32 %v1311, 16
        %v1410 = vrot.slane %v1408, 7
        %v1411 = vshll.u32 %v1311, 16
        %v1413 = vor.u32 %v1410, %v1411
        %v1415 = vshrl.u32 %v1312, 16
        %v1417 = vrot.slane %v1415, 7
        %v1418 = vshll.u32 %v1312, 16
        %v1420 = vor.u32 %v1417, %v1418
        %v1422 = vshrl.u32 %v1313, 16
        %v1424 = vrot.slane %v1422, 7
        %v1425 = vshll.u32 %v1313, 16
        %v1427 = vor.u32 %v1424, %v1425
        %v1429 = vshrl.u32 %v1314, 16
        %v1431 = vrot.slane %v1429, 7
        %v1432 = vshll.u32 %v1314, 16
        %v1434 = vor.u32 %v1431, %v1432
        %v1436 = vshrl.u32 %v1315, 16
        %v1438 = vrot.slane %v1436, 7
        %v1439 = vshll.u32 %v1315, 16
        %v1441 = vor.u32 %v1438, %v1439
        %vm1460 = vcmask 1040384
        %vm1461 = vsmask.f32 256
        %vm1462 = vmand %vm1460, %vm1461
        %v1463 = vsel %vm1462, 0, %v1322
        %v1464 = vsel %vm1462, 0, %v1329
        %v1465 = vsel %vm1462, 0, %v1336
        %v1466 = vsel %vm1462, 0, %v1343
        %v1467 = vsel %vm1462, 0, %v1350
        %v1468 = vsel %vm1462, 0, %v1357
        %v1469 = vsel %vm1462, 0, %v1364
        %v1470 = vsel %vm1462, 0, %v1371
        %v1471 = vsel %vm1462, 0, %v1378
        %v1472 = vsel %vm1462, 0, %v1385
        %v1473 = vsel %vm1462, 0, %v1392
        %v1474 = vsel %vm1462, 0, %v1399
        %v1475 = vsel %vm1462, 0, %v1406
        %v1476 = vsel %vm1462, 0, %v1413
        %v1477 = vsel %vm1462, 0, %v1420
        %v1478 = vsel %vm1462, 0, %v1427
        %v1479 = vsel %vm1462, 0, %v1434
        %v1480 = vsel %vm1462, 0, %v1441
        %v1481 = vrot.slane %v1320, 1
        %v1482 = vor.u32 %v1317, %v1481
        %v1483 = vrot.slane %v1327, 1
        %v1484 = vor.u32 %v1324, %v1483
        %v1485 = vrot.slane %v1334, 1
        %v1486 = vor.u32 %v1331, %v1485
        %v1487 = vrot.slane %v1341, 1
        %v1488 = vor.u32 %v1338, %v1487
        %v1489 = vrot.slane %v1348, 1
        %v1490 = vor.u32 %v1345, %v1489
        %v1491 = vrot.slane %v1355, 1
        %v1492 = vor.u32 %v1352, %v1491
        %v1493 = vrot.slane %v1362, 1
        %v1494 = vor.u32 %v1359, %v1493
        %v1495 = vrot.slane %v1369, 1
        %v1496 = vor.u32 %v1366, %v1495
        %v1497 = vrot.slane %v1376, 1
        %v1498 = vor.u32 %v1373, %v1497
        %v1499 = vrot.slane %v1383, 1
        %v1500 = vor.u32 %v1380, %v1499
        %v1501 = vrot.slane %v1390, 1
        %v1502 = vor.u32 %v1387, %v1501
        %v1503 = vrot.slane %v1397, 1
        %v1504 = vor.u32 %v1394, %v1503
        %v1505 = vrot.slane %v1404, 1
        %v1506 = vor.u32 %v1401, %v1505
        %v1507 = vrot.slane %v1411, 1
        %v1508 = vor.u32 %v1408, %v1507
        %v1509 = vrot.slane %v1418, 1
        %v1510 = vor.u32 %v1415, %v1509
        %v1511 = vrot.slane %v1425, 1
        %v1512 = vor.u32 %v1422, %v1511
        %v1513 = vrot.slane %v1432, 1
        %v1514 = vor.u32 %v1429, %v1513
        %v1515 = vrot.slane %v1439, 1
        %v1516 = vor.u32 %v1436, %v1515
        %vm1535 = vcmask 1047552
        %vm1536 = vsmask.f32 7424
        %vm1537 = vmand %vm1535, %vm1536
        %v1538 = vsel %vm1537, %v1482, 0
        %v1539 = vsel %vm1537, %v1484, 0
        %v1540 = vsel %vm1537, %v1486, 0
        %v1541 = vsel %vm1537, %v1488, 0
        %v1542 = vsel %vm1537, %v1490, 0
        %v1543 = vsel %vm1537, %v1492, 0
        %v1544 = vsel %vm1537, %v1494, 0
        %v1545 = vsel %vm1537, %v1496, 0
        %v1546 = vsel %vm1537, %v1498, 0
        %v1547 = vsel %vm1537, %v1500, 0
        %v1548 = vsel %vm1537, %v1502, 0
        %v1549 = vsel %vm1537, %v1504, 0
        %v1550 = vsel %vm1537, %v1506, 0
        %v1551 = vsel %vm1537, %v1508, 0
        %v1552 = vsel %vm1537, %v1510, 0
        %v1553 = vsel %vm1537, %v1512, 0
        %v1554 = vsel %vm1537, %v1514, 0
        %v1555 = vsel %vm1537, %v1516, 0
        %v1556 = vld [vmem:[#allocation10] sm:$0xf]
        %v1557 = vld [vmem:[#allocation10 + $0x4] sm:$0xf]
        %v1558 = vld [vmem:[#allocation10 + $0x8] sm:$0xf]
        %v1559 = vld [vmem:[#allocation10 + $0xc] sm:$0xf]
        %v1560 = vld [vmem:[#allocation10 + $0x10] sm:$0xf]
        %v1561 = vld [vmem:[#allocation10 + $0x14] sm:$0xf]
        %v1562 = vld [vmem:[#allocation10 + $0x18] sm:$0xf]
        %v1563 = vld [vmem:[#allocation10 + $0x1c] sm:$0xf]
        %v1564 = vld [vmem:[#allocation10 + $0x20] sm:$0xf]
        %v1565 = vld [vmem:[#allocation10 + $0x24] sm:$0xf]
        %v1566 = vld [vmem:[#allocation10 + $0x28] sm:$0xf]
        %v1567 = vld [vmem:[#allocation10 + $0x2c] sm:$0xf]
        %v1568 = vld [vmem:[#allocation10 + $0x30] sm:$0xf]
        %v1569 = vld [vmem:[#allocation10 + $0x34] sm:$0xf]
        %v1570 = vld [vmem:[#allocation10 + $0x38] sm:$0xf]
        %v1571 = vld [vmem:[#allocation10 + $0x3c] sm:$0xf]
        %v1572 = vld [vmem:[#allocation10 + $0x40] sm:$0xf]
        %v1573 = vld [vmem:[#allocation10 + $0x44] sm:$0xf]
        %v1574 = vld [vmem:[#allocation10 + $0x48] sm:$0xf]
        %v1575 = vld [vmem:[#allocation10 + $0x4c] sm:$0xf]
        %v1576 = vld [vmem:[#allocation10 + $0x50] sm:$0xf]
        %v1577 = vld [vmem:[#allocation10 + $0x54] sm:$0xf]
        %v1578 = vld [vmem:[#allocation10 + $0x58] sm:$0xf]
        %v1579 = vld [vmem:[#allocation10 + $0x5c] sm:$0xf]
        %v1580 = vld [vmem:[#allocation10 + $0x60] sm:$0xf]
        %v1581 = vld [vmem:[#allocation10 + $0x64] sm:$0xf]
        %v1582 = vld [vmem:[#allocation10 + $0x68] sm:$0xf]
        %v1583 = vld [vmem:[#allocation10 + $0x6c] sm:$0xf]
        %v1584 = vld [vmem:[#allocation10 + $0x70] sm:$0xf]
        %v1585 = vld [vmem:[#allocation10 + $0x74] sm:$0xf]
        %v1586 = vld [vmem:[#allocation10 + $0x78] sm:$0xf]
        %v1587 = vld [vmem:[#allocation10 + $0x7c] sm:$0xf]
        %v1588 = vld [vmem:[#allocation10 + $0x80] sm:$0xf]
        %v1589 = vld [vmem:[#allocation10 + $0x84] sm:$0xf]
        %v1590 = vld [vmem:[#allocation10 + $0x88] sm:$0xf]
        %v1591 = vld [vmem:[#allocation10 + $0x8c] sm:$0xf]
        %v1592 = vld [vmem:[#allocation10 + $0x90] sm:$0xf]
        %v1593 = vld [vmem:[#allocation10 + $0x94] sm:$0xf]
        %v1594 = vld [vmem:[#allocation10 + $0x98] sm:$0xf]
        %v1595 = vld [vmem:[#allocation10 + $0x9c] sm:$0xf]
        %v1596 = vld [vmem:[#allocation10 + $0xa0] sm:$0xf]
        %v1597 = vld [vmem:[#allocation10 + $0xa4] sm:$0xf]
        %v1598 = vld [vmem:[#allocation10 + $0xa8] sm:$0xf]
        %v1599 = vld [vmem:[#allocation10 + $0xac] sm:$0xf]
        %v1600 = vld [vmem:[#allocation10 + $0xb0] sm:$0xf]
        %v1601 = vld [vmem:[#allocation10 + $0xb4] sm:$0xf]
        %v1602 = vld [vmem:[#allocation10 + $0xb8] sm:$0xf]
        %v1603 = vld [vmem:[#allocation10 + $0xbc] sm:$0xf]
        %s1604 = scalar_lea.vmem [#allocation10], 192
        %v1605 = vld [vmem:[%s1604] sm:$0xf]
        %v1606 = vld [vmem:[%s1604 + $0x4] sm:$0xf]
        %v1607 = vld [vmem:[%s1604 + $0x8] sm:$0xf]
        %v1608 = vld [vmem:[%s1604 + $0xc] sm:$0xf]
        %v1609 = vld [vmem:[%s1604 + $0x10] sm:$0xf]
        %v1610 = vld [vmem:[%s1604 + $0x14] sm:$0xf]
        %v1611 = vld [vmem:[%s1604 + $0x18] sm:$0xf]
        %v1612 = vld [vmem:[%s1604 + $0x1c] sm:$0xf]
        %v1613 = vld [vmem:[%s1604 + $0x20] sm:$0xf]
        %v1614 = vld [vmem:[%s1604 + $0x24] sm:$0xf]
        %v1615 = vld [vmem:[%s1604 + $0x28] sm:$0xf]
        %v1616 = vld [vmem:[%s1604 + $0x2c] sm:$0xf]
        %v1617 = vld [vmem:[%s1604 + $0x30] sm:$0xf]
        %v1618 = vld [vmem:[%s1604 + $0x34] sm:$0xf]
        %v1619 = vld [vmem:[%s1604 + $0x38] sm:$0xf]
        %v1620 = vld [vmem:[%s1604 + $0x3c] sm:$0xf]
        %v1621 = vld [vmem:[%s1604 + $0x40] sm:$0xf]
        %v1622 = vld [vmem:[%s1604 + $0x44] sm:$0xf]
        %v1623 = vld [vmem:[%s1604 + $0x48] sm:$0xf]
        %v1624 = vld [vmem:[%s1604 + $0x4c] sm:$0xf]
        %v1625 = vld [vmem:[%s1604 + $0x50] sm:$0xf]
        %v1626 = vld [vmem:[%s1604 + $0x54] sm:$0xf]
        %v1627 = vld [vmem:[%s1604 + $0x58] sm:$0xf]
        %v1628 = vld [vmem:[%s1604 + $0x5c] sm:$0xf]
        %v1629 = vld [vmem:[%s1604 + $0x60] sm:$0xf]
        %v1630 = vld [vmem:[%s1604 + $0x64] sm:$0xf]
        %v1631 = vld [vmem:[%s1604 + $0x68] sm:$0xf]
        %v1632 = vld [vmem:[%s1604 + $0x6c] sm:$0xf]
        %v1633 = vld [vmem:[%s1604 + $0x70] sm:$0xf]
        %v1634 = vld [vmem:[%s1604 + $0x74] sm:$0xf]
        %v1635 = vld [vmem:[%s1604 + $0x78] sm:$0xf]
        %v1636 = vld [vmem:[%s1604 + $0x7c] sm:$0xf]
        %v1637 = vld [vmem:[%s1604 + $0x80] sm:$0xf]
        %v1638 = vld [vmem:[%s1604 + $0x84] sm:$0xf]
        %v1639 = vld [vmem:[%s1604 + $0x88] sm:$0xf]
        %v1640 = vld [vmem:[%s1604 + $0x8c] sm:$0xf]
        %v1641 = vld [vmem:[%s1604 + $0x90] sm:$0xf]
        %v1642 = vld [vmem:[%s1604 + $0x94] sm:$0xf]
        %v1643 = vld [vmem:[%s1604 + $0x98] sm:$0xf]
        %v1644 = vld [vmem:[%s1604 + $0x9c] sm:$0xf]
        %v1645 = vld [vmem:[%s1604 + $0xa0] sm:$0xf]
        %v1646 = vld [vmem:[%s1604 + $0xa4] sm:$0xf]
        %v1647 = vld [vmem:[%s1604 + $0xa8] sm:$0xf]
        %v1648 = vld [vmem:[%s1604 + $0xac] sm:$0xf]
        %v1649 = vld [vmem:[%s1604 + $0xb0] sm:$0xf]
        %v1650 = vld [vmem:[%s1604 + $0xb4] sm:$0xf]
        %v1651 = vld [vmem:[%s1604 + $0xb8] sm:$0xf]
        %v1652 = vld [vmem:[%s1604 + $0xbc] sm:$0xf]
        %v1701 = vunpack.c.l.b16 %v1605
        %v1702 = vunpack.c.l.b16 %v1606
        %v1703 = vunpack.c.l.b16 %v1607
        %v1704 = vunpack.c.l.b16 %v1608
        %v1705 = vunpack.c.l.b16 %v1609
        %v1706 = vunpack.c.l.b16 %v1610
        %v1707 = vunpack.c.l.b16 %v1611
        %v1708 = vunpack.c.l.b16 %v1612
        %v1709 = vunpack.c.l.b16 %v1613
        %v1710 = vunpack.c.l.b16 %v1614
        %v1711 = vunpack.c.l.b16 %v1615
        %v1712 = vunpack.c.l.b16 %v1616
        %v1713 = vunpack.c.l.b16 %v1617
        %v1714 = vunpack.c.l.b16 %v1618
        %v1715 = vunpack.c.l.b16 %v1619
        %v1716 = vunpack.c.l.b16 %v1620
        %v1717 = vunpack.c.l.b16 %v1621
        %v1718 = vunpack.c.l.b16 %v1622
        %v1719 = vunpack.c.l.b16 %v1623
        %v1720 = vunpack.c.l.b16 %v1624
        %v1721 = vunpack.c.l.b16 %v1625
        %v1722 = vunpack.c.l.b16 %v1626
        %v1723 = vunpack.c.l.b16 %v1627
        %v1724 = vunpack.c.l.b16 %v1628
        %v1725 = vunpack.c.l.b16 %v1629
        %v1726 = vunpack.c.l.b16 %v1630
        %v1727 = vunpack.c.l.b16 %v1631
        %v1728 = vunpack.c.l.b16 %v1632
        %v1729 = vunpack.c.l.b16 %v1633
        %v1730 = vunpack.c.l.b16 %v1634
        %v1731 = vunpack.c.l.b16 %v1635
        %v1732 = vunpack.c.l.b16 %v1636
        %v1733 = vunpack.c.l.b16 %v1637
        %v1734 = vunpack.c.l.b16 %v1638
        %v1735 = vunpack.c.l.b16 %v1639
        %v1736 = vunpack.c.l.b16 %v1640
        %v1737 = vunpack.c.l.b16 %v1641
        %v1738 = vunpack.c.l.b16 %v1642
        %v1739 = vunpack.c.l.b16 %v1643
        %v1740 = vunpack.c.l.b16 %v1644
        %v1741 = vunpack.c.l.b16 %v1645
        %v1742 = vunpack.c.l.b16 %v1646
        %v1743 = vunpack.c.l.b16 %v1647
        %v1744 = vunpack.c.l.b16 %v1648
        %v1745 = vunpack.c.l.b16 %v1649
        %v1746 = vunpack.c.l.b16 %v1650
        %v1747 = vunpack.c.l.b16 %v1651
        %v1748 = vunpack.c.l.b16 %v1652
        %v1749 = vpack.c.b16 %v1702, %v1701
        %v1750 = vpack.c.b16 %v1704, %v1703
        %v1751 = vpack.c.b16 %v1706, %v1705
        %v1752 = vpack.c.b16 %v1708, %v1707
        %v1753 = vpack.c.b16 %v1710, %v1709
        %v1754 = vpack.c.b16 %v1712, %v1711
        %v1755 = vpack.c.b16 %v1714, %v1713
        %v1756 = vpack.c.b16 %v1716, %v1715
        %v1757 = vpack.c.b16 %v1718, %v1717
        %v1758 = vpack.c.b16 %v1720, %v1719
        %v1759 = vpack.c.b16 %v1722, %v1721
        %v1760 = vpack.c.b16 %v1724, %v1723
        %v1761 = vpack.c.b16 %v1726, %v1725
        %v1762 = vpack.c.b16 %v1728, %v1727
        %v1763 = vpack.c.b16 %v1730, %v1729
        %v1764 = vpack.c.b16 %v1732, %v1731
        %v1765 = vpack.c.b16 %v1734, %v1733
        %v1766 = vpack.c.b16 %v1736, %v1735
        %v1767 = vpack.c.b16 %v1738, %v1737
        %v1768 = vpack.c.b16 %v1740, %v1739
        %v1769 = vpack.c.b16 %v1742, %v1741
        %v1770 = vpack.c.b16 %v1744, %v1743
        %v1771 = vpack.c.b16 %v1746, %v1745
        %v1772 = vpack.c.b16 %v1748, %v1747
        %1797 = vmatprep.subr.bf16.mxu0 0
        %1798 = vmatpush1.bf16.msra.mxu0 %v1749
        %1799 = vmatprep.subr.bf16.mxu0 0
        %1800 = vmatpush1.bf16.msra.mxu0 %v1750
        %1801 = vmatprep.subr.bf16.mxu0 0
        %1802 = vmatpush1.bf16.msra.mxu0 %v1751
        %1803 = vmatprep.subr.bf16.mxu0 0
        %1804 = vmatpush1.bf16.msra.mxu0 %v1752
        %1805 = vmatprep.subr.bf16.mxu0 0
        %1806 = vmatpush1.bf16.msra.mxu0 %v1753
        %1807 = vmatprep.subr.bf16.mxu0 0
        %1808 = vmatpush1.bf16.msra.mxu0 %v1754
        %1809 = vmatprep.subr.bf16.mxu0 0
        %1810 = vmatpush1.bf16.msra.mxu0 %v1755
        %1811 = vmatprep.subr.bf16.mxu0 0
        %1812 = vmatpush1.bf16.msra.mxu0 %v1756
        %1813 = vmatprep.subr.bf16.mxu0 0
        %1814 = vmatpush1.bf16.msra.mxu0 %v1757
        %1815 = vmatprep.subr.bf16.mxu0 0
        %1816 = vmatpush1.bf16.msra.mxu0 %v1758
        %1817 = vmatprep.subr.bf16.mxu0 0
        %1818 = vmatpush1.bf16.msra.mxu0 %v1759
        %1819 = vmatprep.subr.bf16.mxu0 0
        %1820 = vmatpush1.bf16.msra.mxu0 %v1760
        %1821 = vmatprep.subr.bf16.mxu0 0
        %1822 = vmatpush1.bf16.msra.mxu0 %v1761
        %1823 = vmatprep.subr.bf16.mxu0 0
        %1824 = vmatpush1.bf16.msra.mxu0 %v1762
        %1825 = vmatprep.subr.bf16.mxu0 0
        %1826 = vmatpush1.bf16.msra.mxu0 %v1763
        %1827 = vmatprep.subr.bf16.mxu0 0
        %1828 = vmatpush1.bf16.msra.mxu0 %v1764
        %1829 = vmatprep.mubr.bf16.mxu0 %v1299
        %1830 = vmatmul.mubr.bf16.gmra.mrb[0].mxu0 %v1464
        %v1831 = vpop.f32.mrb[0].mxu0
        %v1832 = vadd.f32 0.0, %v1831
        %v1833 = vpop.f32.mrb[0].mxu0
        %v1834 = vpop.f32.mrb[0].mxu0
        %v1835 = vadd.f32 0.0, %v1834
        %v1836 = vpop.f32.mrb[0].mxu0
        %1837 = vmatprep.mubr.bf16.mxu0 %v1300
        %1838 = vmatmul.mubr.bf16.gmra.mrb[0].mxu0 %v1465
        %v1839 = vpop.f32.mrb[0].mxu0
        %v1840 = vadd.f32 0.0, %v1839
        %v1841 = vpop.f32.mrb[0].mxu0
        %v1842 = vpop.f32.mrb[0].mxu0
        %v1843 = vadd.f32 0.0, %v1842
        %v1844 = vpop.f32.mrb[0].mxu0
        %1845 = vmatprep.mubr.bf16.mxu0 %v1301
        %1846 = vmatmul.mubr.bf16.gmra.mrb[0].mxu0 %v1466
        %v1847 = vpop.f32.mrb[0].mxu0
        %v1848 = vadd.f32 0.0, %v1847
        %v1849 = vpop.f32.mrb[0].mxu0
        %v1850 = vpop.f32.mrb[0].mxu0
        %v1851 = vadd.f32 0.0, %v1850
        %v1852 = vpop.f32.mrb[0].mxu0
        %1853 = vmatprep.mubr.bf16.mxu0 %v1302
        %1854 = vmatmul.mubr.bf16.gmra.mrb[0].mxu0 %v1467
        %v1855 = vpop.f32.mrb[0].mxu0
        %v1856 = vadd.f32 0.0, %v1855
        %v1857 = vpop.f32.mrb[0].mxu0
        %v1858 = vpop.f32.mrb[0].mxu0
        %v1859 = vadd.f32 0.0, %v1858
        %v1860 = vpop.f32.mrb[0].mxu0
        %1861 = vmatprep.mubr.bf16.mxu0 %v1303
        %1862 = vmatmul.mubr.bf16.gmra.mrb[0].mxu0 %v1468
        %v1863 = vpop.f32.mrb[0].mxu0
        %v1864 = vadd.f32 0.0, %v1863
        %v1865 = vpop.f32.mrb[0].mxu0
        %v1866 = vpop.f32.mrb[0].mxu0
        %v1867 = vadd.f32 0.0, %v1866
        %v1868 = vpop.f32.mrb[0].mxu0
        %1869 = vmatprep.mubr.bf16.mxu0 %v1304
        %1870 = vmatmul.mubr.bf16.gmra.mrb[0].mxu0 %v1469
        %v1871 = vpop.f32.mrb[0].mxu0
        %v1872 = vadd.f32 0.0, %v1871
        %v1873 = vpop.f32.mrb[0].mxu0
        %v1874 = vpop.f32.mrb[0].mxu0
        %v1875 = vadd.f32 0.0, %v1874
        %v1876 = vpop.f32.mrb[0].mxu0
        %1877 = vmatprep.mubr.bf16.mxu0 %v1305
        %1878 = vmatmul.mubr.bf16.gmra.mrb[0].mxu0 %v1470
        %v1879 = vpop.f32.mrb[0].mxu0
        %v1880 = vadd.f32 0.0, %v1879
        %v1881 = vpop.f32.mrb[0].mxu0
        %v1882 = vpop.f32.mrb[0].mxu0
        %v1883 = vadd.f32 0.0, %v1882
        %v1884 = vpop.f32.mrb[0].mxu0
        %1885 = vmatprep.mubr.bf16.mxu0 %v1306
        %1886 = vmatmul.mubr.bf16.gmra.mrb[0].mxu0 %v1471
        %v1887 = vpop.f32.mrb[0].mxu0
        %v1888 = vadd.f32 0.0, %v1887
        %v1889 = vpop.f32.mrb[0].mxu0
        %v1890 = vpop.f32.mrb[0].mxu0
        %v1891 = vadd.f32 0.0, %v1890
        %v1892 = vpop.f32.mrb[0].mxu0
        %1893 = vmatprep.mubr.bf16.mxu0 %v1307
        %1894 = vmatmul.mubr.bf16.gmra.mrb[0].mxu0 %v1472
        %v1895 = vpop.f32.mrb[0].mxu0
        %v1896 = vadd.f32 0.0, %v1895
        %v1897 = vpop.f32.mrb[0].mxu0
        %v1898 = vpop.f32.mrb[0].mxu0
        %v1899 = vadd.f32 0.0, %v1898
        %v1900 = vpop.f32.mrb[0].mxu0
        %1901 = vmatprep.mubr.bf16.mxu0 %v1308
        %1902 = vmatmul.mubr.bf16.gmra.mrb[0].mxu0 %v1473
        %v1903 = vpop.f32.mrb[0].mxu0
        %v1904 = vadd.f32 0.0, %v1903
        %v1905 = vpop.f32.mrb[0].mxu0
        %v1906 = vpop.f32.mrb[0].mxu0
        %v1907 = vadd.f32 0.0, %v1906
        %v1908 = vpop.f32.mrb[0].mxu0
        %1909 = vmatprep.mubr.bf16.mxu0 %v1309
        %1910 = vmatmul.mubr.bf16.gmra.mrb[0].mxu0 %v1474
        %v1911 = vpop.f32.mrb[0].mxu0
        %v1912 = vadd.f32 0.0, %v1911
        %v1913 = vpop.f32.mrb[0].mxu0
        %v1914 = vpop.f32.mrb[0].mxu0
        %v1915 = vadd.f32 0.0, %v1914
        %v1916 = vpop.f32.mrb[0].mxu0
        %1917 = vmatprep.mubr.bf16.mxu0 %v1310
        %1918 = vmatmul.mubr.bf16.gmra.mrb[0].mxu0 %v1475
        %v1919 = vpop.f32.mrb[0].mxu0
        %v1920 = vadd.f32 0.0, %v1919
        %v1921 = vpop.f32.mrb[0].mxu0
        %v1922 = vpop.f32.mrb[0].mxu0
        %v1923 = vadd.f32 0.0, %v1922
        %v1924 = vpop.f32.mrb[0].mxu0
        %1925 = vmatprep.mubr.bf16.mxu0 %v1311
        %1926 = vmatmul.mubr.bf16.gmra.mrb[0].mxu0 %v1476
        %v1927 = vpop.f32.mrb[0].mxu0
        %v1928 = vadd.f32 0.0, %v1927
        %v1929 = vpop.f32.mrb[0].mxu0
        %v1930 = vpop.f32.mrb[0].mxu0
        %v1931 = vadd.f32 0.0, %v1930
        %v1932 = vpop.f32.mrb[0].mxu0
        %1933 = vmatprep.mubr.bf16.mxu0 %v1312
        %1934 = vmatmul.mubr.bf16.gmra.mrb[0].mxu0 %v1477
        %v1935 = vpop.f32.mrb[0].mxu0
        %v1936 = vadd.f32 0.0, %v1935
        %v1937 = vpop.f32.mrb[0].mxu0
        %v1938 = vpop.f32.mrb[0].mxu0
        %v1939 = vadd.f32 0.0, %v1938
        %v1940 = vpop.f32.mrb[0].mxu0
        %1941 = vmatprep.mubr.bf16.mxu0 %v1313
        %1942 = vmatmul.mubr.bf16.gmra.mrb[0].mxu0 %v1478
        %v1943 = vpop.f32.mrb[0].mxu0
        %v1944 = vadd.f32 0.0, %v1943
        %v1945 = vpop.f32.mrb[0].mxu0
        %v1946 = vpop.f32.mrb[0].mxu0
        %v1947 = vadd.f32 0.0, %v1946
        %v1948 = vpop.f32.mrb[0].mxu0
        %1949 = vmatprep.mubr.bf16.mxu0 %v1314
        %1950 = vmatmul.mubr.bf16.gmra.mrb[0].mxu0 %v1479
        %v1951 = vpop.f32.mrb[0].mxu0
        %v1952 = vadd.f32 0.0, %v1951
        %v1953 = vpop.f32.mrb[0].mxu0
        %v1954 = vpop.f32.mrb[0].mxu0
        %v1955 = vadd.f32 0.0, %v1954
        %v1956 = vpop.f32.mrb[0].mxu0
        %1957 = vdwg.mxu0
        %1958 = vmatprep.subr.bf16.mxu0 0
        %1959 = vmatpush1.bf16.msra.mxu0 %v1765
        %1960 = vmatprep.subr.bf16.mxu0 0
        %1961 = vmatpush1.bf16.msra.mxu0 %v1766
        %1962 = vmatprep.subr.bf16.mxu0 0
        %1963 = vmatpush1.bf16.msra.mxu0 %v1767
        %1964 = vmatprep.subr.bf16.mxu0 0
        %1965 = vmatpush1.bf16.msra.mxu0 %v1768
        %1966 = vmatprep.subr.bf16.mxu0 0
        %1967 = vmatpush1.bf16.msra.mxu0 %v1769
        %1968 = vmatprep.subr.bf16.mxu0 0
        %1969 = vmatpush1.bf16.msra.mxu0 %v1770
        %1970 = vmatprep.subr.bf16.mxu0 0
        %1971 = vmatpush1.bf16.msra.mxu0 %v1771
        %1972 = vmatprep.subr.bf16.mxu0 0
        %1973 = vmatpush1.bf16.msra.mxu0 %v1772
        %1974 = vmatprep.subr.bf16.mxu0 0
        %1975 = vmatpush1.bf16.msra.mxu0 0
        %1976 = vmatprep.subr.bf16.mxu0 0
        %1977 = vmatpush1.bf16.msra.mxu0 0
        %1978 = vmatprep.subr.bf16.mxu0 0
        %1979 = vmatpush1.bf16.msra.mxu0 0
        %1980 = vmatprep.subr.bf16.mxu0 0
        %1981 = vmatpush1.bf16.msra.mxu0 0
        %1982 = vmatprep.subr.bf16.mxu0 0
        %1983 = vmatpush1.bf16.msra.mxu0 0
        %1984 = vmatprep.subr.bf16.mxu0 0
        %1985 = vmatpush1.bf16.msra.mxu0 0
        %1986 = vmatprep.subr.bf16.mxu0 0
        %1987 = vmatpush1.bf16.msra.mxu0 0
        %1988 = vmatprep.subr.bf16.mxu0 0
        %1989 = vmatpush1.bf16.msra.mxu0 0
        %1990 = vmatprep.mubr.bf16.mxu0 0
        %1991 = vmatmul.mubr.bf16.gmra.mrb[0].mxu0 %v1539
        %v1992 = vpop.f32.mrb[0].mxu0
        %v1993 = vadd.f32 %v1832, %v1992
        %v1994 = vpop.f32.mrb[0].mxu0
        %v1995 = vpop.f32.mrb[0].mxu0
        %v1996 = vadd.f32 %v1835, %v1995
        %v1997 = vpop.f32.mrb[0].mxu0
        %1998 = vmatprep.mubr.bf16.mxu0 0
        %1999 = vmatmul.mubr.bf16.gmra.mrb[0].mxu0 %v1540
        %v2000 = vpop.f32.mrb[0].mxu0
        %v2001 = vadd.f32 %v1840, %v2000
        %v2002 = vpop.f32.mrb[0].mxu0
        %v2003 = vpop.f32.mrb[0].mxu0
        %v2004 = vadd.f32 %v1843, %v2003
        %v2005 = vpop.f32.mrb[0].mxu0
        %2006 = vmatprep.mubr.bf16.mxu0 0
        %2007 = vmatmul.mubr.bf16.gmra.mrb[0].mxu0 %v1541
        %v2008 = vpop.f32.mrb[0].mxu0
        %v2009 = vadd.f32 %v1848, %v2008
        %v2010 = vpop.f32.mrb[0].mxu0
        %v2011 = vpop.f32.mrb[0].mxu0
        %v2012 = vadd.f32 %v1851, %v2011
        %v2013 = vpop.f32.mrb[0].mxu0
        %2014 = vmatprep.mubr.bf16.mxu0 0
        %2015 = vmatmul.mubr.bf16.gmra.mrb[0].mxu0 %v1542
        %v2016 = vpop.f32.mrb[0].mxu0
        %v2017 = vadd.f32 %v1856, %v2016
        %v2018 = vpop.f32.mrb[0].mxu0
        %v2019 = vpop.f32.mrb[0].mxu0
        %v2020 = vadd.f32 %v1859, %v2019
        %v2021 = vpop.f32.mrb[0].mxu0
        %2022 = vmatprep.mubr.bf16.mxu0 0
        %2023 = vmatmul.mubr.bf16.gmra.mrb[0].mxu0 %v1543
        %v2024 = vpop.f32.mrb[0].mxu0
        %v2025 = vadd.f32 %v1864, %v2024
        %v2026 = vpop.f32.mrb[0].mxu0
        %v2027 = vpop.f32.mrb[0].mxu0
        %v2028 = vadd.f32 %v1867, %v2027
        %v2029 = vpop.f32.mrb[0].mxu0
        %2030 = vmatprep.mubr.bf16.mxu0 0
        %2031 = vmatmul.mubr.bf16.gmra.mrb[0].mxu0 %v1544
        %v2032 = vpop.f32.mrb[0].mxu0
        %v2033 = vadd.f32 %v1872, %v2032
        %v2034 = vpop.f32.mrb[0].mxu0
        %v2035 = vpop.f32.mrb[0].mxu0
        %v2036 = vadd.f32 %v1875, %v2035
        %v2037 = vpop.f32.mrb[0].mxu0
        %2038 = vmatprep.mubr.bf16.mxu0 0
        %2039 = vmatmul.mubr.bf16.gmra.mrb[0].mxu0 %v1545
        %v2040 = vpop.f32.mrb[0].mxu0
        %v2041 = vadd.f32 %v1880, %v2040
        %v2042 = vpop.f32.mrb[0].mxu0
        %v2043 = vpop.f32.mrb[0].mxu0
        %v2044 = vadd.f32 %v1883, %v2043
        %v2045 = vpop.f32.mrb[0].mxu0
        %2046 = vmatprep.mubr.bf16.mxu0 0
        %2047 = vmatmul.mubr.bf16.gmra.mrb[0].mxu0 %v1546
        %v2048 = vpop.f32.mrb[0].mxu0
        %v2049 = vadd.f32 %v1888, %v2048
        %v2050 = vpop.f32.mrb[0].mxu0
        %v2051 = vpop.f32.mrb[0].mxu0
        %v2052 = vadd.f32 %v1891, %v2051
        %v2053 = vpop.f32.mrb[0].mxu0
        %2054 = vmatprep.mubr.bf16.mxu0 0
        %2055 = vmatmul.mubr.bf16.gmra.mrb[0].mxu0 %v1547
        %v2056 = vpop.f32.mrb[0].mxu0
        %v2057 = vadd.f32 %v1896, %v2056
        %v2058 = vpop.f32.mrb[0].mxu0
        %v2059 = vpop.f32.mrb[0].mxu0
        %v2060 = vadd.f32 %v1899, %v2059
        %v2061 = vpop.f32.mrb[0].mxu0
        %2062 = vmatprep.mubr.bf16.mxu0 0
        %2063 = vmatmul.mubr.bf16.gmra.mrb[0].mxu0 %v1548
        %v2064 = vpop.f32.mrb[0].mxu0
        %v2065 = vadd.f32 %v1904, %v2064
        %v2066 = vpop.f32.mrb[0].mxu0
        %v2067 = vpop.f32.mrb[0].mxu0
        %v2068 = vadd.f32 %v1907, %v2067
        %v2069 = vpop.f32.mrb[0].mxu0
        %2070 = vmatprep.mubr.bf16.mxu0 0
        %2071 = vmatmul.mubr.bf16.gmra.mrb[0].mxu0 %v1549
        %v2072 = vpop.f32.mrb[0].mxu0
        %v2073 = vadd.f32 %v1912, %v2072
        %v2074 = vpop.f32.mrb[0].mxu0
        %v2075 = vpop.f32.mrb[0].mxu0
        %v2076 = vadd.f32 %v1915, %v2075
        %v2077 = vpop.f32.mrb[0].mxu0
        %2078 = vmatprep.mubr.bf16.mxu0 0
        %2079 = vmatmul.mubr.bf16.gmra.mrb[0].mxu0 %v1550
        %v2080 = vpop.f32.mrb[0].mxu0
        %v2081 = vadd.f32 %v1920, %v2080
        %v2082 = vpop.f32.mrb[0].mxu0
        %v2083 = vpop.f32.mrb[0].mxu0
        %v2084 = vadd.f32 %v1923, %v2083
        %v2085 = vpop.f32.mrb[0].mxu0
        %2086 = vmatprep.mubr.bf16.mxu0 0
        %2087 = vmatmul.mubr.bf16.gmra.mrb[0].mxu0 %v1551
        %v2088 = vpop.f32.mrb[0].mxu0
        %v2089 = vadd.f32 %v1928, %v2088
        %v2090 = vpop.f32.mrb[0].mxu0
        %v2091 = vpop.f32.mrb[0].mxu0
        %v2092 = vadd.f32 %v1931, %v2091
        %v2093 = vpop.f32.mrb[0].mxu0
        %2094 = vmatprep.mubr.bf16.mxu0 0
        %2095 = vmatmul.mubr.bf16.gmra.mrb[0].mxu0 %v1552
        %v2096 = vpop.f32.mrb[0].mxu0
        %v2097 = vadd.f32 %v1936, %v2096
        %v2098 = vpop.f32.mrb[0].mxu0
        %v2099 = vpop.f32.mrb[0].mxu0
        %v2100 = vadd.f32 %v1939, %v2099
        %v2101 = vpop.f32.mrb[0].mxu0
        %2102 = vmatprep.mubr.bf16.mxu0 0
        %2103 = vmatmul.mubr.bf16.gmra.mrb[0].mxu0 %v1553
        %v2104 = vpop.f32.mrb[0].mxu0
        %v2105 = vadd.f32 %v1944, %v2104
        %v2106 = vpop.f32.mrb[0].mxu0
        %v2107 = vpop.f32.mrb[0].mxu0
        %v2108 = vadd.f32 %v1947, %v2107
        %v2109 = vpop.f32.mrb[0].mxu0
        %2110 = vmatprep.mubr.bf16.mxu0 0
        %2111 = vmatmul.mubr.bf16.gmra.mrb[0].mxu0 %v1554
        %v2112 = vpop.f32.mrb[0].mxu0
        %v2113 = vadd.f32 %v1952, %v2112
        %v2114 = vpop.f32.mrb[0].mxu0
        %v2115 = vpop.f32.mrb[0].mxu0
        %v2116 = vadd.f32 %v1955, %v2115
        %v2117 = vpop.f32.mrb[0].mxu0
        %2118 = vdwg.mxu0
        %v2167 = vunpack.c.l.b16 %v1556
        %v2168 = vunpack.c.l.b16 %v1557
        %v2169 = vunpack.c.l.b16 %v1558
        %v2170 = vunpack.c.l.b16 %v1559
        %v2171 = vunpack.c.l.b16 %v1560
        %v2172 = vunpack.c.l.b16 %v1561
        %v2173 = vunpack.c.l.b16 %v1562
        %v2174 = vunpack.c.l.b16 %v1563
        %v2175 = vunpack.c.l.b16 %v1564
        %v2176 = vunpack.c.l.b16 %v1565
        %v2177 = vunpack.c.l.b16 %v1566
        %v2178 = vunpack.c.l.b16 %v1567
        %v2179 = vunpack.c.l.b16 %v1568
        %v2180 = vunpack.c.l.b16 %v1569
        %v2181 = vunpack.c.l.b16 %v1570
        %v2182 = vunpack.c.l.b16 %v1571
        %v2183 = vunpack.c.l.b16 %v1572
        %v2184 = vunpack.c.l.b16 %v1573
        %v2185 = vunpack.c.l.b16 %v1574
        %v2186 = vunpack.c.l.b16 %v1575
        %v2187 = vunpack.c.l.b16 %v1576
        %v2188 = vunpack.c.l.b16 %v1577
        %v2189 = vunpack.c.l.b16 %v1578
        %v2190 = vunpack.c.l.b16 %v1579
        %v2191 = vunpack.c.l.b16 %v1580
        %v2192 = vunpack.c.l.b16 %v1581
        %v2193 = vunpack.c.l.b16 %v1582
        %v2194 = vunpack.c.l.b16 %v1583
        %v2195 = vunpack.c.l.b16 %v1584
        %v2196 = vunpack.c.l.b16 %v1585
        %v2197 = vunpack.c.l.b16 %v1586
        %v2198 = vunpack.c.l.b16 %v1587
        %v2199 = vunpack.c.l.b16 %v1588
        %v2200 = vunpack.c.l.b16 %v1589
        %v2201 = vunpack.c.l.b16 %v1590
        %v2202 = vunpack.c.l.b16 %v1591
        %v2203 = vunpack.c.l.b16 %v1592
        %v2204 = vunpack.c.l.b16 %v1593
        %v2205 = vunpack.c.l.b16 %v1594
        %v2206 = vunpack.c.l.b16 %v1595
        %v2207 = vunpack.c.l.b16 %v1596
        %v2208 = vunpack.c.l.b16 %v1597
        %v2209 = vunpack.c.l.b16 %v1598
        %v2210 = vunpack.c.l.b16 %v1599
        %v2211 = vunpack.c.l.b16 %v1600
        %v2212 = vunpack.c.l.b16 %v1601
        %v2213 = vunpack.c.l.b16 %v1602
        %v2214 = vunpack.c.l.b16 %v1603
        %v2215 = vpack.c.b16 %v2168, %v2167
        %v2216 = vpack.c.b16 %v2170, %v2169
        %v2217 = vpack.c.b16 %v2172, %v2171
        %v2218 = vpack.c.b16 %v2174, %v2173
        %v2219 = vpack.c.b16 %v2176, %v2175
        %v2220 = vpack.c.b16 %v2178, %v2177
        %v2221 = vpack.c.b16 %v2180, %v2179
        %v2222 = vpack.c.b16 %v2182, %v2181
        %v2223 = vpack.c.b16 %v2184, %v2183
        %v2224 = vpack.c.b16 %v2186, %v2185
        %v2225 = vpack.c.b16 %v2188, %v2187
        %v2226 = vpack.c.b16 %v2190, %v2189
        %v2227 = vpack.c.b16 %v2192, %v2191
        %v2228 = vpack.c.b16 %v2194, %v2193
        %v2229 = vpack.c.b16 %v2196, %v2195
        %v2230 = vpack.c.b16 %v2198, %v2197
        %v2231 = vpack.c.b16 %v2200, %v2199
        %v2232 = vpack.c.b16 %v2202, %v2201
        %v2233 = vpack.c.b16 %v2204, %v2203
        %v2234 = vpack.c.b16 %v2206, %v2205
        %v2235 = vpack.c.b16 %v2208, %v2207
        %v2236 = vpack.c.b16 %v2210, %v2209
        %v2237 = vpack.c.b16 %v2212, %v2211
        %v2238 = vpack.c.b16 %v2214, %v2213
        %2263 = vmatprep.subr.bf16.mxu0 0
        %2264 = vmatpush1.bf16.msra.mxu0 %v2215
        %2265 = vmatprep.subr.bf16.mxu0 0
        %2266 = vmatpush1.bf16.msra.mxu0 %v2216
        %2267 = vmatprep.subr.bf16.mxu0 0
        %2268 = vmatpush1.bf16.msra.mxu0 %v2217
        %2269 = vmatprep.subr.bf16.mxu0 0
        %2270 = vmatpush1.bf16.msra.mxu0 %v2218
        %2271 = vmatprep.subr.bf16.mxu0 0
        %2272 = vmatpush1.bf16.msra.mxu0 %v2219
        %2273 = vmatprep.subr.bf16.mxu0 0
        %2274 = vmatpush1.bf16.msra.mxu0 %v2220
        %2275 = vmatprep.subr.bf16.mxu0 0
        %2276 = vmatpush1.bf16.msra.mxu0 %v2221
        %2277 = vmatprep.subr.bf16.mxu0 0
        %2278 = vmatpush1.bf16.msra.mxu0 %v2222
        %2279 = vmatprep.subr.bf16.mxu0 0
        %2280 = vmatpush1.bf16.msra.mxu0 %v2223
        %2281 = vmatprep.subr.bf16.mxu0 0
        %2282 = vmatpush1.bf16.msra.mxu0 %v2224
        %2283 = vmatprep.subr.bf16.mxu0 0
        %2284 = vmatpush1.bf16.msra.mxu0 %v2225
        %2285 = vmatprep.subr.bf16.mxu0 0
        %2286 = vmatpush1.bf16.msra.mxu0 %v2226
        %2287 = vmatprep.subr.bf16.mxu0 0
        %2288 = vmatpush1.bf16.msra.mxu0 %v2227
        %2289 = vmatprep.subr.bf16.mxu0 0
        %2290 = vmatpush1.bf16.msra.mxu0 %v2228
        %2291 = vmatprep.subr.bf16.mxu0 0
        %2292 = vmatpush1.bf16.msra.mxu0 %v2229
        %2293 = vmatprep.subr.bf16.mxu0 0
        %2294 = vmatpush1.bf16.msra.mxu0 %v2230
        %2295 = vmatprep.mubr.bf16.mxu0 %v1298
        %2296 = vmatmul.mubr.bf16.gmra.mrb[0].mxu0 %v1463
        %v2297 = vpop.f32.mrb[0].mxu0
        %v2298 = vadd.f32 %v1993, %v2297
        %v2299 = vpop.f32.mrb[0].mxu0
        %v2300 = vpop.f32.mrb[0].mxu0
        %v2301 = vadd.f32 %v1996, %v2300
        %v2302 = vpop.f32.mrb[0].mxu0
        %2303 = vmatprep.mubr.bf16.mxu0 %v1299
        %2304 = vmatmul.mubr.bf16.gmra.mrb[0].mxu0 %v1464
        %v2305 = vpop.f32.mrb[0].mxu0
        %v2306 = vadd.f32 %v2001, %v2305
        %v2307 = vpop.f32.mrb[0].mxu0
        %v2308 = vpop.f32.mrb[0].mxu0
        %v2309 = vadd.f32 %v2004, %v2308
        %v2310 = vpop.f32.mrb[0].mxu0
        %2311 = vmatprep.mubr.bf16.mxu0 %v1300
        %2312 = vmatmul.mubr.bf16.gmra.mrb[0].mxu0 %v1465
        %v2313 = vpop.f32.mrb[0].mxu0
        %v2314 = vadd.f32 %v2009, %v2313
        %v2315 = vpop.f32.mrb[0].mxu0
        %v2316 = vpop.f32.mrb[0].mxu0
        %v2317 = vadd.f32 %v2012, %v2316
        %v2318 = vpop.f32.mrb[0].mxu0
        %2319 = vmatprep.mubr.bf16.mxu0 %v1301
        %2320 = vmatmul.mubr.bf16.gmra.mrb[0].mxu0 %v1466
        %v2321 = vpop.f32.mrb[0].mxu0
        %v2322 = vadd.f32 %v2017, %v2321
        %v2323 = vpop.f32.mrb[0].mxu0
        %v2324 = vpop.f32.mrb[0].mxu0
        %v2325 = vadd.f32 %v2020, %v2324
        %v2326 = vpop.f32.mrb[0].mxu0
        %2327 = vmatprep.mubr.bf16.mxu0 %v1302
        %2328 = vmatmul.mubr.bf16.gmra.mrb[0].mxu0 %v1467
        %v2329 = vpop.f32.mrb[0].mxu0
        %v2330 = vadd.f32 %v2025, %v2329
        %v2331 = vpop.f32.mrb[0].mxu0
        %v2332 = vpop.f32.mrb[0].mxu0
        %v2333 = vadd.f32 %v2028, %v2332
        %v2334 = vpop.f32.mrb[0].mxu0
        %2335 = vmatprep.mubr.bf16.mxu0 %v1303
        %2336 = vmatmul.mubr.bf16.gmra.mrb[0].mxu0 %v1468
        %v2337 = vpop.f32.mrb[0].mxu0
        %v2338 = vadd.f32 %v2033, %v2337
        %v2339 = vpop.f32.mrb[0].mxu0
        %v2340 = vpop.f32.mrb[0].mxu0
        %v2341 = vadd.f32 %v2036, %v2340
        %v2342 = vpop.f32.mrb[0].mxu0
        %2343 = vmatprep.mubr.bf16.mxu0 %v1304
        %2344 = vmatmul.mubr.bf16.gmra.mrb[0].mxu0 %v1469
        %v2345 = vpop.f32.mrb[0].mxu0
        %v2346 = vadd.f32 %v2041, %v2345
        %v2347 = vpop.f32.mrb[0].mxu0
        %v2348 = vpop.f32.mrb[0].mxu0
        %v2349 = vadd.f32 %v2044, %v2348
        %v2350 = vpop.f32.mrb[0].mxu0
        %2351 = vmatprep.mubr.bf16.mxu0 %v1305
        %2352 = vmatmul.mubr.bf16.gmra.mrb[0].mxu0 %v1470
        %v2353 = vpop.f32.mrb[0].mxu0
        %v2354 = vadd.f32 %v2049, %v2353
        %v2355 = vpop.f32.mrb[0].mxu0
        %v2356 = vpop.f32.mrb[0].mxu0
        %v2357 = vadd.f32 %v2052, %v2356
        %v2358 = vpop.f32.mrb[0].mxu0
        %2359 = vmatprep.mubr.bf16.mxu0 %v1306
        %2360 = vmatmul.mubr.bf16.gmra.mrb[0].mxu0 %v1471
        %v2361 = vpop.f32.mrb[0].mxu0
        %v2362 = vadd.f32 %v2057, %v2361
        %v2363 = vpop.f32.mrb[0].mxu0
        %v2364 = vpop.f32.mrb[0].mxu0
        %v2365 = vadd.f32 %v2060, %v2364
        %v2366 = vpop.f32.mrb[0].mxu0
        %2367 = vmatprep.mubr.bf16.mxu0 %v1307
        %2368 = vmatmul.mubr.bf16.gmra.mrb[0].mxu0 %v1472
        %v2369 = vpop.f32.mrb[0].mxu0
        %v2370 = vadd.f32 %v2065, %v2369
        %v2371 = vpop.f32.mrb[0].mxu0
        %v2372 = vpop.f32.mrb[0].mxu0
        %v2373 = vadd.f32 %v2068, %v2372
        %v2374 = vpop.f32.mrb[0].mxu0
        %2375 = vmatprep.mubr.bf16.mxu0 %v1308
        %2376 = vmatmul.mubr.bf16.gmra.mrb[0].mxu0 %v1473
        %v2377 = vpop.f32.mrb[0].mxu0
        %v2378 = vadd.f32 %v2073, %v2377
        %v2379 = vpop.f32.mrb[0].mxu0
        %v2380 = vpop.f32.mrb[0].mxu0
        %v2381 = vadd.f32 %v2076, %v2380
        %v2382 = vpop.f32.mrb[0].mxu0
        %2383 = vmatprep.mubr.bf16.mxu0 %v1309
        %2384 = vmatmul.mubr.bf16.gmra.mrb[0].mxu0 %v1474
        %v2385 = vpop.f32.mrb[0].mxu0
        %v2386 = vadd.f32 %v2081, %v2385
        %v2387 = vpop.f32.mrb[0].mxu0
        %v2388 = vpop.f32.mrb[0].mxu0
        %v2389 = vadd.f32 %v2084, %v2388
        %v2390 = vpop.f32.mrb[0].mxu0
        %2391 = vmatprep.mubr.bf16.mxu0 %v1310
        %2392 = vmatmul.mubr.bf16.gmra.mrb[0].mxu0 %v1475
        %v2393 = vpop.f32.mrb[0].mxu0
        %v2394 = vadd.f32 %v2089, %v2393
        %v2395 = vpop.f32.mrb[0].mxu0
        %v2396 = vpop.f32.mrb[0].mxu0
        %v2397 = vadd.f32 %v2092, %v2396
        %v2398 = vpop.f32.mrb[0].mxu0
        %2399 = vmatprep.mubr.bf16.mxu0 %v1311
        %2400 = vmatmul.mubr.bf16.gmra.mrb[0].mxu0 %v1476
        %v2401 = vpop.f32.mrb[0].mxu0
        %v2402 = vadd.f32 %v2097, %v2401
        %v2403 = vpop.f32.mrb[0].mxu0
        %v2404 = vpop.f32.mrb[0].mxu0
        %v2405 = vadd.f32 %v2100, %v2404
        %v2406 = vpop.f32.mrb[0].mxu0
        %2407 = vmatprep.mubr.bf16.mxu0 %v1312
        %2408 = vmatmul.mubr.bf16.gmra.mrb[0].mxu0 %v1477
        %v2409 = vpop.f32.mrb[0].mxu0
        %v2410 = vadd.f32 %v2105, %v2409
        %v2411 = vpop.f32.mrb[0].mxu0
        %v2412 = vpop.f32.mrb[0].mxu0
        %v2413 = vadd.f32 %v2108, %v2412
        %v2414 = vpop.f32.mrb[0].mxu0
        %2415 = vmatprep.mubr.bf16.mxu0 %v1313
        %2416 = vmatmul.mubr.bf16.gmra.mrb[0].mxu0 %v1478
        %v2417 = vpop.f32.mrb[0].mxu0
        %v2418 = vadd.f32 %v2113, %v2417
        %v2419 = vpop.f32.mrb[0].mxu0
        %v2420 = vpop.f32.mrb[0].mxu0
        %v2421 = vadd.f32 %v2116, %v2420
        %v2422 = vpop.f32.mrb[0].mxu0
        %2423 = vdwg.mxu0
        %2424 = vmatprep.subr.bf16.mxu0 0
        %2425 = vmatpush1.bf16.msra.mxu0 %v2231
        %2426 = vmatprep.subr.bf16.mxu0 0
        %2427 = vmatpush1.bf16.msra.mxu0 %v2232
        %2428 = vmatprep.subr.bf16.mxu0 0
        %2429 = vmatpush1.bf16.msra.mxu0 %v2233
        %2430 = vmatprep.subr.bf16.mxu0 0
        %2431 = vmatpush1.bf16.msra.mxu0 %v2234
        %2432 = vmatprep.subr.bf16.mxu0 0
        %2433 = vmatpush1.bf16.msra.mxu0 %v2235
        %2434 = vmatprep.subr.bf16.mxu0 0
        %2435 = vmatpush1.bf16.msra.mxu0 %v2236
        %2436 = vmatprep.subr.bf16.mxu0 0
        %2437 = vmatpush1.bf16.msra.mxu0 %v2237
        %2438 = vmatprep.subr.bf16.mxu0 0
        %2439 = vmatpush1.bf16.msra.mxu0 %v2238
        %2440 = vmatprep.subr.bf16.mxu0 0
        %2441 = vmatpush1.bf16.msra.mxu0 0
        %2442 = vmatprep.subr.bf16.mxu0 0
        %2443 = vmatpush1.bf16.msra.mxu0 0
        %2444 = vmatprep.subr.bf16.mxu0 0
        %2445 = vmatpush1.bf16.msra.mxu0 0
        %2446 = vmatprep.subr.bf16.mxu0 0
        %2447 = vmatpush1.bf16.msra.mxu0 0
        %2448 = vmatprep.subr.bf16.mxu0 0
        %2449 = vmatpush1.bf16.msra.mxu0 0
        %2450 = vmatprep.subr.bf16.mxu0 0
        %2451 = vmatpush1.bf16.msra.mxu0 0
        %2452 = vmatprep.subr.bf16.mxu0 0
        %2453 = vmatpush1.bf16.msra.mxu0 0
        %2454 = vmatprep.subr.bf16.mxu0 0
        %2455 = vmatpush1.bf16.msra.mxu0 0
        %2456 = vmatprep.mubr.bf16.mxu0 0
        %2457 = vmatmul.mubr.bf16.gmra.mrb[0].mxu0 %v1538
        %v2458 = vpop.f32.mrb[0].mxu0
        %v2459 = vadd.f32 %v2298, %v2458
        %v2460 = vpop.f32.mrb[0].mxu0
        %v2461 = vpop.f32.mrb[0].mxu0
        %v2462 = vadd.f32 %v2301, %v2461
        %v2463 = vpop.f32.mrb[0].mxu0
        %2464 = vmatprep.mubr.bf16.mxu0 0
        %2465 = vmatmul.mubr.bf16.gmra.mrb[0].mxu0 %v1539
        %v2466 = vpop.f32.mrb[0].mxu0
        %v2467 = vadd.f32 %v2306, %v2466
        %v2468 = vpop.f32.mrb[0].mxu0
        %v2469 = vpop.f32.mrb[0].mxu0
        %v2470 = vadd.f32 %v2309, %v2469
        %v2471 = vpop.f32.mrb[0].mxu0
        %2472 = vmatprep.mubr.bf16.mxu0 0
        %2473 = vmatmul.mubr.bf16.gmra.mrb[0].mxu0 %v1540
        %v2474 = vpop.f32.mrb[0].mxu0
        %v2475 = vadd.f32 %v2314, %v2474
        %v2476 = vpop.f32.mrb[0].mxu0
        %v2477 = vpop.f32.mrb[0].mxu0
        %v2478 = vadd.f32 %v2317, %v2477
        %v2479 = vpop.f32.mrb[0].mxu0
        %2480 = vmatprep.mubr.bf16.mxu0 0
        %2481 = vmatmul.mubr.bf16.gmra.mrb[0].mxu0 %v1541
        %v2482 = vpop.f32.mrb[0].mxu0
        %v2483 = vadd.f32 %v2322, %v2482
        %v2484 = vpop.f32.mrb[0].mxu0
        %v2485 = vpop.f32.mrb[0].mxu0
        %v2486 = vadd.f32 %v2325, %v2485
        %v2487 = vpop.f32.mrb[0].mxu0
        %2488 = vmatprep.mubr.bf16.mxu0 0
        %2489 = vmatmul.mubr.bf16.gmra.mrb[0].mxu0 %v1542
        %v2490 = vpop.f32.mrb[0].mxu0
        %v2491 = vadd.f32 %v2330, %v2490
        %v2492 = vpop.f32.mrb[0].mxu0
        %v2493 = vpop.f32.mrb[0].mxu0
        %v2494 = vadd.f32 %v2333, %v2493
        %v2495 = vpop.f32.mrb[0].mxu0
        %2496 = vmatprep.mubr.bf16.mxu0 0
        %2497 = vmatmul.mubr.bf16.gmra.mrb[0].mxu0 %v1543
        %v2498 = vpop.f32.mrb[0].mxu0
        %v2499 = vadd.f32 %v2338, %v2498
        %v2500 = vpop.f32.mrb[0].mxu0
        %v2501 = vpop.f32.mrb[0].mxu0
        %v2502 = vadd.f32 %v2341, %v2501
        %v2503 = vpop.f32.mrb[0].mxu0
        %2504 = vmatprep.mubr.bf16.mxu0 0
        %2505 = vmatmul.mubr.bf16.gmra.mrb[0].mxu0 %v1544
        %v2506 = vpop.f32.mrb[0].mxu0
        %v2507 = vadd.f32 %v2346, %v2506
        %v2508 = vpop.f32.mrb[0].mxu0
        %v2509 = vpop.f32.mrb[0].mxu0
        %v2510 = vadd.f32 %v2349, %v2509
        %v2511 = vpop.f32.mrb[0].mxu0
        %2512 = vmatprep.mubr.bf16.mxu0 0
        %2513 = vmatmul.mubr.bf16.gmra.mrb[0].mxu0 %v1545
        %v2514 = vpop.f32.mrb[0].mxu0
        %v2515 = vadd.f32 %v2354, %v2514
        %v2516 = vpop.f32.mrb[0].mxu0
        %v2517 = vpop.f32.mrb[0].mxu0
        %v2518 = vadd.f32 %v2357, %v2517
        %v2519 = vpop.f32.mrb[0].mxu0
        %2520 = vmatprep.mubr.bf16.mxu0 0
        %2521 = vmatmul.mubr.bf16.gmra.mrb[0].mxu0 %v1546
        %v2522 = vpop.f32.mrb[0].mxu0
        %v2523 = vadd.f32 %v2362, %v2522
        %v2524 = vpop.f32.mrb[0].mxu0
        %v2525 = vpop.f32.mrb[0].mxu0
        %v2526 = vadd.f32 %v2365, %v2525
        %v2527 = vpop.f32.mrb[0].mxu0
        %2528 = vmatprep.mubr.bf16.mxu0 0
        %2529 = vmatmul.mubr.bf16.gmra.mrb[0].mxu0 %v1547
        %v2530 = vpop.f32.mrb[0].mxu0
        %v2531 = vadd.f32 %v2370, %v2530
        %v2532 = vpop.f32.mrb[0].mxu0
        %v2533 = vpop.f32.mrb[0].mxu0
        %v2534 = vadd.f32 %v2373, %v2533
        %v2535 = vpop.f32.mrb[0].mxu0
        %2536 = vmatprep.mubr.bf16.mxu0 0
        %2537 = vmatmul.mubr.bf16.gmra.mrb[0].mxu0 %v1548
        %v2538 = vpop.f32.mrb[0].mxu0
        %v2539 = vadd.f32 %v2378, %v2538
        %v2540 = vpop.f32.mrb[0].mxu0
        %v2541 = vpop.f32.mrb[0].mxu0
        %v2542 = vadd.f32 %v2381, %v2541
        %v2543 = vpop.f32.mrb[0].mxu0
        %2544 = vmatprep.mubr.bf16.mxu0 0
        %2545 = vmatmul.mubr.bf16.gmra.mrb[0].mxu0 %v1549
        %v2546 = vpop.f32.mrb[0].mxu0
        %v2547 = vadd.f32 %v2386, %v2546
        %v2548 = vpop.f32.mrb[0].mxu0
        %v2549 = vpop.f32.mrb[0].mxu0
        %v2550 = vadd.f32 %v2389, %v2549
        %v2551 = vpop.f32.mrb[0].mxu0
        %2552 = vmatprep.mubr.bf16.mxu0 0
        %2553 = vmatmul.mubr.bf16.gmra.mrb[0].mxu0 %v1550
        %v2554 = vpop.f32.mrb[0].mxu0
        %v2555 = vadd.f32 %v2394, %v2554
        %v2556 = vpop.f32.mrb[0].mxu0
        %v2557 = vpop.f32.mrb[0].mxu0
        %v2558 = vadd.f32 %v2397, %v2557
        %v2559 = vpop.f32.mrb[0].mxu0
        %2560 = vmatprep.mubr.bf16.mxu0 0
        %2561 = vmatmul.mubr.bf16.gmra.mrb[0].mxu0 %v1551
        %v2562 = vpop.f32.mrb[0].mxu0
        %v2563 = vadd.f32 %v2402, %v2562
        %v2564 = vpop.f32.mrb[0].mxu0
        %v2565 = vpop.f32.mrb[0].mxu0
        %v2566 = vadd.f32 %v2405, %v2565
        %v2567 = vpop.f32.mrb[0].mxu0
        %2568 = vmatprep.mubr.bf16.mxu0 0
        %2569 = vmatmul.mubr.bf16.gmra.mrb[0].mxu0 %v1552
        %v2570 = vpop.f32.mrb[0].mxu0
        %v2571 = vadd.f32 %v2410, %v2570
        %v2572 = vpop.f32.mrb[0].mxu0
        %v2573 = vpop.f32.mrb[0].mxu0
        %v2574 = vadd.f32 %v2413, %v2573
        %v2575 = vpop.f32.mrb[0].mxu0
        %2576 = vmatprep.mubr.bf16.mxu0 0
        %2577 = vmatmul.mubr.bf16.gmra.mrb[0].mxu0 %v1553
        %v2578 = vpop.f32.mrb[0].mxu0
        %v2579 = vadd.f32 %v2418, %v2578
        %v2580 = vpop.f32.mrb[0].mxu0
        %v2581 = vpop.f32.mrb[0].mxu0
        %v2582 = vadd.f32 %v2421, %v2581
        %v2583 = vpop.f32.mrb[0].mxu0
        %2584 = vdwg.mxu0
        %s2585 = scalar_lea.vmem [#allocation10], 384
        %v2586 = vld [vmem:[%s2585] sm:$0xf]
        %v2587 = vld [vmem:[%s2585 + $0x4] sm:$0xf]
        %v2588 = vld [vmem:[%s2585 + $0x8] sm:$0xf]
        %v2589 = vld [vmem:[%s2585 + $0xc] sm:$0xf]
        %v2590 = vld [vmem:[%s2585 + $0x10] sm:$0xf]
        %v2591 = vld [vmem:[%s2585 + $0x14] sm:$0xf]
        %v2592 = vld [vmem:[%s2585 + $0x18] sm:$0xf]
        %v2593 = vld [vmem:[%s2585 + $0x1c] sm:$0xf]
        %v2594 = vld [vmem:[%s2585 + $0x20] sm:$0xf]
        %v2595 = vld [vmem:[%s2585 + $0x24] sm:$0xf]
        %v2596 = vld [vmem:[%s2585 + $0x28] sm:$0xf]
        %v2597 = vld [vmem:[%s2585 + $0x2c] sm:$0xf]
        %v2598 = vld [vmem:[%s2585 + $0x30] sm:$0xf]
        %v2599 = vld [vmem:[%s2585 + $0x34] sm:$0xf]
        %v2600 = vld [vmem:[%s2585 + $0x38] sm:$0xf]
        %v2601 = vld [vmem:[%s2585 + $0x3c] sm:$0xf]
        %v2602 = vld [vmem:[%s2585 + $0x40] sm:$0xf]
        %v2603 = vld [vmem:[%s2585 + $0x44] sm:$0xf]
        %v2604 = vld [vmem:[%s2585 + $0x48] sm:$0xf]
        %v2605 = vld [vmem:[%s2585 + $0x4c] sm:$0xf]
        %v2606 = vld [vmem:[%s2585 + $0x50] sm:$0xf]
        %v2607 = vld [vmem:[%s2585 + $0x54] sm:$0xf]
        %v2608 = vld [vmem:[%s2585 + $0x58] sm:$0xf]
        %v2609 = vld [vmem:[%s2585 + $0x5c] sm:$0xf]
        %v2610 = vld [vmem:[%s2585 + $0x60] sm:$0xf]
        %v2611 = vld [vmem:[%s2585 + $0x64] sm:$0xf]
        %v2612 = vld [vmem:[%s2585 + $0x68] sm:$0xf]
        %v2613 = vld [vmem:[%s2585 + $0x6c] sm:$0xf]
        %v2614 = vld [vmem:[%s2585 + $0x70] sm:$0xf]
        %v2615 = vld [vmem:[%s2585 + $0x74] sm:$0xf]
        %v2616 = vld [vmem:[%s2585 + $0x78] sm:$0xf]
        %v2617 = vld [vmem:[%s2585 + $0x7c] sm:$0xf]
        %v2618 = vld [vmem:[%s2585 + $0x80] sm:$0xf]
        %v2619 = vld [vmem:[%s2585 + $0x84] sm:$0xf]
        %v2620 = vld [vmem:[%s2585 + $0x88] sm:$0xf]
        %v2621 = vld [vmem:[%s2585 + $0x8c] sm:$0xf]
        %v2622 = vld [vmem:[%s2585 + $0x90] sm:$0xf]
        %v2623 = vld [vmem:[%s2585 + $0x94] sm:$0xf]
        %v2624 = vld [vmem:[%s2585 + $0x98] sm:$0xf]
        %v2625 = vld [vmem:[%s2585 + $0x9c] sm:$0xf]
        %v2626 = vld [vmem:[%s2585 + $0xa0] sm:$0xf]
        %v2627 = vld [vmem:[%s2585 + $0xa4] sm:$0xf]
        %v2628 = vld [vmem:[%s2585 + $0xa8] sm:$0xf]
        %v2629 = vld [vmem:[%s2585 + $0xac] sm:$0xf]
        %v2630 = vld [vmem:[%s2585 + $0xb0] sm:$0xf]
        %v2631 = vld [vmem:[%s2585 + $0xb4] sm:$0xf]
        %v2632 = vld [vmem:[%s2585 + $0xb8] sm:$0xf]
        %v2633 = vld [vmem:[%s2585 + $0xbc] sm:$0xf]
        %v2682 = vunpack.c.l.b16 %v2586
        %v2683 = vunpack.c.l.b16 %v2587
        %v2684 = vunpack.c.l.b16 %v2588
        %v2685 = vunpack.c.l.b16 %v2589
        %v2686 = vunpack.c.l.b16 %v2590
        %v2687 = vunpack.c.l.b16 %v2591
        %v2688 = vunpack.c.l.b16 %v2592
        %v2689 = vunpack.c.l.b16 %v2593
        %v2690 = vunpack.c.l.b16 %v2594
        %v2691 = vunpack.c.l.b16 %v2595
        %v2692 = vunpack.c.l.b16 %v2596
        %v2693 = vunpack.c.l.b16 %v2597
        %v2694 = vunpack.c.l.b16 %v2598
        %v2695 = vunpack.c.l.b16 %v2599
        %v2696 = vunpack.c.l.b16 %v2600
        %v2697 = vunpack.c.l.b16 %v2601
        %v2698 = vunpack.c.l.b16 %v2602
        %v2699 = vunpack.c.l.b16 %v2603
        %v2700 = vunpack.c.l.b16 %v2604
        %v2701 = vunpack.c.l.b16 %v2605
        %v2702 = vunpack.c.l.b16 %v2606
        %v2703 = vunpack.c.l.b16 %v2607
        %v2704 = vunpack.c.l.b16 %v2608
        %v2705 = vunpack.c.l.b16 %v2609
        %v2706 = vunpack.c.l.b16 %v2610
        %v2707 = vunpack.c.l.b16 %v2611
        %v2708 = vunpack.c.l.b16 %v2612
        %v2709 = vunpack.c.l.b16 %v2613
        %v2710 = vunpack.c.l.b16 %v2614
        %v2711 = vunpack.c.l.b16 %v2615
        %v2712 = vunpack.c.l.b16 %v2616
        %v2713 = vunpack.c.l.b16 %v2617
        %v2714 = vunpack.c.l.b16 %v2618
        %v2715 = vunpack.c.l.b16 %v2619
        %v2716 = vunpack.c.l.b16 %v2620
        %v2717 = vunpack.c.l.b16 %v2621
        %v2718 = vunpack.c.l.b16 %v2622
        %v2719 = vunpack.c.l.b16 %v2623
        %v2720 = vunpack.c.l.b16 %v2624
        %v2721 = vunpack.c.l.b16 %v2625
        %v2722 = vunpack.c.l.b16 %v2626
        %v2723 = vunpack.c.l.b16 %v2627
        %v2724 = vunpack.c.l.b16 %v2628
        %v2725 = vunpack.c.l.b16 %v2629
        %v2726 = vunpack.c.l.b16 %v2630
        %v2727 = vunpack.c.l.b16 %v2631
        %v2728 = vunpack.c.l.b16 %v2632
        %v2729 = vunpack.c.l.b16 %v2633
        %v2730 = vpack.c.b16 %v2683, %v2682
        %v2731 = vpack.c.b16 %v2685, %v2684
        %v2732 = vpack.c.b16 %v2687, %v2686
        %v2733 = vpack.c.b16 %v2689, %v2688
        %v2734 = vpack.c.b16 %v2691, %v2690
        %v2735 = vpack.c.b16 %v2693, %v2692
        %v2736 = vpack.c.b16 %v2695, %v2694
        %v2737 = vpack.c.b16 %v2697, %v2696
        %v2738 = vpack.c.b16 %v2699, %v2698
        %v2739 = vpack.c.b16 %v2701, %v2700
        %v2740 = vpack.c.b16 %v2703, %v2702
        %v2741 = vpack.c.b16 %v2705, %v2704
        %v2742 = vpack.c.b16 %v2707, %v2706
        %v2743 = vpack.c.b16 %v2709, %v2708
        %v2744 = vpack.c.b16 %v2711, %v2710
        %v2745 = vpack.c.b16 %v2713, %v2712
        %v2746 = vpack.c.b16 %v2715, %v2714
        %v2747 = vpack.c.b16 %v2717, %v2716
        %v2748 = vpack.c.b16 %v2719, %v2718
        %v2749 = vpack.c.b16 %v2721, %v2720
        %v2750 = vpack.c.b16 %v2723, %v2722
        %v2751 = vpack.c.b16 %v2725, %v2724
        %v2752 = vpack.c.b16 %v2727, %v2726
        %v2753 = vpack.c.b16 %v2729, %v2728
        %2778 = vmatprep.subr.bf16.mxu0 0
        %2779 = vmatpush1.bf16.msra.mxu0 %v2730
        %2780 = vmatprep.subr.bf16.mxu0 0
        %2781 = vmatpush1.bf16.msra.mxu0 %v2731
        %2782 = vmatprep.subr.bf16.mxu0 0
        %2783 = vmatpush1.bf16.msra.mxu0 %v2732
        %2784 = vmatprep.subr.bf16.mxu0 0
        %2785 = vmatpush1.bf16.msra.mxu0 %v2733
        %2786 = vmatprep.subr.bf16.mxu0 0
        %2787 = vmatpush1.bf16.msra.mxu0 %v2734
        %2788 = vmatprep.subr.bf16.mxu0 0
        %2789 = vmatpush1.bf16.msra.mxu0 %v2735
        %2790 = vmatprep.subr.bf16.mxu0 0
        %2791 = vmatpush1.bf16.msra.mxu0 %v2736
        %2792 = vmatprep.subr.bf16.mxu0 0
        %2793 = vmatpush1.bf16.msra.mxu0 %v2737
        %2794 = vmatprep.subr.bf16.mxu0 0
        %2795 = vmatpush1.bf16.msra.mxu0 %v2738
        %2796 = vmatprep.subr.bf16.mxu0 0
        %2797 = vmatpush1.bf16.msra.mxu0 %v2739
        %2798 = vmatprep.subr.bf16.mxu0 0
        %2799 = vmatpush1.bf16.msra.mxu0 %v2740
        %2800 = vmatprep.subr.bf16.mxu0 0
        %2801 = vmatpush1.bf16.msra.mxu0 %v2741
        %2802 = vmatprep.subr.bf16.mxu0 0
        %2803 = vmatpush1.bf16.msra.mxu0 %v2742
        %2804 = vmatprep.subr.bf16.mxu0 0
        %2805 = vmatpush1.bf16.msra.mxu0 %v2743
        %2806 = vmatprep.subr.bf16.mxu0 0
        %2807 = vmatpush1.bf16.msra.mxu0 %v2744
        %2808 = vmatprep.subr.bf16.mxu0 0
        %2809 = vmatpush1.bf16.msra.mxu0 %v2745
        %2810 = vmatprep.mubr.bf16.mxu0 %v1300
        %2811 = vmatmul.mubr.bf16.gmra.mrb[0].mxu0 %v1465
        %v2812 = vpop.f32.mrb[0].mxu0
        %v2813 = vadd.f32 0.0, %v2812
        %v2814 = vpop.f32.mrb[0].mxu0
        %v2815 = vpop.f32.mrb[0].mxu0
        %v2816 = vadd.f32 0.0, %v2815
        %v2817 = vpop.f32.mrb[0].mxu0
        %2818 = vmatprep.mubr.bf16.mxu0 %v1301
        %2819 = vmatmul.mubr.bf16.gmra.mrb[0].mxu0 %v1466
        %v2820 = vpop.f32.mrb[0].mxu0
        %v2821 = vadd.f32 0.0, %v2820
        %v2822 = vpop.f32.mrb[0].mxu0
        %v2823 = vpop.f32.mrb[0].mxu0
        %v2824 = vadd.f32 0.0, %v2823
        %v2825 = vpop.f32.mrb[0].mxu0
        %2826 = vmatprep.mubr.bf16.mxu0 %v1302
        %2827 = vmatmul.mubr.bf16.gmra.mrb[0].mxu0 %v1467
        %v2828 = vpop.f32.mrb[0].mxu0
        %v2829 = vadd.f32 0.0, %v2828
        %v2830 = vpop.f32.mrb[0].mxu0
        %v2831 = vpop.f32.mrb[0].mxu0
        %v2832 = vadd.f32 0.0, %v2831
        %v2833 = vpop.f32.mrb[0].mxu0
        %2834 = vmatprep.mubr.bf16.mxu0 %v1303
        %2835 = vmatmul.mubr.bf16.gmra.mrb[0].mxu0 %v1468
        %v2836 = vpop.f32.mrb[0].mxu0
        %v2837 = vadd.f32 0.0, %v2836
        %v2838 = vpop.f32.mrb[0].mxu0
        %v2839 = vpop.f32.mrb[0].mxu0
        %v2840 = vadd.f32 0.0, %v2839
        %v2841 = vpop.f32.mrb[0].mxu0
        %2842 = vmatprep.mubr.bf16.mxu0 %v1304
        %2843 = vmatmul.mubr.bf16.gmra.mrb[0].mxu0 %v1469
        %v2844 = vpop.f32.mrb[0].mxu0
        %v2845 = vadd.f32 0.0, %v2844
        %v2846 = vpop.f32.mrb[0].mxu0
        %v2847 = vpop.f32.mrb[0].mxu0
        %v2848 = vadd.f32 0.0, %v2847
        %v2849 = vpop.f32.mrb[0].mxu0
        %2850 = vmatprep.mubr.bf16.mxu0 %v1305
        %2851 = vmatmul.mubr.bf16.gmra.mrb[0].mxu0 %v1470
        %v2852 = vpop.f32.mrb[0].mxu0
        %v2853 = vadd.f32 0.0, %v2852
        %v2854 = vpop.f32.mrb[0].mxu0
        %v2855 = vpop.f32.mrb[0].mxu0
        %v2856 = vadd.f32 0.0, %v2855
        %v2857 = vpop.f32.mrb[0].mxu0
        %2858 = vmatprep.mubr.bf16.mxu0 %v1306
        %2859 = vmatmul.mubr.bf16.gmra.mrb[0].mxu0 %v1471
        %v2860 = vpop.f32.mrb[0].mxu0
        %v2861 = vadd.f32 0.0, %v2860
        %v2862 = vpop.f32.mrb[0].mxu0
        %v2863 = vpop.f32.mrb[0].mxu0
        %v2864 = vadd.f32 0.0, %v2863
        %v2865 = vpop.f32.mrb[0].mxu0
        %2866 = vmatprep.mubr.bf16.mxu0 %v1307
        %2867 = vmatmul.mubr.bf16.gmra.mrb[0].mxu0 %v1472
        %v2868 = vpop.f32.mrb[0].mxu0
        %v2869 = vadd.f32 0.0, %v2868
        %v2870 = vpop.f32.mrb[0].mxu0
        %v2871 = vpop.f32.mrb[0].mxu0
        %v2872 = vadd.f32 0.0, %v2871
        %v2873 = vpop.f32.mrb[0].mxu0
        %2874 = vmatprep.mubr.bf16.mxu0 %v1308
        %2875 = vmatmul.mubr.bf16.gmra.mrb[0].mxu0 %v1473
        %v2876 = vpop.f32.mrb[0].mxu0
        %v2877 = vadd.f32 0.0, %v2876
        %v2878 = vpop.f32.mrb[0].mxu0
        %v2879 = vpop.f32.mrb[0].mxu0
        %v2880 = vadd.f32 0.0, %v2879
        %v2881 = vpop.f32.mrb[0].mxu0
        %2882 = vmatprep.mubr.bf16.mxu0 %v1309
        %2883 = vmatmul.mubr.bf16.gmra.mrb[0].mxu0 %v1474
        %v2884 = vpop.f32.mrb[0].mxu0
        %v2885 = vadd.f32 0.0, %v2884
        %v2886 = vpop.f32.mrb[0].mxu0
        %v2887 = vpop.f32.mrb[0].mxu0
        %v2888 = vadd.f32 0.0, %v2887
        %v2889 = vpop.f32.mrb[0].mxu0
        %2890 = vmatprep.mubr.bf16.mxu0 %v1310
        %2891 = vmatmul.mubr.bf16.gmra.mrb[0].mxu0 %v1475
        %v2892 = vpop.f32.mrb[0].mxu0
        %v2893 = vadd.f32 0.0, %v2892
        %v2894 = vpop.f32.mrb[0].mxu0
        %v2895 = vpop.f32.mrb[0].mxu0
        %v2896 = vadd.f32 0.0, %v2895
        %v2897 = vpop.f32.mrb[0].mxu0
        %2898 = vmatprep.mubr.bf16.mxu0 %v1311
        %2899 = vmatmul.mubr.bf16.gmra.mrb[0].mxu0 %v1476
        %v2900 = vpop.f32.mrb[0].mxu0
        %v2901 = vadd.f32 0.0, %v2900
        %v2902 = vpop.f32.mrb[0].mxu0
        %v2903 = vpop.f32.mrb[0].mxu0
        %v2904 = vadd.f32 0.0, %v2903
        %v2905 = vpop.f32.mrb[0].mxu0
        %2906 = vmatprep.mubr.bf16.mxu0 %v1312
        %2907 = vmatmul.mubr.bf16.gmra.mrb[0].mxu0 %v1477
        %v2908 = vpop.f32.mrb[0].mxu0
        %v2909 = vadd.f32 0.0, %v2908
        %v2910 = vpop.f32.mrb[0].mxu0
        %v2911 = vpop.f32.mrb[0].mxu0
        %v2912 = vadd.f32 0.0, %v2911
        %v2913 = vpop.f32.mrb[0].mxu0
        %2914 = vmatprep.mubr.bf16.mxu0 %v1313
        %2915 = vmatmul.mubr.bf16.gmra.mrb[0].mxu0 %v1478
        %v2916 = vpop.f32.mrb[0].mxu0
        %v2917 = vadd.f32 0.0, %v2916
        %v2918 = vpop.f32.mrb[0].mxu0
        %v2919 = vpop.f32.mrb[0].mxu0
        %v2920 = vadd.f32 0.0, %v2919
        %v2921 = vpop.f32.mrb[0].mxu0
        %2922 = vmatprep.mubr.bf16.mxu0 %v1314
        %2923 = vmatmul.mubr.bf16.gmra.mrb[0].mxu0 %v1479
        %v2924 = vpop.f32.mrb[0].mxu0
        %v2925 = vadd.f32 0.0, %v2924
        %v2926 = vpop.f32.mrb[0].mxu0
        %v2927 = vpop.f32.mrb[0].mxu0
        %v2928 = vadd.f32 0.0, %v2927
        %v2929 = vpop.f32.mrb[0].mxu0
        %2930 = vmatprep.mubr.bf16.mxu0 %v1315
        %2931 = vmatmul.mubr.bf16.gmra.mrb[0].mxu0 %v1480
        %v2932 = vpop.f32.mrb[0].mxu0
        %v2933 = vadd.f32 0.0, %v2932
        %v2934 = vpop.f32.mrb[0].mxu0
        %v2935 = vpop.f32.mrb[0].mxu0
        %v2936 = vadd.f32 0.0, %v2935
        %v2937 = vpop.f32.mrb[0].mxu0
        %2938 = vdwg.mxu0
        %2939 = vmatprep.subr.bf16.mxu0 0
        %2940 = vmatpush1.bf16.msra.mxu0 %v2746
        %2941 = vmatprep.subr.bf16.mxu0 0
        %2942 = vmatpush1.bf16.msra.mxu0 %v2747
        %2943 = vmatprep.subr.bf16.mxu0 0
        %2944 = vmatpush1.bf16.msra.mxu0 %v2748
        %2945 = vmatprep.subr.bf16.mxu0 0
        %2946 = vmatpush1.bf16.msra.mxu0 %v2749
        %2947 = vmatprep.subr.bf16.mxu0 0
        %2948 = vmatpush1.bf16.msra.mxu0 %v2750
        %2949 = vmatprep.subr.bf16.mxu0 0
        %2950 = vmatpush1.bf16.msra.mxu0 %v2751
        %2951 = vmatprep.subr.bf16.mxu0 0
        %2952 = vmatpush1.bf16.msra.mxu0 %v2752
        %2953 = vmatprep.subr.bf16.mxu0 0
        %2954 = vmatpush1.bf16.msra.mxu0 %v2753
        %2955 = vmatprep.subr.bf16.mxu0 0
        %2956 = vmatpush1.bf16.msra.mxu0 0
        %2957 = vmatprep.subr.bf16.mxu0 0
        %2958 = vmatpush1.bf16.msra.mxu0 0
        %2959 = vmatprep.subr.bf16.mxu0 0
        %2960 = vmatpush1.bf16.msra.mxu0 0
        %2961 = vmatprep.subr.bf16.mxu0 0
        %2962 = vmatpush1.bf16.msra.mxu0 0
        %2963 = vmatprep.subr.bf16.mxu0 0
        %2964 = vmatpush1.bf16.msra.mxu0 0
        %2965 = vmatprep.subr.bf16.mxu0 0
        %2966 = vmatpush1.bf16.msra.mxu0 0
        %2967 = vmatprep.subr.bf16.mxu0 0
        %2968 = vmatpush1.bf16.msra.mxu0 0
        %2969 = vmatprep.subr.bf16.mxu0 0
        %2970 = vmatpush1.bf16.msra.mxu0 0
        %2971 = vmatprep.mubr.bf16.mxu0 0
        %2972 = vmatmul.mubr.bf16.gmra.mrb[0].mxu0 %v1540
        %v2973 = vpop.f32.mrb[0].mxu0
        %v2974 = vadd.f32 %v2813, %v2973
        %v2975 = vpop.f32.mrb[0].mxu0
        %v2976 = vpop.f32.mrb[0].mxu0
        %v2977 = vadd.f32 %v2816, %v2976
        %v2978 = vpop.f32.mrb[0].mxu0
        %2979 = vmatprep.mubr.bf16.mxu0 0
        %2980 = vmatmul.mubr.bf16.gmra.mrb[0].mxu0 %v1541
        %v2981 = vpop.f32.mrb[0].mxu0
        %v2982 = vadd.f32 %v2821, %v2981
        %v2983 = vpop.f32.mrb[0].mxu0
        %v2984 = vpop.f32.mrb[0].mxu0
        %v2985 = vadd.f32 %v2824, %v2984
        %v2986 = vpop.f32.mrb[0].mxu0
        %2987 = vmatprep.mubr.bf16.mxu0 0
        %2988 = vmatmul.mubr.bf16.gmra.mrb[0].mxu0 %v1542
        %v2989 = vpop.f32.mrb[0].mxu0
        %v2990 = vadd.f32 %v2829, %v2989
        %v2991 = vpop.f32.mrb[0].mxu0
        %v2992 = vpop.f32.mrb[0].mxu0
        %v2993 = vadd.f32 %v2832, %v2992
        %v2994 = vpop.f32.mrb[0].mxu0
        %2995 = vmatprep.mubr.bf16.mxu0 0
        %2996 = vmatmul.mubr.bf16.gmra.mrb[0].mxu0 %v1543
        %v2997 = vpop.f32.mrb[0].mxu0
        %v2998 = vadd.f32 %v2837, %v2997
        %v2999 = vpop.f32.mrb[0].mxu0
        %v3000 = vpop.f32.mrb[0].mxu0
        %v3001 = vadd.f32 %v2840, %v3000
        %v3002 = vpop.f32.mrb[0].mxu0
        %3003 = vmatprep.mubr.bf16.mxu0 0
        %3004 = vmatmul.mubr.bf16.gmra.mrb[0].mxu0 %v1544
        %v3005 = vpop.f32.mrb[0].mxu0
        %v3006 = vadd.f32 %v2845, %v3005
        %v3007 = vpop.f32.mrb[0].mxu0
        %v3008 = vpop.f32.mrb[0].mxu0
        %v3009 = vadd.f32 %v2848, %v3008
        %v3010 = vpop.f32.mrb[0].mxu0
        %3011 = vmatprep.mubr.bf16.mxu0 0
        %3012 = vmatmul.mubr.bf16.gmra.mrb[0].mxu0 %v1545
        %v3013 = vpop.f32.mrb[0].mxu0
        %v3014 = vadd.f32 %v2853, %v3013
        %v3015 = vpop.f32.mrb[0].mxu0
        %v3016 = vpop.f32.mrb[0].mxu0
        %v3017 = vadd.f32 %v2856, %v3016
        %v3018 = vpop.f32.mrb[0].mxu0
        %3019 = vmatprep.mubr.bf16.mxu0 0
        %3020 = vmatmul.mubr.bf16.gmra.mrb[0].mxu0 %v1546
        %v3021 = vpop.f32.mrb[0].mxu0
        %v3022 = vadd.f32 %v2861, %v3021
        %v3023 = vpop.f32.mrb[0].mxu0
        %v3024 = vpop.f32.mrb[0].mxu0
        %v3025 = vadd.f32 %v2864, %v3024
        %v3026 = vpop.f32.mrb[0].mxu0
        %3027 = vmatprep.mubr.bf16.mxu0 0
        %3028 = vmatmul.mubr.bf16.gmra.mrb[0].mxu0 %v1547
        %v3029 = vpop.f32.mrb[0].mxu0
        %v3030 = vadd.f32 %v2869, %v3029
        %v3031 = vpop.f32.mrb[0].mxu0
        %v3032 = vpop.f32.mrb[0].mxu0
        %v3033 = vadd.f32 %v2872, %v3032
        %v3034 = vpop.f32.mrb[0].mxu0
        %3035 = vmatprep.mubr.bf16.mxu0 0
        %3036 = vmatmul.mubr.bf16.gmra.mrb[0].mxu0 %v1548
        %v3037 = vpop.f32.mrb[0].mxu0
        %v3038 = vadd.f32 %v2877, %v3037
        %v3039 = vpop.f32.mrb[0].mxu0
        %v3040 = vpop.f32.mrb[0].mxu0
        %v3041 = vadd.f32 %v2880, %v3040
        %v3042 = vpop.f32.mrb[0].mxu0
        %3043 = vmatprep.mubr.bf16.mxu0 0
        %3044 = vmatmul.mubr.bf16.gmra.mrb[0].mxu0 %v1549
        %v3045 = vpop.f32.mrb[0].mxu0
        %v3046 = vadd.f32 %v2885, %v3045
        %v3047 = vpop.f32.mrb[0].mxu0
        %v3048 = vpop.f32.mrb[0].mxu0
        %v3049 = vadd.f32 %v2888, %v3048
        %v3050 = vpop.f32.mrb[0].mxu0
        %3051 = vmatprep.mubr.bf16.mxu0 0
        %3052 = vmatmul.mubr.bf16.gmra.mrb[0].mxu0 %v1550
        %v3053 = vpop.f32.mrb[0].mxu0
        %v3054 = vadd.f32 %v2893, %v3053
        %v3055 = vpop.f32.mrb[0].mxu0
        %v3056 = vpop.f32.mrb[0].mxu0
        %v3057 = vadd.f32 %v2896, %v3056
        %v3058 = vpop.f32.mrb[0].mxu0
        %3059 = vmatprep.mubr.bf16.mxu0 0
        %3060 = vmatmul.mubr.bf16.gmra.mrb[0].mxu0 %v1551
        %v3061 = vpop.f32.mrb[0].mxu0
        %v3062 = vadd.f32 %v2901, %v3061
        %v3063 = vpop.f32.mrb[0].mxu0
        %v3064 = vpop.f32.mrb[0].mxu0
        %v3065 = vadd.f32 %v2904, %v3064
        %v3066 = vpop.f32.mrb[0].mxu0
        %3067 = vmatprep.mubr.bf16.mxu0 0
        %3068 = vmatmul.mubr.bf16.gmra.mrb[0].mxu0 %v1552
        %v3069 = vpop.f32.mrb[0].mxu0
        %v3070 = vadd.f32 %v2909, %v3069
        %v3071 = vpop.f32.mrb[0].mxu0
        %v3072 = vpop.f32.mrb[0].mxu0
        %v3073 = vadd.f32 %v2912, %v3072
        %v3074 = vpop.f32.mrb[0].mxu0
        %3075 = vmatprep.mubr.bf16.mxu0 0
        %3076 = vmatmul.mubr.bf16.gmra.mrb[0].mxu0 %v1553
        %v3077 = vpop.f32.mrb[0].mxu0
        %v3078 = vadd.f32 %v2917, %v3077
        %v3079 = vpop.f32.mrb[0].mxu0
        %v3080 = vpop.f32.mrb[0].mxu0
        %v3081 = vadd.f32 %v2920, %v3080
        %v3082 = vpop.f32.mrb[0].mxu0
        %3083 = vmatprep.mubr.bf16.mxu0 0
        %3084 = vmatmul.mubr.bf16.gmra.mrb[0].mxu0 %v1554
        %v3085 = vpop.f32.mrb[0].mxu0
        %v3086 = vadd.f32 %v2925, %v3085
        %v3087 = vpop.f32.mrb[0].mxu0
        %v3088 = vpop.f32.mrb[0].mxu0
        %v3089 = vadd.f32 %v2928, %v3088
        %v3090 = vpop.f32.mrb[0].mxu0
        %3091 = vmatprep.mubr.bf16.mxu0 0
        %3092 = vmatmul.mubr.bf16.gmra.mrb[0].mxu0 %v1555
        %v3093 = vpop.f32.mrb[0].mxu0
        %v3094 = vadd.f32 %v2933, %v3093
        %v3095 = vpop.f32.mrb[0].mxu0
        %v3096 = vpop.f32.mrb[0].mxu0
        %v3097 = vadd.f32 %v2936, %v3096
        %v3098 = vpop.f32.mrb[0].mxu0
        %3099 = vdwg.mxu0
        %v3100 = vadd.f32 %v2459, %v2974
        %v3101 = vadd.f32 %v2462, %v2977
        %v3102 = vadd.f32 %v2467, %v2982
        %v3103 = vadd.f32 %v2470, %v2985
        %v3104 = vadd.f32 %v2475, %v2990
        %v3105 = vadd.f32 %v2478, %v2993
        %v3106 = vadd.f32 %v2483, %v2998
        %v3107 = vadd.f32 %v2486, %v3001
        %v3108 = vadd.f32 %v2491, %v3006
        %v3109 = vadd.f32 %v2494, %v3009
        %v3110 = vadd.f32 %v2499, %v3014
        %v3111 = vadd.f32 %v2502, %v3017
        %v3112 = vadd.f32 %v2507, %v3022
        %v3113 = vadd.f32 %v2510, %v3025
        %v3114 = vadd.f32 %v2515, %v3030
        %v3115 = vadd.f32 %v2518, %v3033
        %v3116 = vadd.f32 %v2523, %v3038
        %v3117 = vadd.f32 %v2526, %v3041
        %v3118 = vadd.f32 %v2531, %v3046
        %v3119 = vadd.f32 %v2534, %v3049
        %v3120 = vadd.f32 %v2539, %v3054
        %v3121 = vadd.f32 %v2542, %v3057
        %v3122 = vadd.f32 %v2547, %v3062
        %v3123 = vadd.f32 %v2550, %v3065
        %v3124 = vadd.f32 %v2555, %v3070
        %v3125 = vadd.f32 %v2558, %v3073
        %v3126 = vadd.f32 %v2563, %v3078
        %v3127 = vadd.f32 %v2566, %v3081
        %v3128 = vadd.f32 %v2571, %v3086
        %v3129 = vadd.f32 %v2574, %v3089
        %v3130 = vadd.f32 %v2579, %v3094
        %v3131 = vadd.f32 %v2582, %v3097
        %v3132 = vld [vmem:[%s7] sm:$0x1]
        %v3134 = vlaneseq
        %v3135 = vshrl.u32 %v3134, 7
        %v3136 = vsub.s32 0, %v3135
        %v3137 = vrot.slane %v3132, %v3136
        %v3139 = vmul.f32 %v3100, %v3137
        %v3140 = vmul.f32 %v3101, %v3137
        %v3141 = vmul.f32 %v3102, %v3137
        %v3142 = vmul.f32 %v3103, %v3137
        %v3143 = vmul.f32 %v3104, %v3137
        %v3144 = vmul.f32 %v3105, %v3137
        %v3145 = vmul.f32 %v3106, %v3137
        %v3146 = vmul.f32 %v3107, %v3137
        %v3147 = vmul.f32 %v3108, %v3137
        %v3148 = vmul.f32 %v3109, %v3137
        %v3149 = vmul.f32 %v3110, %v3137
        %v3150 = vmul.f32 %v3111, %v3137
        %v3151 = vmul.f32 %v3112, %v3137
        %v3152 = vmul.f32 %v3113, %v3137
        %v3153 = vmul.f32 %v3114, %v3137
        %v3154 = vmul.f32 %v3115, %v3137
        %v3155 = vmul.f32 %v3116, %v3137
        %v3156 = vmul.f32 %v3117, %v3137
        %v3157 = vmul.f32 %v3118, %v3137
        %v3158 = vmul.f32 %v3119, %v3137
        %v3159 = vmul.f32 %v3120, %v3137
        %v3160 = vmul.f32 %v3121, %v3137
        %v3161 = vmul.f32 %v3122, %v3137
        %v3162 = vmul.f32 %v3123, %v3137
        %v3163 = vmul.f32 %v3124, %v3137
        %v3164 = vmul.f32 %v3125, %v3137
        %v3165 = vmul.f32 %v3126, %v3137
        %v3166 = vmul.f32 %v3127, %v3137
        %v3167 = vmul.f32 %v3128, %v3137
        %v3168 = vmul.f32 %v3129, %v3137
        %v3169 = vmul.f32 %v3130, %v3137
        %v3170 = vmul.f32 %v3131, %v3137
        %v3171 = vld [vmem:[%s8] sm:$0x1]
        %v3173 = vlaneseq
        %v3174 = vshrl.u32 %v3173, 7
        %v3175 = vsub.s32 0, %v3174
        %v3176 = vrot.slane %v3171, %v3175
        %v3178 = vadd.f32 %v3139, %v3176
        %v3179 = vadd.f32 %v3140, %v3176
        %v3180 = vadd.f32 %v3141, %v3176
        %v3181 = vadd.f32 %v3142, %v3176
        %v3182 = vadd.f32 %v3143, %v3176
        %v3183 = vadd.f32 %v3144, %v3176
        %v3184 = vadd.f32 %v3145, %v3176
        %v3185 = vadd.f32 %v3146, %v3176
        %v3186 = vadd.f32 %v3147, %v3176
        %v3187 = vadd.f32 %v3148, %v3176
        %v3188 = vadd.f32 %v3149, %v3176
        %v3189 = vadd.f32 %v3150, %v3176
        %v3190 = vadd.f32 %v3151, %v3176
        %v3191 = vadd.f32 %v3152, %v3176
        %v3192 = vadd.f32 %v3153, %v3176
        %v3193 = vadd.f32 %v3154, %v3176
        %v3194 = vadd.f32 %v3155, %v3176
        %v3195 = vadd.f32 %v3156, %v3176
        %v3196 = vadd.f32 %v3157, %v3176
        %v3197 = vadd.f32 %v3158, %v3176
        %v3198 = vadd.f32 %v3159, %v3176
        %v3199 = vadd.f32 %v3160, %v3176
        %v3200 = vadd.f32 %v3161, %v3176
        %v3201 = vadd.f32 %v3162, %v3176
        %v3202 = vadd.f32 %v3163, %v3176
        %v3203 = vadd.f32 %v3164, %v3176
        %v3204 = vadd.f32 %v3165, %v3176
        %v3205 = vadd.f32 %v3166, %v3176
        %v3206 = vadd.f32 %v3167, %v3176
        %v3207 = vadd.f32 %v3168, %v3176
        %v3208 = vadd.f32 %v3169, %v3176
        %v3209 = vadd.f32 %v3170, %v3176
        %v3210 = vxor.u32 %v3178, 2147483648
        %v3211 = vxor.u32 %v3179, 2147483648
        %v3212 = vxor.u32 %v3180, 2147483648
        %v3213 = vxor.u32 %v3181, 2147483648
        %v3214 = vxor.u32 %v3182, 2147483648
        %v3215 = vxor.u32 %v3183, 2147483648
        %v3216 = vxor.u32 %v3184, 2147483648
        %v3217 = vxor.u32 %v3185, 2147483648
        %v3218 = vxor.u32 %v3186, 2147483648
        %v3219 = vxor.u32 %v3187, 2147483648
        %v3220 = vxor.u32 %v3188, 2147483648
        %v3221 = vxor.u32 %v3189, 2147483648
        %v3222 = vxor.u32 %v3190, 2147483648
        %v3223 = vxor.u32 %v3191, 2147483648
        %v3224 = vxor.u32 %v3192, 2147483648
        %v3225 = vxor.u32 %v3193, 2147483648
        %v3226 = vxor.u32 %v3194, 2147483648
        %v3227 = vxor.u32 %v3195, 2147483648
        %v3228 = vxor.u32 %v3196, 2147483648
        %v3229 = vxor.u32 %v3197, 2147483648
        %v3230 = vxor.u32 %v3198, 2147483648
        %v3231 = vxor.u32 %v3199, 2147483648
        %v3232 = vxor.u32 %v3200, 2147483648
        %v3233 = vxor.u32 %v3201, 2147483648
        %v3234 = vxor.u32 %v3202, 2147483648
        %v3235 = vxor.u32 %v3203, 2147483648
        %v3236 = vxor.u32 %v3204, 2147483648
        %v3237 = vxor.u32 %v3205, 2147483648
        %v3238 = vxor.u32 %v3206, 2147483648
        %v3239 = vxor.u32 %v3207, 2147483648
        %v3240 = vxor.u32 %v3208, 2147483648
        %v3241 = vxor.u32 %v3209, 2147483648
        %v3242 = vmul.f32 %v3210, 1.442695
        %v3243 = vpow.pop %v3242
        %v3244 = vmul.f32 %v3211, 1.442695
        %v3245 = vpow.pop %v3244
        %v3246 = vmul.f32 %v3212, 1.442695
        %v3247 = vpow.pop %v3246
        %v3248 = vmul.f32 %v3213, 1.442695
        %v3249 = vpow.pop %v3248
        %v3250 = vmul.f32 %v3214, 1.442695
        %v3251 = vpow.pop %v3250
        %v3252 = vmul.f32 %v3215, 1.442695
        %v3253 = vpow.pop %v3252
        %v3254 = vmul.f32 %v3216, 1.442695
        %v3255 = vpow.pop %v3254
        %v3256 = vmul.f32 %v3217, 1.442695
        %v3257 = vpow.pop %v3256
        %v3258 = vmul.f32 %v3218, 1.442695
        %v3259 = vpow.pop %v3258
        %v3260 = vmul.f32 %v3219, 1.442695
        %v3261 = vpow.pop %v3260
        %v3262 = vmul.f32 %v3220, 1.442695
        %v3263 = vpow.pop %v3262
        %v3264 = vmul.f32 %v3221, 1.442695
        %v3265 = vpow.pop %v3264
        %v3266 = vmul.f32 %v3222, 1.442695
        %v3267 = vpow.pop %v3266
        %v3268 = vmul.f32 %v3223, 1.442695
        %v3269 = vpow.pop %v3268
        %v3270 = vmul.f32 %v3224, 1.442695
        %v3271 = vpow.pop %v3270
        %v3272 = vmul.f32 %v3225, 1.442695
        %v3273 = vpow.pop %v3272
        %v3274 = vmul.f32 %v3226, 1.442695
        %v3275 = vpow.pop %v3274
        %v3276 = vmul.f32 %v3227, 1.442695
        %v3277 = vpow.pop %v3276
        %v3278 = vmul.f32 %v3228, 1.442695
        %v3279 = vpow.pop %v3278
        %v3280 = vmul.f32 %v3229, 1.442695
        %v3281 = vpow.pop %v3280
        %v3282 = vmul.f32 %v3230, 1.442695
        %v3283 = vpow.pop %v3282
        %v3284 = vmul.f32 %v3231, 1.442695
        %v3285 = vpow.pop %v3284
        %v3286 = vmul.f32 %v3232, 1.442695
        %v3287 = vpow.pop %v3286
        %v3288 = vmul.f32 %v3233, 1.442695
        %v3289 = vpow.pop %v3288
        %v3290 = vmul.f32 %v3234, 1.442695
        %v3291 = vpow.pop %v3290
        %v3292 = vmul.f32 %v3235, 1.442695
        %v3293 = vpow.pop %v3292
        %v3294 = vmul.f32 %v3236, 1.442695
        %v3295 = vpow.pop %v3294
        %v3296 = vmul.f32 %v3237, 1.442695
        %v3297 = vpow.pop %v3296
        %v3298 = vmul.f32 %v3238, 1.442695
        %v3299 = vpow.pop %v3298
        %v3300 = vmul.f32 %v3239, 1.442695
        %v3301 = vpow.pop %v3300
        %v3302 = vmul.f32 %v3240, 1.442695
        %v3303 = vpow.pop %v3302
        %v3304 = vmul.f32 %v3241, 1.442695
        %v3305 = vpow.pop %v3304
        %v3306 = vadd.f32 %v3243, 1.0
        %v3307 = vadd.f32 %v3245, 1.0
        %v3308 = vadd.f32 %v3247, 1.0
        %v3309 = vadd.f32 %v3249, 1.0
        %v3310 = vadd.f32 %v3251, 1.0
        %v3311 = vadd.f32 %v3253, 1.0
        %v3312 = vadd.f32 %v3255, 1.0
        %v3313 = vadd.f32 %v3257, 1.0
        %v3314 = vadd.f32 %v3259, 1.0
        %v3315 = vadd.f32 %v3261, 1.0
        %v3316 = vadd.f32 %v3263, 1.0
        %v3317 = vadd.f32 %v3265, 1.0
        %v3318 = vadd.f32 %v3267, 1.0
        %v3319 = vadd.f32 %v3269, 1.0
        %v3320 = vadd.f32 %v3271, 1.0
        %v3321 = vadd.f32 %v3273, 1.0
        %v3322 = vadd.f32 %v3275, 1.0
        %v3323 = vadd.f32 %v3277, 1.0
        %v3324 = vadd.f32 %v3279, 1.0
        %v3325 = vadd.f32 %v3281, 1.0
        %v3326 = vadd.f32 %v3283, 1.0
        %v3327 = vadd.f32 %v3285, 1.0
        %v3328 = vadd.f32 %v3287, 1.0
        %v3329 = vadd.f32 %v3289, 1.0
        %v3330 = vadd.f32 %v3291, 1.0
        %v3331 = vadd.f32 %v3293, 1.0
        %v3332 = vadd.f32 %v3295, 1.0
        %v3333 = vadd.f32 %v3297, 1.0
        %v3334 = vadd.f32 %v3299, 1.0
        %v3335 = vadd.f32 %v3301, 1.0
        %v3336 = vadd.f32 %v3303, 1.0
        %v3337 = vadd.f32 %v3305, 1.0
        %v3338 = vrcp.pop %v3306
        %v3339 = vmul.f32 1.0, %v3338
        %v3340 = vrcp.pop %v3307
        %v3341 = vmul.f32 1.0, %v3340
        %v3342 = vrcp.pop %v3308
        %v3343 = vmul.f32 1.0, %v3342
        %v3344 = vrcp.pop %v3309
        %v3345 = vmul.f32 1.0, %v3344
        %v3346 = vrcp.pop %v3310
        %v3347 = vmul.f32 1.0, %v3346
        %v3348 = vrcp.pop %v3311
        %v3349 = vmul.f32 1.0, %v3348
        %v3350 = vrcp.pop %v3312
        %v3351 = vmul.f32 1.0, %v3350
        %v3352 = vrcp.pop %v3313
        %v3353 = vmul.f32 1.0, %v3352
        %v3354 = vrcp.pop %v3314
        %v3355 = vmul.f32 1.0, %v3354
        %v3356 = vrcp.pop %v3315
        %v3357 = vmul.f32 1.0, %v3356
        %v3358 = vrcp.pop %v3316
        %v3359 = vmul.f32 1.0, %v3358
        %v3360 = vrcp.pop %v3317
        %v3361 = vmul.f32 1.0, %v3360
        %v3362 = vrcp.pop %v3318
        %v3363 = vmul.f32 1.0, %v3362
        %v3364 = vrcp.pop %v3319
        %v3365 = vmul.f32 1.0, %v3364
        %v3366 = vrcp.pop %v3320
        %v3367 = vmul.f32 1.0, %v3366
        %v3368 = vrcp.pop %v3321
        %v3369 = vmul.f32 1.0, %v3368
        %v3370 = vrcp.pop %v3322
        %v3371 = vmul.f32 1.0, %v3370
        %v3372 = vrcp.pop %v3323
        %v3373 = vmul.f32 1.0, %v3372
        %v3374 = vrcp.pop %v3324
        %v3375 = vmul.f32 1.0, %v3374
        %v3376 = vrcp.pop %v3325
        %v3377 = vmul.f32 1.0, %v3376
        %v3378 = vrcp.pop %v3326
        %v3379 = vmul.f32 1.0, %v3378
        %v3380 = vrcp.pop %v3327
        %v3381 = vmul.f32 1.0, %v3380
        %v3382 = vrcp.pop %v3328
        %v3383 = vmul.f32 1.0, %v3382
        %v3384 = vrcp.pop %v3329
        %v3385 = vmul.f32 1.0, %v3384
        %v3386 = vrcp.pop %v3330
        %v3387 = vmul.f32 1.0, %v3386
        %v3388 = vrcp.pop %v3331
        %v3389 = vmul.f32 1.0, %v3388
        %v3390 = vrcp.pop %v3332
        %v3391 = vmul.f32 1.0, %v3390
        %v3392 = vrcp.pop %v3333
        %v3393 = vmul.f32 1.0, %v3392
        %v3394 = vrcp.pop %v3334
        %v3395 = vmul.f32 1.0, %v3394
        %v3396 = vrcp.pop %v3335
        %v3397 = vmul.f32 1.0, %v3396
        %v3398 = vrcp.pop %v3336
        %v3399 = vmul.f32 1.0, %v3398
        %v3400 = vrcp.pop %v3337
        %v3401 = vmul.f32 1.0, %v3400
        %v3402 = vmul.f32 %v3178, %v3339
        %v3403 = vmul.f32 %v3179, %v3341
        %v3404 = vmul.f32 %v3180, %v3343
        %v3405 = vmul.f32 %v3181, %v3345
        %v3406 = vmul.f32 %v3182, %v3347
        %v3407 = vmul.f32 %v3183, %v3349
        %v3408 = vmul.f32 %v3184, %v3351
        %v3409 = vmul.f32 %v3185, %v3353
        %v3410 = vmul.f32 %v3186, %v3355
        %v3411 = vmul.f32 %v3187, %v3357
        %v3412 = vmul.f32 %v3188, %v3359
        %v3413 = vmul.f32 %v3189, %v3361
        %v3414 = vmul.f32 %v3190, %v3363
        %v3415 = vmul.f32 %v3191, %v3365
        %v3416 = vmul.f32 %v3192, %v3367
        %v3417 = vmul.f32 %v3193, %v3369
        %v3418 = vmul.f32 %v3194, %v3371
        %v3419 = vmul.f32 %v3195, %v3373
        %v3420 = vmul.f32 %v3196, %v3375
        %v3421 = vmul.f32 %v3197, %v3377
        %v3422 = vmul.f32 %v3198, %v3379
        %v3423 = vmul.f32 %v3199, %v3381
        %v3424 = vmul.f32 %v3200, %v3383
        %v3425 = vmul.f32 %v3201, %v3385
        %v3426 = vmul.f32 %v3202, %v3387
        %v3427 = vmul.f32 %v3203, %v3389
        %v3428 = vmul.f32 %v3204, %v3391
        %v3429 = vmul.f32 %v3205, %v3393
        %v3430 = vmul.f32 %v3206, %v3395
        %v3431 = vmul.f32 %v3207, %v3397
        %v3432 = vmul.f32 %v3208, %v3399
        %v3433 = vmul.f32 %v3209, %v3401
        %v3434 = vadd.f32 %v519, %v3402
        %v3435 = vadd.f32 %v520, %v3403
        %v3436 = vadd.f32 %v521, %v3404
        %v3437 = vadd.f32 %v522, %v3405
        %v3438 = vadd.f32 %v523, %v3406
        %v3439 = vadd.f32 %v524, %v3407
        %v3440 = vadd.f32 %v525, %v3408
        %v3441 = vadd.f32 %v526, %v3409
        %v3442 = vadd.f32 %v527, %v3410
        %v3443 = vadd.f32 %v528, %v3411
        %v3444 = vadd.f32 %v529, %v3412
        %v3445 = vadd.f32 %v530, %v3413
        %v3446 = vadd.f32 %v531, %v3414
        %v3447 = vadd.f32 %v532, %v3415
        %v3448 = vadd.f32 %v533, %v3416
        %v3449 = vadd.f32 %v534, %v3417
        %v3450 = vadd.f32 %v535, %v3418
        %v3451 = vadd.f32 %v536, %v3419
        %v3452 = vadd.f32 %v537, %v3420
        %v3453 = vadd.f32 %v538, %v3421
        %v3454 = vadd.f32 %v539, %v3422
        %v3455 = vadd.f32 %v540, %v3423
        %v3456 = vadd.f32 %v541, %v3424
        %v3457 = vadd.f32 %v542, %v3425
        %v3458 = vadd.f32 %v543, %v3426
        %v3459 = vadd.f32 %v544, %v3427
        %v3460 = vadd.f32 %v545, %v3428
        %v3461 = vadd.f32 %v546, %v3429
        %v3462 = vadd.f32 %v547, %v3430
        %v3463 = vadd.f32 %v548, %v3431
        %v3464 = vadd.f32 %v549, %v3432
        %v3465 = vadd.f32 %v550, %v3433
        %3466 = vst [vmem:[%s507] sm:$0xff] %v3434
        %3467 = vst [vmem:[%s507 + $0x8] sm:$0xff] %v3435
        %3468 = vst [vmem:[%s507 + $0x10] sm:$0xff] %v3436
        %3469 = vst [vmem:[%s507 + $0x18] sm:$0xff] %v3437
        %3470 = vst [vmem:[%s507 + $0x20] sm:$0xff] %v3438
        %3471 = vst [vmem:[%s507 + $0x28] sm:$0xff] %v3439
        %3472 = vst [vmem:[%s507 + $0x30] sm:$0xff] %v3440
        %3473 = vst [vmem:[%s507 + $0x38] sm:$0xff] %v3441
        %3474 = vst [vmem:[%s507 + $0x40] sm:$0xff] %v3442
        %3475 = vst [vmem:[%s507 + $0x48] sm:$0xff] %v3443
        %3476 = vst [vmem:[%s507 + $0x50] sm:$0xff] %v3444
        %3477 = vst [vmem:[%s507 + $0x58] sm:$0xff] %v3445
        %3478 = vst [vmem:[%s507 + $0x60] sm:$0xff] %v3446
        %3479 = vst [vmem:[%s507 + $0x68] sm:$0xff] %v3447
        %3480 = vst [vmem:[%s507 + $0x70] sm:$0xff] %v3448
        %3481 = vst [vmem:[%s507 + $0x78] sm:$0xff] %v3449
        %3482 = vst [vmem:[%s507 + $0x80] sm:$0xff] %v3450
        %3483 = vst [vmem:[%s507 + $0x88] sm:$0xff] %v3451
        %3484 = vst [vmem:[%s507 + $0x90] sm:$0xff] %v3452
        %3485 = vst [vmem:[%s507 + $0x98] sm:$0xff] %v3453
        %3486 = vst [vmem:[%s507 + $0xa0] sm:$0xff] %v3454
        %3487 = vst [vmem:[%s507 + $0xa8] sm:$0xff] %v3455
        %3488 = vst [vmem:[%s507 + $0xb0] sm:$0xff] %v3456
        %3489 = vst [vmem:[%s507 + $0xb8] sm:$0xff] %v3457
        %3490 = vst [vmem:[%s507 + $0xc0] sm:$0xff] %v3458
        %3491 = vst [vmem:[%s507 + $0xc8] sm:$0xff] %v3459
        %3492 = vst [vmem:[%s507 + $0xd0] sm:$0xff] %v3460
        %3493 = vst [vmem:[%s507 + $0xd8] sm:$0xff] %v3461
        %3494 = vst [vmem:[%s507 + $0xe0] sm:$0xff] %v3462
        %3495 = vst [vmem:[%s507 + $0xe8] sm:$0xff] %v3463
        %3496 = vst [vmem:[%s507 + $0xf0] sm:$0xff] %v3464
        %3497 = vst [vmem:[%s507 + $0xf8] sm:$0xff] %v3465
        %s3498 = sand.u32 %s278, 1
        %s3499 = scalar_lea.sflag [#allocation4], %s3498
        %s3500 = sand.u32 %s278, 1
        %s3501 = smul.addr %s3500, 256
        %s3502 = scalar_lea.vmem [#allocation11], %s3501
        // Predicated region
        $region77: #{tpu_custom_call.1} parent=55 // pred_check
          %p3503 = pneg %p288
        $region78: #{tpu_custom_call.1} parent=55 // pred_check_branch
          %3505 = sbr.rel (%p3503) target = $region80
        $region79: #{tpu_custom_call.1} parent=55 // pred_region
          %s3506 = smul.u32 16, %s35
          %s3508 = ssub.s32 4096, 4096
          %3509 = vsyncadd %s3499, %s3508
          %s3510 = smul.addr %s3506, 2
          %s3511 = smul.addr %s34, 32
          %s3512 = sadd.s32 %s3510, %s3511
          %s3513 = smul.addr %s3512, 128
          %s3514 = scalar_lea.hbm %s9, %s3513
          %s3515 = sshll.u32 %s3502, 4
          %s3516 = int_to_ptr.vmem [resolvable:$true] %s3515
          %3521 = dma.vmem_to_hbm [thread:$0]  %s3516, 4096, %s3514, %s3499, 128, 128, 8
        $region80: #{tpu_custom_call.1} parent=55 // pred_fallthru
          _
      $region56: #{tpu_custom_call.1} parent=5 // pred_fallthru
        _
      %p3522 = scmp.le.s32.totalorder 2, %s25
      // Predicated region
      $region81: #{tpu_custom_call.1} parent=5 // pred_check
        %p3523 = pneg %p3522
      $region82: #{tpu_custom_call.1} parent=5 // pred_check_branch
        %3525 = sbr.rel (%p3523) target = $region84
      $region83: #{tpu_custom_call.1} parent=5 // pred_region
        %s3526 = ssub.s32 %s25, 2
        // Predicated region
        $region85: #{tpu_custom_call.1} parent=83 // pred_check
          %p3527 = pneg %p294
        $region86: #{tpu_custom_call.1} parent=83 // pred_check_branch
          %3529 = sbr.rel (%p3527) target = $region88
        $region87: #{tpu_custom_call.1} parent=83 // pred_region
          %s3530 = sand.u32 %s279, 1
          %s3531 = scalar_lea.sflag [#allocation4], %s3530
          %s3532 = sand.u32 %s279, 1
          %s3533 = smul.addr %s3532, 256
          %s3534 = scalar_lea.vmem [#allocation11], %s3533
          %3535 = dma.done %s3531, 4096
        $region88: #{tpu_custom_call.1} parent=83 // pred_fallthru
          _
      $region84: #{tpu_custom_call.1} parent=5 // pred_fallthru
        _
    $region6: #{tpu_custom_call.1} parent=1 // loop_footer
      %s29 = sadd.s32 1, %s25
    $region7: #{tpu_custom_call.1} parent=1 // loop_footer_branch
      %24 = sbr.rel target = $region3
    $region8: #{tpu_custom_call.1} parent=1 // loop_exit
      _
    %3536 = vsyncpa [#allocation3], 1
    %s3537 = scalar_lea.sflag [#allocation3], 1
    %3538 = vsyncpa %s3537, 1
    %3539 = vsyncpa [#allocation6], 1
    %s3540 = scalar_lea.sflag [#allocation6], 1
    %3541 = vsyncpa %s3540, 1
    %3542 = vsyncpa [#allocation9], 1
    %3543 = vsyncpa [#allocation4], 1
    %s3544 = scalar_lea.sflag [#allocation4], 1
    %3545 = vsyncpa %s3544, 1

</llo_original>
